<compile_context>
chip_gen: v6e
topology: v6e:2x2x1
jax: 0.10.0
libtpu: 0.0.40
codegen_flags: <defaults>
</compile_context>

<pallas_src>
import functools
import math

import numpy as np
import jax
import jax.numpy as jnp
from jax.experimental import pallas as pl
from jax.experimental.pallas import tpu as pltpu

_HIGHEST = jax.lax.Precision.HIGHEST   # only used for the tiny XLA head + reference


def _round_up(v, m):
    return -(-v // m) * m


def _pick_tile(dim, cap):
    """Largest tile <= cap that divides dim (dim is a multiple of 128)."""
    if dim <= cap:
        return dim
    for t in range(cap, 127, -128):
        if dim % t == 0:
            return t
    return dim


# --------- fused linear: [LayerNorm] -> matmul(+bias) -> [GELU] -> [+res] --- #

def _linear_kernel(*refs, act, has_residual, has_norm, eps):
    it = iter(refs)
    x_ref = next(it)
    g_ref = next(it) if has_norm else None
    bln_ref = next(it) if has_norm else None
    w_ref = next(it)
    b_ref = next(it)
    r_ref = next(it) if has_residual else None
    o_ref = next(it)
    acc_ref = next(it)

    k = pl.program_id(2)

    @pl.when(k == 0)
    def _():
        acc_ref[...] = jnp.zeros_like(acc_ref)

    if has_norm:
        # LayerNorm prologue (full row resident: K is a single block).
        x = x_ref[...].astype(jnp.float32)
        mu = jnp.mean(x, axis=-1, keepdims=True)
        xc = x - mu
        var = jnp.mean(xc * xc, axis=-1, keepdims=True)
        x = xc * jax.lax.rsqrt(var + eps) * g_ref[...] + bln_ref[...]
        x_mxu = x.astype(jnp.bfloat16)
    else:
        x_mxu = x_ref[...].astype(jnp.bfloat16)

    # bf16 MXU inputs, f32 accumulation.
    acc_ref[...] += jnp.dot(x_mxu, w_ref[...].astype(jnp.bfloat16),
                            preferred_element_type=jnp.float32)

    @pl.when(k == pl.num_programs(2) - 1)
    def _():
        y = acc_ref[...] + b_ref[...].astype(jnp.float32)
        if act == "gelu":
            # TODO(synk): nn.GELU() is erf-exact; tanh-approximate GELU is used
            # here (EUP-friendly, ~1e-3 max deviation).
            y = jax.nn.gelu(y, approximate=True)
        if has_residual:
            y = y + r_ref[...].astype(jnp.float32)
        o_ref[...] = y.astype(o_ref.dtype)


def linear(x, w, b, *, act="none", residual=None, norm=None, out_dtype=None,
           eps=1e-5):
    """y = act(LN?(x) @ w + b) [+ residual] as a single Pallas kernel.

    Weights/biases are expected pre-padded to lane multiples (see
    prepare_params); activations are not padded for the small-M path.
    """
    M, K = x.shape
    Kw, N = w.shape
    assert K == Kw, (K, Kw)
    assert K % 128 == 0 and N % 128 == 0, "weights must be pre-padded to 128 lanes"
    if b.ndim == 1:
        b = b.reshape(1, N)
    out_dtype = out_dtype or x.dtype

    # M tiling: one full block when small (no pad/slice copies); 256-row tiles
    # otherwise (fills the 256-wide MXU on v6e/v7x).
    if M <= 256:
        Mp, tm = M, M
    else:
        tm = 256
        Mp = _round_up(M, tm)
    tk = _pick_tile(K, 512)
    tn = _pick_tile(N, 512)

    if norm is not None:
        assert tk == K, "fused LayerNorm needs the full row (K) in one tile"

    xp = x if Mp == M else jnp.pad(x, ((0, Mp - M), (0, 0)))

    in_specs = [pl.BlockSpec((tm, tk), lambda i, j, kk: (i, kk))]
    operands = [xp]
    if norm is not None:
        gamma, beta = norm
        gspec = pl.BlockSpec((1, tk), lambda i, j, kk: (0, kk))
        in_specs += [gspec, gspec]
        operands += [gamma.reshape(1, K), beta.reshape(1, K)]
    in_specs += [pl.BlockSpec((tk, tn), lambda i, j, kk: (kk, j)),
                 pl.BlockSpec((1, tn), lambda i, j, kk: (0, j))]
    operands += [w, b]
    if residual is not None:
        rp = residual if Mp == M else jnp.pad(residual, ((0, Mp - M), (0, 0)))
        in_specs.append(pl.BlockSpec((tm, tn), lambda i, j, kk: (i, j)))
        operands.append(rp)

    grid = (Mp // tm, N // tn, K // tk)
    bytes_accessed = (xp.size * xp.dtype.itemsize + w.size * w.dtype.itemsize
                      + b.size * 4 + Mp * N * jnp.dtype(out_dtype).itemsize
                      + (Mp * N * 4 if residual is not None else 0)
                      + (2 * K * 4 if norm is not None else 0))

    out = pl.pallas_call(
        functools.partial(_linear_kernel, act=act,
                          has_residual=residual is not None,
                          has_norm=norm is not None, eps=eps),
        out_shape=jax.ShapeDtypeStruct((Mp, N), out_dtype),
        grid=grid,
        in_specs=in_specs,
        out_specs=pl.BlockSpec((tm, tn), lambda i, j, kk: (i, j)),
        scratch_shapes=[pltpu.VMEM((tm, tn), jnp.float32)],
        compiler_params=pltpu.CompilerParams(
            dimension_semantics=("parallel", "parallel", "arbitrary")),
        cost_estimate=pl.CostEstimate(
            flops=2 * Mp * K * N,
            transcendentals=(Mp * N if act == "gelu" else 0)
                            + (Mp if norm is not None else 0),
            bytes_accessed=int(bytes_accessed)),
    )(*operands)
    if Mp != M:
        out = out[:M]
    return out


# ----------------------- multi-head attention (all heads / step) ----------- #

def _attention_kernel(qkv_ref, o_ref, *, heads, dim_head, scale):
    inner = heads * dim_head
    qkv = qkv_ref[0]                                    # (S, 3*inner), bf16
    outs = []
    for h in range(heads):                              # static unroll over heads
        q = qkv[:, h * dim_head:(h + 1) * dim_head]
        k = qkv[:, inner + h * dim_head: inner + (h + 1) * dim_head]
        v = qkv[:, 2 * inner + h * dim_head: 2 * inner + (h + 1) * dim_head]
        s = jax.lax.dot_general(q, k, (((1,), (1,)), ((), ())),
                                preferred_element_type=jnp.float32) * scale
        m = jnp.max(s, axis=-1, keepdims=True)
        p = jnp.exp(s - m)                              # softmax stats stay f32
        attn = p * pl.reciprocal(jnp.sum(p, axis=-1, keepdims=True), approx=True)
        outs.append(jnp.dot(attn.astype(qkv.dtype), v,
                            preferred_element_type=jnp.float32))
    # Single lane-dense store of all heads in 'n (h d)' layout.
    o_ref[0] = jnp.concatenate(outs, axis=-1).astype(o_ref.dtype)


def attention(qkv, *, heads, dim_head, scale, out_dtype):
    """softmax(Q K^T * scale) V for all heads of one image per grid step.

    qkv: (B, S, 3*heads*dim_head) laid out as [q | k | v], each in (h d) order,
    i.e. exactly the fused to_q|to_k|to_v projection output.  Output is
    (B, S, heads*dim_head) already in 'b n (h d)' layout (no HBM transposes).
    """
    B, S, tinner = qkv.shape
    inner = heads * dim_head
    assert tinner == 3 * inner
    return pl.pallas_call(
        functools.partial(_attention_kernel, heads=heads, dim_head=dim_head,
                          scale=scale),
        out_shape=jax.ShapeDtypeStruct((B, S, inner), out_dtype),
        grid=(B,),
        in_specs=[pl.BlockSpec((1, S, tinner), lambda b: (b, 0, 0))],
        out_specs=pl.BlockSpec((1, S, inner), lambda b: (b, 0, 0)),
        compiler_params=pltpu.CompilerParams(
            dimension_semantics=("parallel",)),
        cost_estimate=pl.CostEstimate(
            flops=4 * B * heads * S * S * dim_head,
            transcendentals=B * heads * S * S,
            bytes_accessed=int(qkv.size * qkv.dtype.itemsize
                               + B * S * inner * jnp.dtype(out_dtype).itemsize
                               + 4 * B * heads * S * S)),
    )(qkv)


# -------------------------------- model forward ----------------------------- #

def _to_patches(img, patch_size):
    # Rearrange('b c (h p1) (w p2) -> b (h w) (p1 p2 c)')
    B, C, H, W = img.shape
    ph, pw = patch_size
    h, w = H // ph, W // pw
    x = img.reshape(B, C, h, ph, w, pw)
    x = jnp.transpose(x, (0, 2, 4, 3, 5, 1))            # b h w p1 p2 c
    return x.reshape(B, h * w, ph * pw * C)


def _ln_xla(x, g, b, eps=1e-5):
    mu = jnp.mean(x, axis=-1, keepdims=True)
    xc = x - mu
    var = jnp.mean(xc * xc, axis=-1, keepdims=True)
    return xc * jax.lax.rsqrt(var + eps) * g + b


def vit_classifier_forward(prepared, img, *, heads, dim_head, patch_size):
    p = prepared
    patches = _to_patches(img, patch_size)               # (B, P, patch_dim)
    B, P, pd = patches.shape
    D = p["patch_w"].shape[1]
    inner = heads * dim_head
    assert inner % 128 == 0, "fused-QKV head slicing assumes lane-aligned inner dim"
    scale = 1.0 / math.sqrt(dim_head)

    # Patch embedding (weight K pre-padded to 128; pad activations' K once).
    x = patches.reshape(B * P, pd)
    Kp = p["patch_w"].shape[0]
    if Kp != pd:
        x = jnp.pad(x, ((0, 0), (0, Kp - pd)))
    x = linear(x, p["patch_w"], p["patch_b"], out_dtype=jnp.float32)
    x = x.reshape(B, P, D) + p["pos_embedding"]
    cls = jnp.broadcast_to(p["cls_token"], (B, 1, D))
    x = jnp.concatenate([cls, x], axis=1)                # (B, S, D)
    S = P + 1
    x2d = x.reshape(B * S, D)                            # f32 residual stream

    for blk in p["blocks"]:
        # Attention sub-block: fused LN + QKV projection -> batched-heads
        # attention -> fused output projection + residual add.
        qkv = linear(x2d, blk["wqkv"], blk["bqkv"],
                     norm=(blk["ln1_g"], blk["ln1_b"]), out_dtype=jnp.bfloat16)
        o = attention(qkv.reshape(B, S, 3 * inner), heads=heads,
                      dim_head=dim_head, scale=scale, out_dtype=jnp.bfloat16)
        x2d = linear(o.reshape(B * S, inner), blk["wo"], blk["bo"],
                     residual=x2d, out_dtype=jnp.float32)

        # FFN sub-block: fused LN + first linear + GELU -> second linear + residual.
        h = linear(x2d, blk["w1"], blk["b1"], act="gelu",
                   norm=(blk["ln2_g"], blk["ln2_b"]), out_dtype=jnp.bfloat16)
        x2d = linear(h, blk["w2"], blk["b2"], residual=x2d,
                     out_dtype=jnp.float32)

    # Final LayerNorm + classifier head only use the cls row of each batch;
    # LayerNorm is row-wise so applying it to just those rows is exact.
    cls_feat = x2d.reshape(B, S, D)[:, 0, :]
    feats = _ln_xla(cls_feat, p["ln_g"], p["ln_b"])
    return jnp.matmul(feats, p["head_w"], precision=_HIGHEST) + p["head_b"]


# ------------------------- one-time parameter preparation ------------------- #

def prepare_params(params):
    """Loop-invariant layout prep (done once, outside the jit'd forward):
    pad weights to 128-lane multiples, cast matmul weights to bf16 (MXU
    inputs), fuse Wq|Wk|Wv, reshape biases/LN params to (1, N)."""
    def pw(w):
        K, N = w.shape
        Kp, Np = _round_up(K, 128), _round_up(N, 128)
        if (Kp, Np) != (K, N):
            w = jnp.pad(w, ((0, Kp - K), (0, Np - N)))
        return w.astype(jnp.bfloat16)

    def pb(b):
        N = b.shape[-1]
        Np = _round_up(N, 128)
        if Np != N:
            b = jnp.pad(b, (0, Np - N))
        return jnp.asarray(b, jnp.float32).reshape(1, -1)

    prepared = {
        "patch_w": pw(params["patch_w"]),
        "patch_b": pb(params["patch_b"]),
        "pos_embedding": params["pos_embedding"],
        "cls_token": params["cls_token"],
        "ln_g": params["ln_g"], "ln_b": params["ln_b"],
        "head_w": params["head_w"], "head_b": params["head_b"],
        "blocks": [],
    }
    for blk in params["blocks"]:
        wqkv = jnp.concatenate([blk["wq"], blk["wk"], blk["wv"]], axis=1)
        bqkv = jnp.concatenate([blk["bq"], blk["bk"], blk["bv"]], axis=0)
        prepared["blocks"].append({
            "ln1_g": blk["ln1_g"].reshape(1, -1),
            "ln1_b": blk["ln1_b"].reshape(1, -1),
            "wqkv": pw(wqkv), "bqkv": pb(bqkv),
            "wo": pw(blk["wo"]), "bo": pb(blk["bo"]),
            "ln2_g": blk["ln2_g"].reshape(1, -1),
            "ln2_b": blk["ln2_b"].reshape(1, -1),
            "w1": pw(blk["w1"]), "b1": pb(blk["b1"]),
            "w2": pw(blk["w2"]), "b2": pb(blk["b2"]),
        })
    return prepared


# ------------------------------- pure-JAX reference ------------------------- #

def reference_forward(params, img, *, heads, dim_head, patch_size):
    mm = functools.partial(jnp.matmul, precision=_HIGHEST)
    patches = _to_patches(img, patch_size)
    B, P, _ = patches.shape
    D = params["patch_w"].shape[1]

    x = mm(patches, params["patch_w"]) + params["patch_b"]
    x = x + params["pos_embedding"]
    cls = jnp.broadcast_to(params["cls_token"], (B, 1, D))
    x = jnp.concatenate([cls, x], axis=1)
    S = P + 1

    for blk in params["blocks"]:
        h = _ln_xla(x, blk["ln1_g"], blk["ln1_b"])
        q = mm(h, blk["wq"]) + blk["bq"]
        k = mm(h, blk["wk"]) + blk["bk"]
        v = mm(h, blk["wv"]) + blk["bv"]

        def sh(t):
            return t.reshape(B, S, heads, dim_head).transpose(0, 2, 1, 3)

        dots = jnp.einsum("bhqd,bhkd->bhqk", sh(q), sh(k),
                          precision=_HIGHEST) / math.sqrt(dim_head)
        attn = jax.nn.softmax(dots, axis=-1)
        o = jnp.einsum("bhqk,bhkd->bhqd", attn, sh(v), precision=_HIGHEST)
        o = o.transpose(0, 2, 1, 3).reshape(B, S, heads * dim_head)
        x = mm(o, blk["wo"]) + blk["bo"] + x

        h = _ln_xla(x, blk["ln2_g"], blk["ln2_b"])
        h = jax.nn.gelu(mm(h, blk["w1"]) + blk["b1"], approximate=True)
        x = mm(h, blk["w2"]) + blk["b2"] + x

    feats = _ln_xla(x, params["ln_g"], params["ln_b"])
    return mm(feats[:, 0, :], params["head_w"]) + params["head_b"]


# ----------------------------------- params --------------------------------- #

def init_params(key, *, patch_dim, num_patches, emb_dim, heads, dim_head,
                mlp_dim, num_layers, num_classes):
    inner = heads * dim_head
    keys = jax.random.split(key, 4 + num_layers)

    def nrm(k, shape, std=0.02):
        return std * jax.random.normal(k, shape, dtype=jnp.float32)

    params = {
        "patch_w": nrm(keys[0], (patch_dim, emb_dim)),
        "patch_b": jnp.zeros((emb_dim,), jnp.float32),
        "pos_embedding": nrm(keys[1], (1, num_patches, emb_dim)),
        "cls_token": nrm(keys[2], (1, 1, emb_dim)),
        "ln_g": jnp.ones((emb_dim,), jnp.float32),
        "ln_b": jnp.zeros((emb_dim,), jnp.float32),
        "head_w": nrm(keys[3], (emb_dim, num_classes)),
        "head_b": jnp.zeros((num_classes,), jnp.float32),
        "blocks": [],
    }
    for l in range(num_layers):
        lk = jax.random.split(keys[4 + l], 6)
        params["blocks"].append({
            "ln1_g": jnp.ones((emb_dim,), jnp.float32),
            "ln1_b": jnp.zeros((emb_dim,), jnp.float32),
            "wq": nrm(lk[0], (emb_dim, inner)), "bq": jnp.zeros((inner,), jnp.float32),
            "wk": nrm(lk[1], (emb_dim, inner)), "bk": jnp.zeros((inner,), jnp.float32),
            "wv": nrm(lk[2], (emb_dim, inner)), "bv": jnp.zeros((inner,), jnp.float32),
            "wo": nrm(lk[3], (inner, emb_dim)), "bo": jnp.zeros((emb_dim,), jnp.float32),
            "ln2_g": jnp.ones((emb_dim,), jnp.float32),
            "ln2_b": jnp.zeros((emb_dim,), jnp.float32),
            "w1": nrm(lk[4], (emb_dim, mlp_dim)), "b1": jnp.zeros((mlp_dim,), jnp.float32),
            "w2": nrm(lk[5], (mlp_dim, emb_dim)), "b2": jnp.zeros((emb_dim,), jnp.float32),
        })
    return params


# ------------------------------------ main ---------------------------------- #

if __name__ == "__main__":
    B, C, H, W = 2, 1, 16, 16
    PH = PW = 4
    EMB, HEADS, DIM_HEAD, MLP, LAYERS, CLASSES = 128, 2, 64, 256, 2, 10
    num_patches = (H // PH) * (W // PW)     # 16 -> seq length 17 with cls token
    patch_dim = C * PH * PW                 # 16

    key = jax.random.PRNGKey(0)
    k_img, k_par = jax.random.split(key)
    img = jax.random.normal(k_img, (B, C, H, W), dtype=jnp.float32)
    params = init_params(k_par, patch_dim=patch_dim, num_patches=num_patches,
                         emb_dim=EMB, heads=HEADS, dim_head=DIM_HEAD,
                         mlp_dim=MLP, num_layers=LAYERS, num_classes=CLASSES)

    prepared = prepare_params(params)        # one-time weight layout prep

    fwd = jax.jit(functools.partial(vit_classifier_forward,
                                    heads=HEADS, dim_head=DIM_HEAD,
                                    patch_size=(PH, PW)))
    logits = jax.block_until_ready(fwd(prepared, img))

    ref = jax.block_until_ready(
        reference_forward(params, img, heads=HEADS, dim_head=DIM_HEAD,
                          patch_size=(PH, PW)))

    assert logits.shape == (B, CLASSES)
    assert np.all(np.isfinite(np.asarray(logits)))
    # bf16 MXU inputs with f32 accumulation -> bf16-level tolerance vs f32 ref.
    diff = np.max(np.abs(np.asarray(logits) - np.asarray(ref)))
    assert np.allclose(np.asarray(logits), np.asarray(ref),
                       rtol=3e-2, atol=1e-2), "max |diff| = %g" % diff
    print("KERNEL_OK")
</pallas_src>

<mosaic_0001>
module attributes {stable_mosaic.version = 11 : i64} {
  func.func @_linear_kernel(%arg0: i32, %arg1: i32, %arg2: i32, %arg3: memref<32x128xf32, #tpu.memory_space<vmem>>, %arg4: memref<128x128xbf16, #tpu.memory_space<vmem>>, %arg5: memref<1x128xf32, #tpu.memory_space<vmem>>, %arg6: memref<32x128xf32, #tpu.memory_space<vmem>>, %arg7: memref<32x128xf32, #tpu.memory_space<vmem>>) attributes {dimension_semantics = [#tpu.dimension_semantics<parallel>, #tpu.dimension_semantics<parallel>, #tpu.dimension_semantics<arbitrary>], iteration_bounds = array<i64: 1, 1, 1>, scalar_prefetch = 0 : i64, scratch_operands = 1 : i64, tpu.core_type = #tpu.core_type<tc>, window_params = [{transform_indices = @transform_0, window_bounds = array<i64: 32, 128>}, {transform_indices = @transform_1, window_bounds = array<i64: 128, 128>}, {transform_indices = @transform_2, window_bounds = array<i64: 1, 128>}, {transform_indices = @transform_3, window_bounds = array<i64: 32, 128>}]} {
    %c0_i32 = arith.constant 0 : i32
    %0 = arith.cmpi eq, %arg2, %c0_i32 : i32
    %1 = arith.extui %0 : i1 to i32
    %c0_i32_0 = arith.constant 0 : i32
    %2 = arith.cmpi ne, %1, %c0_i32_0 : i32
    scf.if %2 {
      %cst_10 = arith.constant 0.000000e+00 : f32
      %13 = vector.broadcast %cst_10 : f32 to vector<32x128xf32>
      %c0_11 = arith.constant 0 : index
      %c0_12 = arith.constant 0 : index
      %14 = vector.load %arg7[%c0_11, %c0_12] : memref<32x128xf32, #tpu.memory_space<vmem>>, vector<32x128xf32>
      tpu.vector_store %arg7[%c0_11, %c0_12], %13 {strides = array<i32>} : memref<32x128xf32, #tpu.memory_space<vmem>>, vector<32x128xf32>,
    } else {
    }
    %c0 = arith.constant 0 : index
    %c0_1 = arith.constant 0 : index
    %3 = vector.load %arg3[%c0, %c0_1] : memref<32x128xf32, #tpu.memory_space<vmem>>, vector<32x128xf32>
    %4 = arith.truncf %3 : vector<32x128xf32> to vector<32x128xbf16>
    %c0_2 = arith.constant 0 : index
    %c0_3 = arith.constant 0 : index
    %5 = vector.load %arg7[%c0_2, %c0_3] : memref<32x128xf32, #tpu.memory_space<vmem>>, vector<32x128xf32>
    %c0_4 = arith.constant 0 : index
    %c0_5 = arith.constant 0 : index
    %6 = vector.load %arg4[%c0_4, %c0_5] : memref<128x128xbf16, #tpu.memory_space<vmem>>, vector<128x128xbf16>
    %cst = arith.constant dense<0.000000e+00> : vector<32x128xf32>
    %7 = tpu.matmul %4, %6, %cst {dimension_numbers = #tpu.dot_dimension_numbers<[1], [0], [0], [1], [0, 0, 1, 1], [], []>} : vector<32x128xbf16>, vector<128x128xbf16>, vector<32x128xf32> -> vector<32x128xf32>
    %8 = arith.addf %5, %7 : vector<32x128xf32>
    %c0_6 = arith.constant 0 : index
    %c0_7 = arith.constant 0 : index
    %9 = vector.load %arg7[%c0_6, %c0_7] : memref<32x128xf32, #tpu.memory_space<vmem>>, vector<32x128xf32>
    tpu.vector_store %arg7[%c0_6, %c0_7], %8 {strides = array<i32>} : memref<32x128xf32, #tpu.memory_space<vmem>>, vector<32x128xf32>,
    %c0_i32_8 = arith.constant 0 : i32
    %10 = arith.cmpi eq, %arg2, %c0_i32_8 : i32
    %11 = arith.extui %10 : i1 to i32
    %c0_i32_9 = arith.constant 0 : i32
    %12 = arith.cmpi ne, %11, %c0_i32_9 : i32
    scf.if %12 {
      %c0_10 = arith.constant 0 : index
      %c0_11 = arith.constant 0 : index
      %13 = vector.load %arg7[%c0_10, %c0_11] : memref<32x128xf32, #tpu.memory_space<vmem>>, vector<32x128xf32>
      %c0_12 = arith.constant 0 : index
      %c0_13 = arith.constant 0 : index
      %14 = vector.load %arg5[%c0_12, %c0_13] : memref<1x128xf32, #tpu.memory_space<vmem>>, vector<1x128xf32>
      %15 = vector.broadcast %14 : vector<1x128xf32> to vector<32x128xf32>
      %16 = arith.addf %13, %15 : vector<32x128xf32>
      %c0_14 = arith.constant 0 : index
      %c0_15 = arith.constant 0 : index
      %17 = vector.load %arg6[%c0_14, %c0_15] : memref<32x128xf32, #tpu.memory_space<vmem>>, vector<32x128xf32>
      tpu.vector_store %arg6[%c0_14, %c0_15], %16 {strides = array<i32>} : memref<32x128xf32, #tpu.memory_space<vmem>>, vector<32x128xf32>,
    } else {
    }
    return
  }
  func.func @transform_0(%arg0: i32, %arg1: i32, %arg2: i32) -> (i32, i32) {
    %c0_i32 = arith.constant 0 : i32
    return %arg0, %arg2 : i32, i32
  }
  func.func @transform_1(%arg0: i32, %arg1: i32, %arg2: i32) -> (i32, i32) {
    %c0_i32 = arith.constant 0 : i32
    return %arg2, %arg1 : i32, i32
  }
  func.func @transform_2(%arg0: i32, %arg1: i32, %arg2: i32) -> (i32, i32) {
    %c0_i32 = arith.constant 0 : i32
    %c0_i32_0 = arith.constant 0 : i32
    return %c0_i32, %arg1 : i32, i32
  }
  func.func @transform_3(%arg0: i32, %arg1: i32, %arg2: i32) -> (i32, i32) {
    %c0_i32 = arith.constant 0 : i32
    return %arg0, %arg1 : i32, i32
  }
}

module attributes {stable_mosaic.version = 11 : i64} {
  func.func @_linear_kernel(%arg0: i32, %arg1: i32, %arg2: i32, %arg3: memref<34x128xf32, #tpu.memory_space<vmem>>, %arg4: memref<1x128xf32, #tpu.memory_space<vmem>>, %arg5: memref<1x128xf32, #tpu.memory_space<vmem>>, %arg6: memref<128x384xbf16, #tpu.memory_space<vmem>>, %arg7: memref<1x384xf32, #tpu.memory_space<vmem>>, %arg8: memref<34x384xbf16, #tpu.memory_space<vmem>>, %arg9: memref<34x384xf32, #tpu.memory_space<vmem>>) attributes {dimension_semantics = [#tpu.dimension_semantics<parallel>, #tpu.dimension_semantics<parallel>, #tpu.dimension_semantics<arbitrary>], iteration_bounds = array<i64: 1, 1, 1>, scalar_prefetch = 0 : i64, scratch_operands = 1 : i64, tpu.core_type = #tpu.core_type<tc>, window_params = [{transform_indices = @transform_0, window_bounds = array<i64: 34, 128>}, {transform_indices = @transform_1, window_bounds = array<i64: 1, 128>}, {transform_indices = @transform_2, window_bounds = array<i64: 1, 128>}, {transform_indices = @transform_3, window_bounds = array<i64: 128, 384>}, {transform_indices = @transform_4, window_bounds = array<i64: 1, 384>}, {transform_indices = @transform_5, window_bounds = array<i64: 34, 384>}]} {
    %c0_i32 = arith.constant 0 : i32
    %0 = arith.cmpi eq, %arg2, %c0_i32 : i32
    %1 = arith.extui %0 : i1 to i32
    %c0_i32_0 = arith.constant 0 : i32
    %2 = arith.cmpi ne, %1, %c0_i32_0 : i32
    scf.if %2 {
      %cst_19 = arith.constant 0.000000e+00 : f32
      %35 = vector.broadcast %cst_19 : f32 to vector<34x384xf32>
      %c0_20 = arith.constant 0 : index
      %c0_21 = arith.constant 0 : index
      %36 = vector.load %arg9[%c0_20, %c0_21] : memref<34x384xf32, #tpu.memory_space<vmem>>, vector<34x384xf32>
      tpu.vector_store %arg9[%c0_20, %c0_21], %35 {strides = array<i32>} : memref<34x384xf32, #tpu.memory_space<vmem>>, vector<34x384xf32>,
    } else {
    }
    %c0 = arith.constant 0 : index
    %c0_1 = arith.constant 0 : index
    %3 = vector.load %arg3[%c0, %c0_1] : memref<34x128xf32, #tpu.memory_space<vmem>>, vector<34x128xf32>
    %cst = arith.constant dense<0.000000e+00> : vector<34xf32>
    %4 = vector.multi_reduction <add>, %3, %cst [1] : vector<34x128xf32> to vector<34xf32>
    %5 = vector.shape_cast %4 : vector<34xf32> to vector<34x1xf32>
    %cst_2 = arith.constant 1.280000e+02 : f32
    %6 = vector.broadcast %cst_2 : f32 to vector<34x1xf32>
    %7 = arith.divf %5, %6 : vector<34x1xf32>
    %8 = vector.broadcast %7 : vector<34x1xf32> to vector<34x128xf32>
    %9 = arith.subf %3, %8 : vector<34x128xf32>
    %10 = arith.mulf %9, %9 : vector<34x128xf32>
    %cst_3 = arith.constant dense<0.000000e+00> : vector<34xf32>
    %11 = vector.multi_reduction <add>, %10, %cst_3 [1] : vector<34x128xf32> to vector<34xf32>
    %12 = vector.shape_cast %11 : vector<34xf32> to vector<34x1xf32>
    %cst_4 = arith.constant 1.280000e+02 : f32
    %13 = vector.broadcast %cst_4 : f32 to vector<34x1xf32>
    %14 = arith.divf %12, %13 : vector<34x1xf32>
    %cst_5 = arith.constant 9.99999974E-6 : f32
    %15 = vector.broadcast %cst_5 : f32 to vector<34x1xf32>
    %16 = arith.addf %14, %15 : vector<34x1xf32>
    %17 = math.rsqrt %16 : vector<34x1xf32>
    %18 = vector.broadcast %17 : vector<34x1xf32> to vector<34x128xf32>
    %19 = arith.mulf %9, %18 : vector<34x128xf32>
    %c0_6 = arith.constant 0 : index
    %c0_7 = arith.constant 0 : index
    %20 = vector.load %arg4[%c0_6, %c0_7] : memref<1x128xf32, #tpu.memory_space<vmem>>, vector<1x128xf32>
    %21 = vector.broadcast %20 : vector<1x128xf32> to vector<34x128xf32>
    %22 = arith.mulf %19, %21 : vector<34x128xf32>
    %c0_8 = arith.constant 0 : index
    %c0_9 = arith.constant 0 : index
    %23 = vector.load %arg5[%c0_8, %c0_9] : memref<1x128xf32, #tpu.memory_space<vmem>>, vector<1x128xf32>
    %24 = vector.broadcast %23 : vector<1x128xf32> to vector<34x128xf32>
    %25 = arith.addf %22, %24 : vector<34x128xf32>
    %26 = arith.truncf %25 : vector<34x128xf32> to vector<34x128xbf16>
    %c0_10 = arith.constant 0 : index
    %c0_11 = arith.constant 0 : index
    %27 = vector.load %arg9[%c0_10, %c0_11] : memref<34x384xf32, #tpu.memory_space<vmem>>, vector<34x384xf32>
    %c0_12 = arith.constant 0 : index
    %c0_13 = arith.constant 0 : index
    %28 = vector.load %arg6[%c0_12, %c0_13] : memref<128x384xbf16, #tpu.memory_space<vmem>>, vector<128x384xbf16>
    %cst_14 = arith.constant dense<0.000000e+00> : vector<34x384xf32>
    %29 = tpu.matmul %26, %28, %cst_14 {dimension_numbers = #tpu.dot_dimension_numbers<[1], [0], [0], [1], [0, 0, 1, 1], [], []>} : vector<34x128xbf16>, vector<128x384xbf16>, vector<34x384xf32> -> vector<34x384xf32>
    %30 = arith.addf %27, %29 : vector<34x384xf32>
    %c0_15 = arith.constant 0 : index
    %c0_16 = arith.constant 0 : index
    %31 = vector.load %arg9[%c0_15, %c0_16] : memref<34x384xf32, #tpu.memory_space<vmem>>, vector<34x384xf32>
    tpu.vector_store %arg9[%c0_15, %c0_16], %30 {strides = array<i32>} : memref<34x384xf32, #tpu.memory_space<vmem>>, vector<34x384xf32>,
    %c0_i32_17 = arith.constant 0 : i32
    %32 = arith.cmpi eq, %arg2, %c0_i32_17 : i32
    %33 = arith.extui %32 : i1 to i32
    %c0_i32_18 = arith.constant 0 : i32
    %34 = arith.cmpi ne, %33, %c0_i32_18 : i32
    scf.if %34 {
      %c0_19 = arith.constant 0 : index
      %c0_20 = arith.constant 0 : index
      %35 = vector.load %arg9[%c0_19, %c0_20] : memref<34x384xf32, #tpu.memory_space<vmem>>, vector<34x384xf32>
      %c0_21 = arith.constant 0 : index
      %c0_22 = arith.constant 0 : index
      %36 = vector.load %arg7[%c0_21, %c0_22] : memref<1x384xf32, #tpu.memory_space<vmem>>, vector<1x384xf32>
      %37 = vector.broadcast %36 : vector<1x384xf32> to vector<34x384xf32>
      %38 = arith.addf %35, %37 : vector<34x384xf32>
      %39 = arith.truncf %38 : vector<34x384xf32> to vector<34x384xbf16>
      %c0_23 = arith.constant 0 : index
      %c0_24 = arith.constant 0 : index
      %40 = vector.load %arg8[%c0_23, %c0_24] : memref<34x384xbf16, #tpu.memory_space<vmem>>, vector<34x384xbf16>
      tpu.vector_store %arg8[%c0_23, %c0_24], %39 {strides = array<i32>} : memref<34x384xbf16, #tpu.memory_space<vmem>>, vector<34x384xbf16>,
    } else {
    }
    return
  }
  func.func @transform_0(%arg0: i32, %arg1: i32, %arg2: i32) -> (i32, i32) {
    %c0_i32 = arith.constant 0 : i32
    return %arg0, %arg2 : i32, i32
  }
  func.func @transform_1(%arg0: i32, %arg1: i32, %arg2: i32) -> (i32, i32) {
    %c0_i32 = arith.constant 0 : i32
    %c0_i32_0 = arith.constant 0 : i32
    return %c0_i32, %arg2 : i32, i32
  }
  func.func @transform_2(%arg0: i32, %arg1: i32, %arg2: i32) -> (i32, i32) {
    %c0_i32 = arith.constant 0 : i32
    %c0_i32_0 = arith.constant 0 : i32
    return %c0_i32, %arg2 : i32, i32
  }
  func.func @transform_3(%arg0: i32, %arg1: i32, %arg2: i32) -> (i32, i32) {
    %c0_i32 = arith.constant 0 : i32
    return %arg2, %arg1 : i32, i32
  }
  func.func @transform_4(%arg0: i32, %arg1: i32, %arg2: i32) -> (i32, i32) {
    %c0_i32 = arith.constant 0 : i32
    %c0_i32_0 = arith.constant 0 : i32
    return %c0_i32, %arg1 : i32, i32
  }
  func.func @transform_5(%arg0: i32, %arg1: i32, %arg2: i32) -> (i32, i32) {
    %c0_i32 = arith.constant 0 : i32
    return %arg0, %arg1 : i32, i32
  }
}

module attributes {stable_mosaic.version = 11 : i64} {
  func.func @_attention_kernel(%arg0: i32, %arg1: memref<1x17x384xbf16, #tpu.memory_space<vmem>>, %arg2: memref<1x17x128xbf16, #tpu.memory_space<vmem>>) attributes {dimension_semantics = [#tpu.dimension_semantics<parallel>], iteration_bounds = array<i64: 2>, scalar_prefetch = 0 : i64, scratch_operands = 0 : i64, tpu.core_type = #tpu.core_type<tc>, window_params = [{transform_indices = @transform_0, window_bounds = array<i64: 1, 17, 384>}, {transform_indices = @transform_1, window_bounds = array<i64: 1, 17, 128>}]} {
    %c0 = arith.constant 0 : index
    %c0_0 = arith.constant 0 : index
    %c0_1 = arith.constant 0 : index
    %0 = vector.load %arg1[%c0, %c0_0, %c0_1] : memref<1x17x384xbf16, #tpu.memory_space<vmem>>, vector<1x17x384xbf16>
    %1 = vector.shape_cast %0 : vector<1x17x384xbf16> to vector<17x384xbf16>
    %2 = vector.extract_strided_slice %1 {offsets = [0, 0], sizes = [17, 64], strides = [1, 1]} : vector<17x384xbf16> to vector<17x64xbf16>
    %3 = vector.extract_strided_slice %1 {offsets = [0, 128], sizes = [17, 64], strides = [1, 1]} : vector<17x384xbf16> to vector<17x64xbf16>
    %4 = vector.extract_strided_slice %1 {offsets = [0, 256], sizes = [17, 64], strides = [1, 1]} : vector<17x384xbf16> to vector<17x64xbf16>
    %cst = arith.constant dense<0.000000e+00> : vector<17x17xf32>
    %5 = tpu.matmul %2, %3, %cst {dimension_numbers = #tpu.dot_dimension_numbers<[1], [1], [0], [0], [0, 0, 1, 0], [], []>} : vector<17x64xbf16>, vector<17x64xbf16>, vector<17x17xf32> -> vector<17x17xf32>
    %cst_2 = arith.constant 1.250000e-01 : f32
    %6 = vector.broadcast %cst_2 : f32 to vector<17x17xf32>
    %7 = arith.mulf %5, %6 : vector<17x17xf32>
    %cst_3 = arith.constant dense<0xFF800000> : vector<17xf32>
    %8 = vector.multi_reduction <maximumf>, %7, %cst_3 [1] : vector<17x17xf32> to vector<17xf32>
    %9 = vector.shape_cast %8 : vector<17xf32> to vector<17x1xf32>
    %10 = vector.broadcast %9 : vector<17x1xf32> to vector<17x17xf32>
    %11 = arith.subf %7, %10 : vector<17x17xf32>
    %12 = math.exp %11 : vector<17x17xf32>
    %cst_4 = arith.constant dense<0.000000e+00> : vector<17xf32>
    %13 = vector.multi_reduction <add>, %12, %cst_4 [1] : vector<17x17xf32> to vector<17xf32>
    %14 = vector.shape_cast %13 : vector<17xf32> to vector<17x1xf32>
    %15 = tpu.reciprocal %14 {approx = true} : vector<17x1xf32> -> vector<17x1xf32>
    %16 = vector.broadcast %15 : vector<17x1xf32> to vector<17x17xf32>
    %17 = arith.mulf %12, %16 : vector<17x17xf32>
    %18 = arith.truncf %17 : vector<17x17xf32> to vector<17x17xbf16>
    %cst_5 = arith.constant dense<0.000000e+00> : vector<17x64xf32>
    %19 = tpu.matmul %18, %4, %cst_5 {dimension_numbers = #tpu.dot_dimension_numbers<[1], [0], [0], [1], [0, 0, 1, 1], [], []>} : vector<17x17xbf16>, vector<17x64xbf16>, vector<17x64xf32> -> vector<17x64xf32>
    %20 = vector.extract_strided_slice %1 {offsets = [0, 64], sizes = [17, 64], strides = [1, 1]} : vector<17x384xbf16> to vector<17x64xbf16>
    %21 = vector.extract_strided_slice %1 {offsets = [0, 192], sizes = [17, 64], strides = [1, 1]} : vector<17x384xbf16> to vector<17x64xbf16>
    %22 = vector.extract_strided_slice %1 {offsets = [0, 320], sizes = [17, 64], strides = [1, 1]} : vector<17x384xbf16> to vector<17x64xbf16>
    %cst_6 = arith.constant dense<0.000000e+00> : vector<17x17xf32>
    %23 = tpu.matmul %20, %21, %cst_6 {dimension_numbers = #tpu.dot_dimension_numbers<[1], [1], [0], [0], [0, 0, 1, 0], [], []>} : vector<17x64xbf16>, vector<17x64xbf16>, vector<17x17xf32> -> vector<17x17xf32>
    %cst_7 = arith.constant 1.250000e-01 : f32
    %24 = vector.broadcast %cst_7 : f32 to vector<17x17xf32>
    %25 = arith.mulf %23, %24 : vector<17x17xf32>
    %cst_8 = arith.constant dense<0xFF800000> : vector<17xf32>
    %26 = vector.multi_reduction <maximumf>, %25, %cst_8 [1] : vector<17x17xf32> to vector<17xf32>
    %27 = vector.shape_cast %26 : vector<17xf32> to vector<17x1xf32>
    %28 = vector.broadcast %27 : vector<17x1xf32> to vector<17x17xf32>
    %29 = arith.subf %25, %28 : vector<17x17xf32>
    %30 = math.exp %29 : vector<17x17xf32>
    %cst_9 = arith.constant dense<0.000000e+00> : vector<17xf32>
    %31 = vector.multi_reduction <add>, %30, %cst_9 [1] : vector<17x17xf32> to vector<17xf32>
    %32 = vector.shape_cast %31 : vector<17xf32> to vector<17x1xf32>
    %33 = tpu.reciprocal %32 {approx = true} : vector<17x1xf32> -> vector<17x1xf32>
    %34 = vector.broadcast %33 : vector<17x1xf32> to vector<17x17xf32>
    %35 = arith.mulf %30, %34 : vector<17x17xf32>
    %36 = arith.truncf %35 : vector<17x17xf32> to vector<17x17xbf16>
    %cst_10 = arith.constant dense<0.000000e+00> : vector<17x64xf32>
    %37 = tpu.matmul %36, %22, %cst_10 {dimension_numbers = #tpu.dot_dimension_numbers<[1], [0], [0], [1], [0, 0, 1, 1], [], []>} : vector<17x17xbf16>, vector<17x64xbf16>, vector<17x64xf32> -> vector<17x64xf32>
    %38 = tpu.concatenate %19, %37 in 1 : vector<17x64xf32>, vector<17x64xf32> -> vector<17x128xf32>
    %39 = arith.truncf %38 : vector<17x128xf32> to vector<17x128xbf16>
    %c0_11 = arith.constant 0 : index
    %c0_12 = arith.constant 0 : index
    %c0_13 = arith.constant 0 : index
    %40 = vector.load %arg2[%c0_11, %c0_12, %c0_13] : memref<1x17x128xbf16, #tpu.memory_space<vmem>>, vector<1x17x128xbf16>
    %41 = vector.shape_cast %40 : vector<1x17x128xbf16> to vector<17x128xbf16>
    %42 = vector.shape_cast %39 : vector<17x128xbf16> to vector<1x17x128xbf16>
    tpu.vector_store %arg2[%c0_11, %c0_12, %c0_13], %42 {strides = array<i32>} : memref<1x17x128xbf16, #tpu.memory_space<vmem>>, vector<1x17x128xbf16>,
    return
  }
  func.func @transform_0(%arg0: i32) -> (i32, i32, i32) {
    %c0_i32 = arith.constant 0 : i32
    %c0_i32_0 = arith.constant 0 : i32
    %c0_i32_1 = arith.constant 0 : i32
    return %arg0, %c0_i32, %c0_i32_0 : i32, i32, i32
  }
  func.func @transform_1(%arg0: i32) -> (i32, i32, i32) {
    %c0_i32 = arith.constant 0 : i32
    %c0_i32_0 = arith.constant 0 : i32
    %c0_i32_1 = arith.constant 0 : i32
    return %arg0, %c0_i32, %c0_i32_0 : i32, i32, i32
  }
}

module attributes {stable_mosaic.version = 11 : i64} {
  func.func @_linear_kernel(%arg0: i32, %arg1: i32, %arg2: i32, %arg3: memref<34x128xbf16, #tpu.memory_space<vmem>>, %arg4: memref<128x128xbf16, #tpu.memory_space<vmem>>, %arg5: memref<1x128xf32, #tpu.memory_space<vmem>>, %arg6: memref<34x128xf32, #tpu.memory_space<vmem>>, %arg7: memref<34x128xf32, #tpu.memory_space<vmem>>, %arg8: memref<34x128xf32, #tpu.memory_space<vmem>>) attributes {dimension_semantics = [#tpu.dimension_semantics<parallel>, #tpu.dimension_semantics<parallel>, #tpu.dimension_semantics<arbitrary>], iteration_bounds = array<i64: 1, 1, 1>, scalar_prefetch = 0 : i64, scratch_operands = 1 : i64, tpu.core_type = #tpu.core_type<tc>, window_params = [{transform_indices = @transform_0, window_bounds = array<i64: 34, 128>}, {transform_indices = @transform_1, window_bounds = array<i64: 128, 128>}, {transform_indices = @transform_2, window_bounds = array<i64: 1, 128>}, {transform_indices = @transform_3, window_bounds = array<i64: 34, 128>}, {transform_indices = @transform_4, window_bounds = array<i64: 34, 128>}]} {
    %c0_i32 = arith.constant 0 : i32
    %0 = arith.cmpi eq, %arg2, %c0_i32 : i32
    %1 = arith.extui %0 : i1 to i32
    %c0_i32_0 = arith.constant 0 : i32
    %2 = arith.cmpi ne, %1, %c0_i32_0 : i32
    scf.if %2 {
      %cst_10 = arith.constant 0.000000e+00 : f32
      %12 = vector.broadcast %cst_10 : f32 to vector<34x128xf32>
      %c0_11 = arith.constant 0 : index
      %c0_12 = arith.constant 0 : index
      %13 = vector.load %arg8[%c0_11, %c0_12] : memref<34x128xf32, #tpu.memory_space<vmem>>, vector<34x128xf32>
      tpu.vector_store %arg8[%c0_11, %c0_12], %12 {strides = array<i32>} : memref<34x128xf32, #tpu.memory_space<vmem>>, vector<34x128xf32>,
    } else {
    }
    %c0 = arith.constant 0 : index
    %c0_1 = arith.constant 0 : index
    %3 = vector.load %arg3[%c0, %c0_1] : memref<34x128xbf16, #tpu.memory_space<vmem>>, vector<34x128xbf16>
    %c0_2 = arith.constant 0 : index
    %c0_3 = arith.constant 0 : index
    %4 = vector.load %arg8[%c0_2, %c0_3] : memref<34x128xf32, #tpu.memory_space<vmem>>, vector<34x128xf32>
    %c0_4 = arith.constant 0 : index
    %c0_5 = arith.constant 0 : index
    %5 = vector.load %arg4[%c0_4, %c0_5] : memref<128x128xbf16, #tpu.memory_space<vmem>>, vector<128x128xbf16>
    %cst = arith.constant dense<0.000000e+00> : vector<34x128xf32>
    %6 = tpu.matmul %3, %5, %cst {dimension_numbers = #tpu.dot_dimension_numbers<[1], [0], [0], [1], [0, 0, 1, 1], [], []>} : vector<34x128xbf16>, vector<128x128xbf16>, vector<34x128xf32> -> vector<34x128xf32>
    %7 = arith.addf %4, %6 : vector<34x128xf32>
    %c0_6 = arith.constant 0 : index
    %c0_7 = arith.constant 0 : index
    %8 = vector.load %arg8[%c0_6, %c0_7] : memref<34x128xf32, #tpu.memory_space<vmem>>, vector<34x128xf32>
    tpu.vector_store %arg8[%c0_6, %c0_7], %7 {strides = array<i32>} : memref<34x128xf32, #tpu.memory_space<vmem>>, vector<34x128xf32>,
    %c0_i32_8 = arith.constant 0 : i32
    %9 = arith.cmpi eq, %arg2, %c0_i32_8 : i32
    %10 = arith.extui %9 : i1 to i32
    %c0_i32_9 = arith.constant 0 : i32
    %11 = arith.cmpi ne, %10, %c0_i32_9 : i32
    scf.if %11 {
      %c0_10 = arith.constant 0 : index
      %c0_11 = arith.constant 0 : index
      %12 = vector.load %arg8[%c0_10, %c0_11] : memref<34x128xf32, #tpu.memory_space<vmem>>, vector<34x128xf32>
      %c0_12 = arith.constant 0 : index
      %c0_13 = arith.constant 0 : index
      %13 = vector.load %arg5[%c0_12, %c0_13] : memref<1x128xf32, #tpu.memory_space<vmem>>, vector<1x128xf32>
      %14 = vector.broadcast %13 : vector<1x128xf32> to vector<34x128xf32>
      %15 = arith.addf %12, %14 : vector<34x128xf32>
      %c0_14 = arith.constant 0 : index
      %c0_15 = arith.constant 0 : index
      %16 = vector.load %arg6[%c0_14, %c0_15] : memref<34x128xf32, #tpu.memory_space<vmem>>, vector<34x128xf32>
      %17 = arith.addf %15, %16 : vector<34x128xf32>
      %c0_16 = arith.constant 0 : index
      %c0_17 = arith.constant 0 : index
      %18 = vector.load %arg7[%c0_16, %c0_17] : memref<34x128xf32, #tpu.memory_space<vmem>>, vector<34x128xf32>
      tpu.vector_store %arg7[%c0_16, %c0_17], %17 {strides = array<i32>} : memref<34x128xf32, #tpu.memory_space<vmem>>, vector<34x128xf32>,
    } else {
    }
    return
  }
  func.func @transform_0(%arg0: i32, %arg1: i32, %arg2: i32) -> (i32, i32) {
    %c0_i32 = arith.constant 0 : i32
    return %arg0, %arg2 : i32, i32
  }
  func.func @transform_1(%arg0: i32, %arg1: i32, %arg2: i32) -> (i32, i32) {
    %c0_i32 = arith.constant 0 : i32
    return %arg2, %arg1 : i32, i32
  }
  func.func @transform_2(%arg0: i32, %arg1: i32, %arg2: i32) -> (i32, i32) {
    %c0_i32 = arith.constant 0 : i32
    %c0_i32_0 = arith.constant 0 : i32
    return %c0_i32, %arg1 : i32, i32
  }
  func.func @transform_3(%arg0: i32, %arg1: i32, %arg2: i32) -> (i32, i32) {
    %c0_i32 = arith.constant 0 : i32
    return %arg0, %arg1 : i32, i32
  }
  func.func @transform_4(%arg0: i32, %arg1: i32, %arg2: i32) -> (i32, i32) {
    %c0_i32 = arith.constant 0 : i32
    return %arg0, %arg1 : i32, i32
  }
}

module attributes {stable_mosaic.version = 11 : i64} {
  func.func @_linear_kernel(%arg0: i32, %arg1: i32, %arg2: i32, %arg3: memref<34x128xf32, #tpu.memory_space<vmem>>, %arg4: memref<1x128xf32, #tpu.memory_space<vmem>>, %arg5: memref<1x128xf32, #tpu.memory_space<vmem>>, %arg6: memref<128x256xbf16, #tpu.memory_space<vmem>>, %arg7: memref<1x256xf32, #tpu.memory_space<vmem>>, %arg8: memref<34x256xbf16, #tpu.memory_space<vmem>>, %arg9: memref<34x256xf32, #tpu.memory_space<vmem>>) attributes {dimension_semantics = [#tpu.dimension_semantics<parallel>, #tpu.dimension_semantics<parallel>, #tpu.dimension_semantics<arbitrary>], iteration_bounds = array<i64: 1, 1, 1>, scalar_prefetch = 0 : i64, scratch_operands = 1 : i64, tpu.core_type = #tpu.core_type<tc>, window_params = [{transform_indices = @transform_0, window_bounds = array<i64: 34, 128>}, {transform_indices = @transform_1, window_bounds = array<i64: 1, 128>}, {transform_indices = @transform_2, window_bounds = array<i64: 1, 128>}, {transform_indices = @transform_3, window_bounds = array<i64: 128, 256>}, {transform_indices = @transform_4, window_bounds = array<i64: 1, 256>}, {transform_indices = @transform_5, window_bounds = array<i64: 34, 256>}]} {
    %c0_i32 = arith.constant 0 : i32
    %0 = arith.cmpi eq, %arg2, %c0_i32 : i32
    %1 = arith.extui %0 : i1 to i32
    %c0_i32_0 = arith.constant 0 : i32
    %2 = arith.cmpi ne, %1, %c0_i32_0 : i32
    scf.if %2 {
      %cst_19 = arith.constant 0.000000e+00 : f32
      %35 = vector.broadcast %cst_19 : f32 to vector<34x256xf32>
      %c0_20 = arith.constant 0 : index
      %c0_21 = arith.constant 0 : index
      %36 = vector.load %arg9[%c0_20, %c0_21] : memref<34x256xf32, #tpu.memory_space<vmem>>, vector<34x256xf32>
      tpu.vector_store %arg9[%c0_20, %c0_21], %35 {strides = array<i32>} : memref<34x256xf32, #tpu.memory_space<vmem>>, vector<34x256xf32>,
    } else {
    }
    %c0 = arith.constant 0 : index
    %c0_1 = arith.constant 0 : index
    %3 = vector.load %arg3[%c0, %c0_1] : memref<34x128xf32, #tpu.memory_space<vmem>>, vector<34x128xf32>
    %cst = arith.constant dense<0.000000e+00> : vector<34xf32>
    %4 = vector.multi_reduction <add>, %3, %cst [1] : vector<34x128xf32> to vector<34xf32>
    %5 = vector.shape_cast %4 : vector<34xf32> to vector<34x1xf32>
    %cst_2 = arith.constant 1.280000e+02 : f32
    %6 = vector.broadcast %cst_2 : f32 to vector<34x1xf32>
    %7 = arith.divf %5, %6 : vector<34x1xf32>
    %8 = vector.broadcast %7 : vector<34x1xf32> to vector<34x128xf32>
    %9 = arith.subf %3, %8 : vector<34x128xf32>
    %10 = arith.mulf %9, %9 : vector<34x128xf32>
    %cst_3 = arith.constant dense<0.000000e+00> : vector<34xf32>
    %11 = vector.multi_reduction <add>, %10, %cst_3 [1] : vector<34x128xf32> to vector<34xf32>
    %12 = vector.shape_cast %11 : vector<34xf32> to vector<34x1xf32>
    %cst_4 = arith.constant 1.280000e+02 : f32
    %13 = vector.broadcast %cst_4 : f32 to vector<34x1xf32>
    %14 = arith.divf %12, %13 : vector<34x1xf32>
    %cst_5 = arith.constant 9.99999974E-6 : f32
    %15 = vector.broadcast %cst_5 : f32 to vector<34x1xf32>
    %16 = arith.addf %14, %15 : vector<34x1xf32>
    %17 = math.rsqrt %16 : vector<34x1xf32>
    %18 = vector.broadcast %17 : vector<34x1xf32> to vector<34x128xf32>
    %19 = arith.mulf %9, %18 : vector<34x128xf32>
    %c0_6 = arith.constant 0 : index
    %c0_7 = arith.constant 0 : index
    %20 = vector.load %arg4[%c0_6, %c0_7] : memref<1x128xf32, #tpu.memory_space<vmem>>, vector<1x128xf32>
    %21 = vector.broadcast %20 : vector<1x128xf32> to vector<34x128xf32>
    %22 = arith.mulf %19, %21 : vector<34x128xf32>
    %c0_8 = arith.constant 0 : index
    %c0_9 = arith.constant 0 : index
    %23 = vector.load %arg5[%c0_8, %c0_9] : memref<1x128xf32, #tpu.memory_space<vmem>>, vector<1x128xf32>
    %24 = vector.broadcast %23 : vector<1x128xf32> to vector<34x128xf32>
    %25 = arith.addf %22, %24 : vector<34x128xf32>
    %26 = arith.truncf %25 : vector<34x128xf32> to vector<34x128xbf16>
    %c0_10 = arith.constant 0 : index
    %c0_11 = arith.constant 0 : index
    %27 = vector.load %arg9[%c0_10, %c0_11] : memref<34x256xf32, #tpu.memory_space<vmem>>, vector<34x256xf32>
    %c0_12 = arith.constant 0 : index
    %c0_13 = arith.constant 0 : index
    %28 = vector.load %arg6[%c0_12, %c0_13] : memref<128x256xbf16, #tpu.memory_space<vmem>>, vector<128x256xbf16>
    %cst_14 = arith.constant dense<0.000000e+00> : vector<34x256xf32>
    %29 = tpu.matmul %26, %28, %cst_14 {dimension_numbers = #tpu.dot_dimension_numbers<[1], [0], [0], [1], [0, 0, 1, 1], [], []>} : vector<34x128xbf16>, vector<128x256xbf16>, vector<34x256xf32> -> vector<34x256xf32>
    %30 = arith.addf %27, %29 : vector<34x256xf32>
    %c0_15 = arith.constant 0 : index
    %c0_16 = arith.constant 0 : index
    %31 = vector.load %arg9[%c0_15, %c0_16] : memref<34x256xf32, #tpu.memory_space<vmem>>, vector<34x256xf32>
    tpu.vector_store %arg9[%c0_15, %c0_16], %30 {strides = array<i32>} : memref<34x256xf32, #tpu.memory_space<vmem>>, vector<34x256xf32>,
    %c0_i32_17 = arith.constant 0 : i32
    %32 = arith.cmpi eq, %arg2, %c0_i32_17 : i32
    %33 = arith.extui %32 : i1 to i32
    %c0_i32_18 = arith.constant 0 : i32
    %34 = arith.cmpi ne, %33, %c0_i32_18 : i32
    scf.if %34 {
      %c0_19 = arith.constant 0 : index
      %c0_20 = arith.constant 0 : index
      %35 = vector.load %arg9[%c0_19, %c0_20] : memref<34x256xf32, #tpu.memory_space<vmem>>, vector<34x256xf32>
      %c0_21 = arith.constant 0 : index
      %c0_22 = arith.constant 0 : index
      %36 = vector.load %arg7[%c0_21, %c0_22] : memref<1x256xf32, #tpu.memory_space<vmem>>, vector<1x256xf32>
      %37 = vector.broadcast %36 : vector<1x256xf32> to vector<34x256xf32>
      %38 = arith.addf %35, %37 : vector<34x256xf32>
      %39 = arith.mulf %38, %38 : vector<34x256xf32>
      %40 = arith.mulf %38, %39 : vector<34x256xf32>
      %cst_23 = arith.constant 4.471500e-02 : f32
      %41 = vector.broadcast %cst_23 : f32 to vector<34x256xf32>
      %42 = arith.mulf %41, %40 : vector<34x256xf32>
      %43 = arith.addf %38, %42 : vector<34x256xf32>
      %cst_24 = arith.constant 0.797884583 : f32
      %44 = vector.broadcast %cst_24 : f32 to vector<34x256xf32>
      %45 = arith.mulf %44, %43 : vector<34x256xf32>
      %46 = math.tanh %45 : vector<34x256xf32>
      %cst_25 = arith.constant 1.000000e+00 : f32
      %47 = vector.broadcast %cst_25 : f32 to vector<34x256xf32>
      %48 = arith.addf %47, %46 : vector<34x256xf32>
      %cst_26 = arith.constant 5.000000e-01 : f32
      %49 = vector.broadcast %cst_26 : f32 to vector<34x256xf32>
      %50 = arith.mulf %49, %48 : vector<34x256xf32>
      %51 = arith.mulf %38, %50 : vector<34x256xf32>
      %52 = arith.truncf %51 : vector<34x256xf32> to vector<34x256xbf16>
      %c0_27 = arith.constant 0 : index
      %c0_28 = arith.constant 0 : index
      %53 = vector.load %arg8[%c0_27, %c0_28] : memref<34x256xbf16, #tpu.memory_space<vmem>>, vector<34x256xbf16>
      tpu.vector_store %arg8[%c0_27, %c0_28], %52 {strides = array<i32>} : memref<34x256xbf16, #tpu.memory_space<vmem>>, vector<34x256xbf16>,
    } else {
    }
    return
  }
  func.func @transform_0(%arg0: i32, %arg1: i32, %arg2: i32) -> (i32, i32) {
    %c0_i32 = arith.constant 0 : i32
    return %arg0, %arg2 : i32, i32
  }
  func.func @transform_1(%arg0: i32, %arg1: i32, %arg2: i32) -> (i32, i32) {
    %c0_i32 = arith.constant 0 : i32
    %c0_i32_0 = arith.constant 0 : i32
    return %c0_i32, %arg2 : i32, i32
  }
  func.func @transform_2(%arg0: i32, %arg1: i32, %arg2: i32) -> (i32, i32) {
    %c0_i32 = arith.constant 0 : i32
    %c0_i32_0 = arith.constant 0 : i32
    return %c0_i32, %arg2 : i32, i32
  }
  func.func @transform_3(%arg0: i32, %arg1: i32, %arg2: i32) -> (i32, i32) {
    %c0_i32 = arith.constant 0 : i32
    return %arg2, %arg1 : i32, i32
  }
  func.func @transform_4(%arg0: i32, %arg1: i32, %arg2: i32) -> (i32, i32) {
    %c0_i32 = arith.constant 0 : i32
    %c0_i32_0 = arith.constant 0 : i32
    return %c0_i32, %arg1 : i32, i32
  }
  func.func @transform_5(%arg0: i32, %arg1: i32, %arg2: i32) -> (i32, i32) {
    %c0_i32 = arith.constant 0 : i32
    return %arg0, %arg1 : i32, i32
  }
}

module attributes {stable_mosaic.version = 11 : i64} {
  func.func @_linear_kernel(%arg0: i32, %arg1: i32, %arg2: i32, %arg3: memref<34x256xbf16, #tpu.memory_space<vmem>>, %arg4: memref<256x128xbf16, #tpu.memory_space<vmem>>, %arg5: memref<1x128xf32, #tpu.memory_space<vmem>>, %arg6: memref<34x128xf32, #tpu.memory_space<vmem>>, %arg7: memref<34x128xf32, #tpu.memory_space<vmem>>, %arg8: memref<34x128xf32, #tpu.memory_space<vmem>>) attributes {dimension_semantics = [#tpu.dimension_semantics<parallel>, #tpu.dimension_semantics<parallel>, #tpu.dimension_semantics<arbitrary>], iteration_bounds = array<i64: 1, 1, 1>, scalar_prefetch = 0 : i64, scratch_operands = 1 : i64, tpu.core_type = #tpu.core_type<tc>, window_params = [{transform_indices = @transform_0, window_bounds = array<i64: 34, 256>}, {transform_indices = @transform_1, window_bounds = array<i64: 256, 128>}, {transform_indices = @transform_2, window_bounds = array<i64: 1, 128>}, {transform_indices = @transform_3, window_bounds = array<i64: 34, 128>}, {transform_indices = @transform_4, window_bounds = array<i64: 34, 128>}]} {
    %c0_i32 = arith.constant 0 : i32
    %0 = arith.cmpi eq, %arg2, %c0_i32 : i32
    %1 = arith.extui %0 : i1 to i32
    %c0_i32_0 = arith.constant 0 : i32
    %2 = arith.cmpi ne, %1, %c0_i32_0 : i32
    scf.if %2 {
      %cst_10 = arith.constant 0.000000e+00 : f32
      %12 = vector.broadcast %cst_10 : f32 to vector<34x128xf32>
      %c0_11 = arith.constant 0 : index
      %c0_12 = arith.constant 0 : index
      %13 = vector.load %arg8[%c0_11, %c0_12] : memref<34x128xf32, #tpu.memory_space<vmem>>, vector<34x128xf32>
      tpu.vector_store %arg8[%c0_11, %c0_12], %12 {strides = array<i32>} : memref<34x128xf32, #tpu.memory_space<vmem>>, vector<34x128xf32>,
    } else {
    }
    %c0 = arith.constant 0 : index
    %c0_1 = arith.constant 0 : index
    %3 = vector.load %arg3[%c0, %c0_1] : memref<34x256xbf16, #tpu.memory_space<vmem>>, vector<34x256xbf16>
    %c0_2 = arith.constant 0 : index
    %c0_3 = arith.constant 0 : index
    %4 = vector.load %arg8[%c0_2, %c0_3] : memref<34x128xf32, #tpu.memory_space<vmem>>, vector<34x128xf32>
    %c0_4 = arith.constant 0 : index
    %c0_5 = arith.constant 0 : index
    %5 = vector.load %arg4[%c0_4, %c0_5] : memref<256x128xbf16, #tpu.memory_space<vmem>>, vector<256x128xbf16>
    %cst = arith.constant dense<0.000000e+00> : vector<34x128xf32>
    %6 = tpu.matmul %3, %5, %cst {dimension_numbers = #tpu.dot_dimension_numbers<[1], [0], [0], [1], [0, 0, 1, 1], [], []>} : vector<34x256xbf16>, vector<256x128xbf16>, vector<34x128xf32> -> vector<34x128xf32>
    %7 = arith.addf %4, %6 : vector<34x128xf32>
    %c0_6 = arith.constant 0 : index
    %c0_7 = arith.constant 0 : index
    %8 = vector.load %arg8[%c0_6, %c0_7] : memref<34x128xf32, #tpu.memory_space<vmem>>, vector<34x128xf32>
    tpu.vector_store %arg8[%c0_6, %c0_7], %7 {strides = array<i32>} : memref<34x128xf32, #tpu.memory_space<vmem>>, vector<34x128xf32>,
    %c0_i32_8 = arith.constant 0 : i32
    %9 = arith.cmpi eq, %arg2, %c0_i32_8 : i32
    %10 = arith.extui %9 : i1 to i32
    %c0_i32_9 = arith.constant 0 : i32
    %11 = arith.cmpi ne, %10, %c0_i32_9 : i32
    scf.if %11 {
      %c0_10 = arith.constant 0 : index
      %c0_11 = arith.constant 0 : index
      %12 = vector.load %arg8[%c0_10, %c0_11] : memref<34x128xf32, #tpu.memory_space<vmem>>, vector<34x128xf32>
      %c0_12 = arith.constant 0 : index
      %c0_13 = arith.constant 0 : index
      %13 = vector.load %arg5[%c0_12, %c0_13] : memref<1x128xf32, #tpu.memory_space<vmem>>, vector<1x128xf32>
      %14 = vector.broadcast %13 : vector<1x128xf32> to vector<34x128xf32>
      %15 = arith.addf %12, %14 : vector<34x128xf32>
      %c0_14 = arith.constant 0 : index
      %c0_15 = arith.constant 0 : index
      %16 = vector.load %arg6[%c0_14, %c0_15] : memref<34x128xf32, #tpu.memory_space<vmem>>, vector<34x128xf32>
      %17 = arith.addf %15, %16 : vector<34x128xf32>
      %c0_16 = arith.constant 0 : index
      %c0_17 = arith.constant 0 : index
      %18 = vector.load %arg7[%c0_16, %c0_17] : memref<34x128xf32, #tpu.memory_space<vmem>>, vector<34x128xf32>
      tpu.vector_store %arg7[%c0_16, %c0_17], %17 {strides = array<i32>} : memref<34x128xf32, #tpu.memory_space<vmem>>, vector<34x128xf32>,
    } else {
    }
    return
  }
  func.func @transform_0(%arg0: i32, %arg1: i32, %arg2: i32) -> (i32, i32) {
    %c0_i32 = arith.constant 0 : i32
    return %arg0, %arg2 : i32, i32
  }
  func.func @transform_1(%arg0: i32, %arg1: i32, %arg2: i32) -> (i32, i32) {
    %c0_i32 = arith.constant 0 : i32
    return %arg2, %arg1 : i32, i32
  }
  func.func @transform_2(%arg0: i32, %arg1: i32, %arg2: i32) -> (i32, i32) {
    %c0_i32 = arith.constant 0 : i32
    %c0_i32_0 = arith.constant 0 : i32
    return %c0_i32, %arg1 : i32, i32
  }
  func.func @transform_3(%arg0: i32, %arg1: i32, %arg2: i32) -> (i32, i32) {
    %c0_i32 = arith.constant 0 : i32
    return %arg0, %arg1 : i32, i32
  }
  func.func @transform_4(%arg0: i32, %arg1: i32, %arg2: i32) -> (i32, i32) {
    %c0_i32 = arith.constant 0 : i32
    return %arg0, %arg1 : i32, i32
  }
}

</mosaic_0001>

<llo_original>
// kernel: vit_classifier_forward.13
$region0: #{vit_classifier_forward.13}
  #allocation0 [shape = 'u32[]', space=smem, size = 0x4, offset = 0x4, fixed_abs, tag = 'smem constant byte address 0x4 - core index']
  #allocation1 [shape = 'u32[144,128]{1,0:T(1,128)}', space=vmem, size = 0x12000, scoped, tag = 'internal scratch']
  %s0 = inlined_call_operand.vmem [shape: bf16[2,17,384], index: 0, kind: input, shape index: {}]
  %s1 = inlined_call_operand.vmem [shape: bf16[2,17,128], index: 1, kind: output, shape index: {}]
  %s2 = sld [smem:[#allocation0]]
  $region37: #{vit_classifier_forward.13} parent=0
    _
  %s4 = ssub.s32 1, %s2
  %s5 = scalar_select 0, %s4, %s2
  loop: start=0, step=1, limit=4
  $region2: #{vit_classifier_forward.13} parent=0 // loop_pre_header
    _
  $region3: #{vit_classifier_forward.13} parent=0 // loop_header
    %s7 = sphi 0, %s11
    %p8 = scmp.ge.s32.totalorder %s7, 4
    %s17 = sphi 0, %s19
    %s20 = sphi 0, %s17
    %s21 = sphi 0, %s20
    %s37 = sphi 0, %s21
    %s43 = sphi 0, %s45
    %s46 = sphi 0, %s43
    %s47 = sphi 0, %s46
    %s63 = sphi 0, %s47
  $region4: #{vit_classifier_forward.13} parent=0 // loop_header_branch
    %10 = sbr.rel (%p8) target = $region8
  $region5: #{vit_classifier_forward.13} parent=0 // loop_body
    %s12 = ssub.s32 %s7, 1
    %s13 = ssub.s32 %s7, 2
    %s14 = sadd.s32 %s7, 1
    %s15 = ssub.s32 %s7, %s14
    %p16 = scmp.eq.s32.totalorder %s15, 0
    %s18 = sadd.s32 %s17, 1
    %s19 = scalar_select %p16, %s17, %s18
    %p22 = pneg %p16
    %p23 = scmp.eq.s32.totalorder %s7, 1
    %p24 = por %p22, %p23
    %p25 = scmp.ne.s32.totalorder %s17, %s20
    %p26 = scmp.eq.s32.totalorder %s7, 0
    %p27 = por %p25, %p26
    %p28 = scmp.ne.s32.totalorder %s17, %s20
    %p29 = scmp.eq.s32.totalorder %s12, 1
    %p30 = por %p28, %p29
    %p31 = scmp.ne.s32.totalorder %s20, %s21
    %p32 = scmp.eq.s32.totalorder %s12, 0
    %p33 = por %p31, %p32
    %p34 = scmp.ne.s32.totalorder %s20, %s21
    %p35 = scmp.eq.s32.totalorder %s13, 1
    %p36 = por %p34, %p35
    %p38 = scmp.ne.s32.totalorder %s21, %s37
    %p39 = scmp.eq.s32.totalorder %s13, 0
    %p40 = por %p38, %p39
    %s41 = ssub.s32 %s7, %s14
    %p42 = scmp.eq.s32.totalorder %s41, 0
    %s44 = sadd.s32 %s43, 1
    %s45 = scalar_select %p42, %s43, %s44
    %p48 = pneg %p42
    %p49 = scmp.eq.s32.totalorder %s7, 1
    %p50 = por %p48, %p49
    %p51 = scmp.ne.s32.totalorder %s43, %s46
    %p52 = scmp.eq.s32.totalorder %s7, 0
    %p53 = por %p51, %p52
    %p54 = scmp.ne.s32.totalorder %s43, %s46
    %p55 = scmp.eq.s32.totalorder %s12, 1
    %p56 = por %p54, %p55
    %p57 = scmp.ne.s32.totalorder %s46, %s47
    %p58 = scmp.eq.s32.totalorder %s12, 0
    %p59 = por %p57, %p58
    %p60 = scmp.ne.s32.totalorder %s46, %s47
    %p61 = scmp.eq.s32.totalorder %s13, 1
    %p62 = por %p60, %p61
    %p64 = scmp.ne.s32.totalorder %s47, %s63
    %p65 = scmp.eq.s32.totalorder %s13, 0
    %p66 = por %p64, %p65
    %p67 = scmp.le.s32.totalorder 1, %s7
    %p68 = scmp.lt.s32.totalorder %s7, 3
    %p69 = pnand %p67, %p68
    %p70 = pneg %p69
    // Predicated region
    $region9: #{vit_classifier_forward.13} parent=5 // pred_check
      _
    $region10: #{vit_classifier_forward.13} parent=5 // pred_check_branch
      %72 = sbr.rel (%p69) target = $region12
    $region11: #{vit_classifier_forward.13} parent=5 // pred_region
      %s73 = ssub.s32 %s7, 1
    $region12: #{vit_classifier_forward.13} parent=5 // pred_fallthru
      _
    %p74 = scmp.lt.s32.totalorder %s7, 2
    // Predicated region
    $region13: #{vit_classifier_forward.13} parent=5 // pred_check
      %p75 = pneg %p74
    $region14: #{vit_classifier_forward.13} parent=5 // pred_check_branch
      %77 = sbr.rel (%p75) target = $region16
    $region15: #{vit_classifier_forward.13} parent=5 // pred_region
      // Predicated region
      $region17: #{vit_classifier_forward.13} parent=15 // pred_check
        %p78 = pneg %p27
      $region18: #{vit_classifier_forward.13} parent=15 // pred_check_branch
        %80 = sbr.rel (%p78) target = $region20
      $region19: #{vit_classifier_forward.13} parent=15 // pred_region
        %p81 = scmp.lt.s32.totalorder %s7, 1
        %s82 = scalar_select %p81, %s7, 1
        %s83 = smul.addr %s82, 9
        %s84 = smul.addr %s83, 4
        %s85 = scalar_lea.vmem %s0, %s84
      $region20: #{vit_classifier_forward.13} parent=15 // pred_fallthru
        _
    $region16: #{vit_classifier_forward.13} parent=5 // pred_fallthru
      _
    %p86 = scmp.le.s32.totalorder 1, %s7
    %p87 = scmp.lt.s32.totalorder %s7, 3
    %p88 = pnand %p86, %p87
    %p89 = pneg %p88
    // Predicated region
    $region21: #{vit_classifier_forward.13} parent=5 // pred_check
      _
    $region22: #{vit_classifier_forward.13} parent=5 // pred_check_branch
      %91 = sbr.rel (%p88) target = $region24
    $region23: #{vit_classifier_forward.13} parent=5 // pred_region
      %s92 = ssub.s32 %s7, 1
      %p93 = scmp.lt.s32.totalorder %s12, 1
      %s94 = scalar_select %p93, %s12, 1
      %s95 = smul.addr %s94, 9
      %s96 = smul.addr %s95, 4
      %s97 = scalar_lea.vmem %s0, %s96
      %p98 = pneg %p33
      %p99 = pneg %p30
      %p100 = pneg %p59
      %p101 = pneg %p56
      %p102 = scmp.lt.s32.totalorder %s12, 1
      %s103 = scalar_select %p102, %s12, 1
      %s104 = smul.addr %s103, 3
      %s105 = smul.addr %s104, 4
      %s106 = scalar_lea.vmem %s1, %s105
      %p107 = scmp.lt.s32.totalorder %s12, 1
      %s108 = scalar_select %p107, %s12, 1
      %s109 = smul.addr %s108, 9
      %s110 = smul.addr %s109, 4
      %s111 = scalar_lea.vmem %s0, %s110
      %p112 = scmp.lt.s32.totalorder %s12, 1
      %s113 = scalar_select %p112, %s12, 1
      %s114 = smul.addr %s113, 3
      %s115 = smul.addr %s114, 4
      %s116 = scalar_lea.vmem %s1, %s115
      %v118 = vld [vmem:[%s111] sm:$0xff]
      %v119 = vld [vmem:[%s111 + $0x8] sm:$0xf]
      %v120 = vld [vmem:[%s111 + $0xc] sm:$0xff]
      %v121 = vld [vmem:[%s111 + $0x14] sm:$0xf]
      %v122 = vld [vmem:[%s111 + $0x18] sm:$0x11]
      %v123 = vld [vmem:[%s111 + $0x20] sm:$0x1]
      %v127 = vunpack.c.l.b16 %v118
      %v128 = vunpack.c.l.b16 %v120
      %v129 = vunpack.c.l.b16 %v122
      %v130 = vpack.c.b16 %v128, %v127
      %v131 = vpack.c.b16 %v129, %v129
      %v132 = vunpack.c.h.b16 %v118
      %v133 = vunpack.c.h.b16 %v120
      %v134 = vunpack.c.h.b16 %v122
      %v135 = vpack.c.b16 %v133, %v132
      %v136 = vpack.c.b16 %v134, %v134
      %vm137 = vcmask 523264
      %v139 = vsel %vm137, %v130, 0
      %v142 = vsel %vm137, %v131, 0
      %v145 = vsel %vm137, %v135, 0
      %v148 = vsel %vm137, %v136, 0
      %150 = vmatprep.subr.bf16.mxu0 0
      %151 = vmatpush1.bf16.xpose.msra.mxu0 0
      %152 = vmatprep.subr.bf16.mxu0 0
      %153 = vmatpush1.bf16.xpose.msra.mxu0 0
      %154 = vmatprep.subr.bf16.mxu0 0
      %155 = vmatpush1.bf16.xpose.msra.mxu0 0
      %156 = vmatprep.subr.bf16.mxu0 0
      %157 = vmatpush1.bf16.xpose.msra.mxu0 0
      %158 = vmatprep.subr.bf16.mxu0 0
      %159 = vmatpush1.bf16.xpose.msra.mxu0 0
      %160 = vmatprep.subr.bf16.mxu0 0
      %161 = vmatpush1.bf16.xpose.msra.mxu0 0
      %162 = vmatprep.subr.bf16.mxu0 0
      %163 = vmatpush1.bf16.xpose.msra.mxu0 %v148
      %164 = vmatprep.subr.bf16.mxu0 0
      %165 = vmatpush1.bf16.xpose.msra.mxu0 %v145
      %166 = vmatprep.subr.bf16.mxu0 0
      %167 = vmatpush2.bf16.xpose.msra.mxu0 0
      %168 = vmatprep.subr.bf16.mxu0 0
      %169 = vmatpush2.bf16.xpose.msra.mxu0 0
      %170 = vmatprep.subr.bf16.mxu0 0
      %171 = vmatpush2.bf16.xpose.msra.mxu0 0
      %172 = vmatprep.subr.bf16.mxu0 0
      %173 = vmatpush2.bf16.xpose.msra.mxu0 0
      %174 = vmatprep.subr.bf16.mxu0 0
      %175 = vmatpush2.bf16.xpose.msra.mxu0 0
      %176 = vmatprep.subr.bf16.mxu0 0
      %177 = vmatpush2.bf16.xpose.msra.mxu0 0
      %178 = vmatprep.subr.bf16.mxu0 0
      %179 = vmatpush2.bf16.xpose.msra.mxu0 0
      %180 = vmatprep.subr.bf16.mxu0 0
      %181 = vmatpush2.bf16.xpose.msra.mxu0 0
      %182 = vmatprep.mubr.bf16.mxu0 0
      %183 = vmatmul.mubr.bf16.gmra.mxu0 %v139
      %v184 = vpop.f32.mrf.mxu0
      %v185 = vadd.f32 0.0, %v184
      %v186 = vpop.f32.mrf.mxu0
      %v187 = vpop.f32.mrf.mxu0
      %v188 = vadd.f32 0.0, %v187
      %v189 = vpop.f32.mrf.mxu0
      %190 = vmatprep.mubr.bf16.mxu0 0
      %191 = vmatmul.mubr.bf16.gmra.mxu0 %v142
      %v192 = vpop.f32.mrf.mxu0
      %v193 = vadd.f32 0.0, %v192
      %v194 = vpop.f32.mrf.mxu0
      %v195 = vpop.f32.mrf.mxu0
      %v196 = vpop.f32.mrf.mxu0
      %197 = vdwg.mxu0
      %v198 = vmul.f32 %v185, 0.125
      %v199 = vmul.f32 %v188, 0.125
      %v200 = vmul.f32 %v193, 0.125
      %vm201 = vcmask 138240
      %v202 = vsel %vm201, %v198, -inf
      %203 = vmax.xlane.f32.xlu0 %v202
      %v204 = vpop.xlane.xlu0 %203
      %v205 = vsel %vm201, %v199, -inf
      %206 = vmax.xlane.f32.xlu0 %v205
      %v207 = vpop.xlane.xlu0 %206
      %vm208 = vcmask 131072
      %v209 = vsel %vm208, %v200, -inf
      %210 = vmax.xlane.f32.xlu0 %v209
      %v211 = vpop.xlane.xlu0 %210
      %v212 = vsub.f32 %v198, %v204
      %v213 = vsub.f32 %v199, %v207
      %v214 = vsub.f32 %v200, %v211
      %v215 = vmul.f32 %v212, 1.442695
      %v216 = vpow.pop %v215
      %v217 = vmul.f32 %v213, 1.442695
      %v218 = vpow.pop %v217
      %v219 = vmul.f32 %v214, 1.442695
      %v220 = vpow.pop %v219
      %v221 = vsel %vm201, %v216, 0.0
      %222 = vadd.xlane.f32.xlu0 %v221
      %v223 = vpop.xlane.xlu0 %222
      %v224 = vsel %vm201, %v218, 0.0
      %225 = vadd.xlane.f32.xlu0 %v224
      %v226 = vpop.xlane.xlu0 %225
      %v227 = vsel %vm208, %v220, 0.0
      %228 = vadd.xlane.f32.xlu0 %v227
      %v229 = vpop.xlane.xlu0 %228
      %v230 = vrcp.pop %v223
      %v231 = vrcp.pop %v226
      %v232 = vrcp.pop %v229
      %v233 = vmul.f32 %v216, %v230
      %v234 = vmul.f32 %v218, %v231
      %v235 = vmul.f32 %v220, %v232
      %v236 = vpack.c.bf16 %v234, %v233
      %v237 = vpack.c.bf16 %v235, %v235
      %v241 = vunpack.c.l.b16 %v119
      %v242 = vunpack.c.l.b16 %v121
      %v243 = vunpack.c.l.b16 %v123
      %v244 = vpack.c.b16 %v242, %v241
      %v245 = vpack.c.b16 %v243, %v243
      %v248 = vsel %vm201, %v236, 0
      %v251 = vsel %vm201, %v237, 0
      %vm253 = vcmask 1040384
      %v254 = vsel 0, 4294967295, 65535
      %v255 = vsel %vm253, %v254, 0
      %v257 = vand.u32 %v245, %v255
      %259 = vmatprep.subr.bf16.mxu0 0
      %260 = vmatpush1.bf16.msra.mxu0 0
      %261 = vmatprep.subr.bf16.mxu0 0
      %262 = vmatpush1.bf16.msra.mxu0 0
      %263 = vmatprep.subr.bf16.mxu0 0
      %264 = vmatpush1.bf16.msra.mxu0 0
      %265 = vmatprep.subr.bf16.mxu0 0
      %266 = vmatpush1.bf16.msra.mxu0 0
      %267 = vmatprep.subr.bf16.mxu0 0
      %268 = vmatpush1.bf16.msra.mxu0 0
      %269 = vmatprep.subr.bf16.mxu0 0
      %270 = vmatpush1.bf16.msra.mxu0 0
      %271 = vmatprep.subr.bf16.mxu0 0
      %272 = vmatpush1.bf16.msra.mxu0 %v257
      %273 = vmatprep.subr.bf16.mxu0 0
      %274 = vmatpush1.bf16.msra.mxu0 %v244
      %275 = vmatprep.subr.bf16.mxu0 0
      %276 = vmatpush2.bf16.msra.mxu0 0
      %277 = vmatprep.subr.bf16.mxu0 0
      %278 = vmatpush2.bf16.msra.mxu0 0
      %279 = vmatprep.subr.bf16.mxu0 0
      %280 = vmatpush2.bf16.msra.mxu0 0
      %281 = vmatprep.subr.bf16.mxu0 0
      %282 = vmatpush2.bf16.msra.mxu0 0
      %283 = vmatprep.subr.bf16.mxu0 0
      %284 = vmatpush2.bf16.msra.mxu0 0
      %285 = vmatprep.subr.bf16.mxu0 0
      %286 = vmatpush2.bf16.msra.mxu0 0
      %287 = vmatprep.subr.bf16.mxu0 0
      %288 = vmatpush2.bf16.msra.mxu0 0
      %289 = vmatprep.subr.bf16.mxu0 0
      %290 = vmatpush2.bf16.msra.mxu0 0
      %291 = vmatprep.mubr.bf16.mxu0 0
      %292 = vmatmul.mubr.bf16.gmra.mxu0 %v248
      %v293 = vpop.f32.mrf.mxu0
      %v294 = vadd.f32 0.0, %v293
      %v295 = vpop.f32.mrf.mxu0
      %v296 = vpop.f32.mrf.mxu0
      %v297 = vadd.f32 0.0, %v296
      %v298 = vpop.f32.mrf.mxu0
      %299 = vmatprep.mubr.bf16.mxu0 0
      %300 = vmatmul.mubr.bf16.gmra.mxu0 %v251
      %v301 = vpop.f32.mrf.mxu0
      %v302 = vadd.f32 0.0, %v301
      %v303 = vpop.f32.mrf.mxu0
      %v304 = vpop.f32.mrf.mxu0
      %v305 = vpop.f32.mrf.mxu0
      %306 = vdwg.mxu0
      %307 = vrot.lane.b32.xlu0 %v130, 64
      %v308 = vpop.permute.xlu0 %307
      %309 = vrot.lane.b32.xlu0 %v131, 64
      %v310 = vpop.permute.xlu0 %309
      %311 = vrot.lane.b32.xlu0 %v135, 64
      %v312 = vpop.permute.xlu0 %311
      %313 = vrot.lane.b32.xlu0 %v136, 64
      %v314 = vpop.permute.xlu0 %313
      %v316 = vsel %vm137, %v308, 0
      %v319 = vsel %vm137, %v310, 0
      %v322 = vsel %vm137, %v312, 0
      %v325 = vsel %vm137, %v314, 0
      %327 = vmatprep.subr.bf16.mxu0 0
      %328 = vmatpush1.bf16.xpose.msra.mxu0 0
      %329 = vmatprep.subr.bf16.mxu0 0
      %330 = vmatpush1.bf16.xpose.msra.mxu0 0
      %331 = vmatprep.subr.bf16.mxu0 0
      %332 = vmatpush1.bf16.xpose.msra.mxu0 0
      %333 = vmatprep.subr.bf16.mxu0 0
      %334 = vmatpush1.bf16.xpose.msra.mxu0 0
      %335 = vmatprep.subr.bf16.mxu0 0
      %336 = vmatpush1.bf16.xpose.msra.mxu0 0
      %337 = vmatprep.subr.bf16.mxu0 0
      %338 = vmatpush1.bf16.xpose.msra.mxu0 0
      %339 = vmatprep.subr.bf16.mxu0 0
      %340 = vmatpush1.bf16.xpose.msra.mxu0 %v325
      %341 = vmatprep.subr.bf16.mxu0 0
      %342 = vmatpush1.bf16.xpose.msra.mxu0 %v322
      %343 = vmatprep.subr.bf16.mxu0 0
      %344 = vmatpush2.bf16.xpose.msra.mxu0 0
      %345 = vmatprep.subr.bf16.mxu0 0
      %346 = vmatpush2.bf16.xpose.msra.mxu0 0
      %347 = vmatprep.subr.bf16.mxu0 0
      %348 = vmatpush2.bf16.xpose.msra.mxu0 0
      %349 = vmatprep.subr.bf16.mxu0 0
      %350 = vmatpush2.bf16.xpose.msra.mxu0 0
      %351 = vmatprep.subr.bf16.mxu0 0
      %352 = vmatpush2.bf16.xpose.msra.mxu0 0
      %353 = vmatprep.subr.bf16.mxu0 0
      %354 = vmatpush2.bf16.xpose.msra.mxu0 0
      %355 = vmatprep.subr.bf16.mxu0 0
      %356 = vmatpush2.bf16.xpose.msra.mxu0 0
      %357 = vmatprep.subr.bf16.mxu0 0
      %358 = vmatpush2.bf16.xpose.msra.mxu0 0
      %359 = vmatprep.mubr.bf16.mxu0 0
      %360 = vmatmul.mubr.bf16.gmra.mxu0 %v316
      %v361 = vpop.f32.mrf.mxu0
      %v362 = vadd.f32 0.0, %v361
      %v363 = vpop.f32.mrf.mxu0
      %v364 = vpop.f32.mrf.mxu0
      %v365 = vadd.f32 0.0, %v364
      %v366 = vpop.f32.mrf.mxu0
      %367 = vmatprep.mubr.bf16.mxu0 0
      %368 = vmatmul.mubr.bf16.gmra.mxu0 %v319
      %v369 = vpop.f32.mrf.mxu0
      %v370 = vadd.f32 0.0, %v369
      %v371 = vpop.f32.mrf.mxu0
      %v372 = vpop.f32.mrf.mxu0
      %v373 = vpop.f32.mrf.mxu0
      %374 = vdwg.mxu0
      %v375 = vmul.f32 %v362, 0.125
      %v376 = vmul.f32 %v365, 0.125
      %v377 = vmul.f32 %v370, 0.125
      %v378 = vsel %vm201, %v375, -inf
      %379 = vmax.xlane.f32.xlu0 %v378
      %v380 = vpop.xlane.xlu0 %379
      %v381 = vsel %vm201, %v376, -inf
      %382 = vmax.xlane.f32.xlu0 %v381
      %v383 = vpop.xlane.xlu0 %382
      %v384 = vsel %vm208, %v377, -inf
      %385 = vmax.xlane.f32.xlu0 %v384
      %v386 = vpop.xlane.xlu0 %385
      %v387 = vsub.f32 %v375, %v380
      %v388 = vsub.f32 %v376, %v383
      %v389 = vsub.f32 %v377, %v386
      %v390 = vmul.f32 %v387, 1.442695
      %v391 = vpow.pop %v390
      %v392 = vmul.f32 %v388, 1.442695
      %v393 = vpow.pop %v392
      %v394 = vmul.f32 %v389, 1.442695
      %v395 = vpow.pop %v394
      %v396 = vsel %vm201, %v391, 0.0
      %397 = vadd.xlane.f32.xlu0 %v396
      %v398 = vpop.xlane.xlu0 %397
      %v399 = vsel %vm201, %v393, 0.0
      %400 = vadd.xlane.f32.xlu0 %v399
      %v401 = vpop.xlane.xlu0 %400
      %v402 = vsel %vm208, %v395, 0.0
      %403 = vadd.xlane.f32.xlu0 %v402
      %v404 = vpop.xlane.xlu0 %403
      %v405 = vrcp.pop %v398
      %v406 = vrcp.pop %v401
      %v407 = vrcp.pop %v404
      %v408 = vmul.f32 %v391, %v405
      %v409 = vmul.f32 %v393, %v406
      %v410 = vmul.f32 %v395, %v407
      %v411 = vpack.c.bf16 %v409, %v408
      %v412 = vpack.c.bf16 %v410, %v410
      %413 = vrot.lane.b32.xlu0 %v244, 64
      %v414 = vpop.permute.xlu0 %413
      %415 = vrot.lane.b32.xlu0 %v245, 64
      %v416 = vpop.permute.xlu0 %415
      %v419 = vsel %vm201, %v411, 0
      %v422 = vsel %vm201, %v412, 0
      %v425 = vand.u32 %v416, %v255
      %427 = vmatprep.subr.bf16.mxu0 0
      %428 = vmatpush1.bf16.msra.mxu0 0
      %429 = vmatprep.subr.bf16.mxu0 0
      %430 = vmatpush1.bf16.msra.mxu0 0
      %431 = vmatprep.subr.bf16.mxu0 0
      %432 = vmatpush1.bf16.msra.mxu0 0
      %433 = vmatprep.subr.bf16.mxu0 0
      %434 = vmatpush1.bf16.msra.mxu0 0
      %435 = vmatprep.subr.bf16.mxu0 0
      %436 = vmatpush1.bf16.msra.mxu0 0
      %437 = vmatprep.subr.bf16.mxu0 0
      %438 = vmatpush1.bf16.msra.mxu0 0
      %439 = vmatprep.subr.bf16.mxu0 0
      %440 = vmatpush1.bf16.msra.mxu0 %v425
      %441 = vmatprep.subr.bf16.mxu0 0
      %442 = vmatpush1.bf16.msra.mxu0 %v414
      %443 = vmatprep.subr.bf16.mxu0 0
      %444 = vmatpush2.bf16.msra.mxu0 0
      %445 = vmatprep.subr.bf16.mxu0 0
      %446 = vmatpush2.bf16.msra.mxu0 0
      %447 = vmatprep.subr.bf16.mxu0 0
      %448 = vmatpush2.bf16.msra.mxu0 0
      %449 = vmatprep.subr.bf16.mxu0 0
      %450 = vmatpush2.bf16.msra.mxu0 0
      %451 = vmatprep.subr.bf16.mxu0 0
      %452 = vmatpush2.bf16.msra.mxu0 0
      %453 = vmatprep.subr.bf16.mxu0 0
      %454 = vmatpush2.bf16.msra.mxu0 0
      %455 = vmatprep.subr.bf16.mxu0 0
      %456 = vmatpush2.bf16.msra.mxu0 0
      %457 = vmatprep.subr.bf16.mxu0 0
      %458 = vmatpush2.bf16.msra.mxu0 0
      %459 = vmatprep.mubr.bf16.mxu0 0
      %460 = vmatmul.mubr.bf16.gmra.mxu0 %v419
      %v461 = vpop.f32.mrf.mxu0
      %v462 = vadd.f32 0.0, %v461
      %v463 = vpop.f32.mrf.mxu0
      %v464 = vpop.f32.mrf.mxu0
      %v465 = vadd.f32 0.0, %v464
      %v466 = vpop.f32.mrf.mxu0
      %467 = vmatprep.mubr.bf16.mxu0 0
      %468 = vmatmul.mubr.bf16.gmra.mxu0 %v422
      %v469 = vpop.f32.mrf.mxu0
      %v470 = vadd.f32 0.0, %v469
      %v471 = vpop.f32.mrf.mxu0
      %v472 = vpop.f32.mrf.mxu0
      %v473 = vpop.f32.mrf.mxu0
      %474 = vdwg.mxu0
      %478 = vrot.lane.b32.xlu0 %v462, 64
      %v479 = vpop.permute.xlu0 %478
      %480 = vrot.lane.b32.xlu0 %v465, 64
      %v481 = vpop.permute.xlu0 %480
      %482 = vrot.lane.b32.xlu0 %v470, 64
      %v483 = vpop.permute.xlu0 %482
      %v487 = vsel %vm137, %v294, %v479
      %v488 = vsel %vm137, %v297, %v481
      %v489 = vsel %vm137, %v302, %v483
      %v490 = vpack.c.bf16 %v488, %v487
      %v491 = vpack.c.bf16 %v489, %v489
      %v494 = vunpack.c.l.b16 %v490
      %v495 = vunpack.c.h.b16 %v490
      %v496 = vunpack.c.l.b16 %v491
      %v497 = vpack.c.b16 %v494, %v494
      %v498 = vpack.c.b16 %v495, %v495
      %v499 = vpack.c.b16 %v496, %v496
      %503 = vst [vmem:[%s116] sm:$0xf] %v497
      %504 = vst [vmem:[%s116 + $0x4] sm:$0xf] %v498
      %vm505 = vcmask 1040384
      %vm506 = vsmask.f32 256
      %vm507 = vmand %vm505, %vm506
      %v508 = vld [vmem:[%s116 + $0x8] sm:$0x1]
      %v509 = vsel %vm507, %v499, %v508
      %510 = vst [vmem:[%s116 + $0x8] sm:$0x1] %v509
      %p511 = scmp.lt.s32.totalorder %s12, 1
      %s512 = scalar_select %p511, %s12, 1
      %s513 = smul.addr %s512, 3
      %s514 = smul.addr %s513, 4
      %s515 = scalar_lea.vmem %s1, %s514
      // Predicated region
      $region25: #{vit_classifier_forward.13} parent=23 // pred_check
        %p516 = pneg %p56
      $region26: #{vit_classifier_forward.13} parent=23 // pred_check_branch
        %518 = sbr.rel (%p516) target = $region28
      $region27: #{vit_classifier_forward.13} parent=23 // pred_region
        _
      $region28: #{vit_classifier_forward.13} parent=23 // pred_fallthru
        _
    $region24: #{vit_classifier_forward.13} parent=5 // pred_fallthru
      _
    %p519 = scmp.le.s32.totalorder 2, %s7
    // Predicated region
    $region29: #{vit_classifier_forward.13} parent=5 // pred_check
      %p520 = pneg %p519
    $region30: #{vit_classifier_forward.13} parent=5 // pred_check_branch
      %522 = sbr.rel (%p520) target = $region32
    $region31: #{vit_classifier_forward.13} parent=5 // pred_region
      %s523 = ssub.s32 %s7, 2
      // Predicated region
      $region33: #{vit_classifier_forward.13} parent=31 // pred_check
        %p524 = pneg %p62
      $region34: #{vit_classifier_forward.13} parent=31 // pred_check_branch
        %526 = sbr.rel (%p524) target = $region36
      $region35: #{vit_classifier_forward.13} parent=31 // pred_region
        %p527 = scmp.lt.s32.totalorder %s13, 1
        %s528 = scalar_select %p527, %s13, 1
        %s529 = smul.addr %s528, 3
        %s530 = smul.addr %s529, 4
        %s531 = scalar_lea.vmem %s1, %s530
      $region36: #{vit_classifier_forward.13} parent=31 // pred_fallthru
        _
    $region32: #{vit_classifier_forward.13} parent=5 // pred_fallthru
      _
  $region6: #{vit_classifier_forward.13} parent=0 // loop_footer
    %s11 = sadd.s32 1, %s7
  $region7: #{vit_classifier_forward.13} parent=0 // loop_footer_branch
    %6 = sbr.rel target = $region3
  $region8: #{vit_classifier_forward.13} parent=0 // loop_exit
    _

// kernel: vit_classifier_forward.14
$region0: #{vit_classifier_forward.14}
  #allocation0 [shape = 'u32[]', space=smem, size = 0x4, offset = 0x4, fixed_abs, tag = 'smem constant byte address 0x4 - core index']
  #allocation1 [shape = 'u32[144,128]{1,0:T(1,128)}', space=vmem, size = 0x12000, scoped, tag = 'internal scratch']
  #allocation2 [shape = 'f32[34,128]{1,0:T(8,128)}', space=vmem, size = 0x5000, scoped, tag = 'scratch operand']
  %s0 = inlined_call_operand.vmem [shape: bf16[34,128], index: 0, kind: input, shape index: {}]
  %s1 = inlined_call_operand.vmem [shape: bf16[128,128], index: 1, kind: input, shape index: {}]
  %s2 = inlined_call_operand.vmem [shape: f32[1,128], index: 2, kind: input, shape index: {}]
  %s3 = inlined_call_operand.vmem [shape: f32[34,128], index: 3, kind: input, shape index: {}]
  %s4 = inlined_call_operand.vmem [shape: f32[34,128], index: 4, kind: output, shape index: {}]
  %s5 = sld [smem:[#allocation0]]
  $region34: #{vit_classifier_forward.14} parent=0
    _
  %s7 = ssub.s32 1, %s5
  %s8 = scalar_select 0, %s7, %s5
  // Predicated region
  $region2: #{vit_classifier_forward.14} parent=0 // pred_check
    _
  $region3: #{vit_classifier_forward.14} parent=0 // pred_check_branch
    %10 = sbr.rel (0) target = $region5
  $region4: #{vit_classifier_forward.14} parent=0 // pred_region
    _
  $region5: #{vit_classifier_forward.14} parent=0 // pred_fallthru
    _
  // Predicated region
  $region6: #{vit_classifier_forward.14} parent=0 // pred_check
    _
  $region7: #{vit_classifier_forward.14} parent=0 // pred_check_branch
    %12 = sbr.rel (0) target = $region9
  $region8: #{vit_classifier_forward.14} parent=0 // pred_region
    _
  $region9: #{vit_classifier_forward.14} parent=0 // pred_fallthru
    _
  // Predicated region
  $region10: #{vit_classifier_forward.14} parent=0 // pred_check
    _
  $region11: #{vit_classifier_forward.14} parent=0 // pred_check_branch
    %14 = sbr.rel (0) target = $region13
  $region12: #{vit_classifier_forward.14} parent=0 // pred_region
    _
  $region13: #{vit_classifier_forward.14} parent=0 // pred_fallthru
    _
  // Predicated region
  $region14: #{vit_classifier_forward.14} parent=0 // pred_check
    _
  $region15: #{vit_classifier_forward.14} parent=0 // pred_check_branch
    %16 = sbr.rel (0) target = $region17
  $region16: #{vit_classifier_forward.14} parent=0 // pred_region
    _
  $region17: #{vit_classifier_forward.14} parent=0 // pred_fallthru
    _
  %p18 = scmp.eq.s32.totalorder 0, 0
  // Predicated region
  $region18: #{vit_classifier_forward.14} parent=0 // pred_check
    %p19 = pneg %p18
  $region19: #{vit_classifier_forward.14} parent=0 // pred_check_branch
    %21 = sbr.rel (%p19) target = $region21
  $region20: #{vit_classifier_forward.14} parent=0 // pred_region
    %22 = vst [vmem:[#allocation2] sm:$0xff] 0.0
    %23 = vst [vmem:[#allocation2 + $0x8] sm:$0xff] 0.0
    %24 = vst [vmem:[#allocation2 + $0x10] sm:$0xff] 0.0
    %25 = vst [vmem:[#allocation2 + $0x18] sm:$0xff] 0.0
    %26 = vst [vmem:[#allocation2 + $0x20] sm:$0x3] 0.0
  $region21: #{vit_classifier_forward.14} parent=0 // pred_fallthru
    _
  %v27 = vld [vmem:[%s0] sm:$0xf]
  %v28 = vld [vmem:[%s0 + $0x4] sm:$0xf]
  %v29 = vld [vmem:[%s0 + $0x8] sm:$0xf]
  %v30 = vld [vmem:[%s0 + $0xc] sm:$0xf]
  %v31 = vld [vmem:[%s0 + $0x10] sm:$0x1]
  %v32 = vld [vmem:[#allocation2] sm:$0xff]
  %v33 = vld [vmem:[#allocation2 + $0x8] sm:$0xff]
  %v34 = vld [vmem:[#allocation2 + $0x10] sm:$0xff]
  %v35 = vld [vmem:[#allocation2 + $0x18] sm:$0xff]
  %v36 = vld [vmem:[#allocation2 + $0x20] sm:$0x3]
  %v37 = vld [vmem:[%s1] sm:$0xf]
  %v38 = vld [vmem:[%s1 + $0x4] sm:$0xf]
  %v39 = vld [vmem:[%s1 + $0x8] sm:$0xf]
  %v40 = vld [vmem:[%s1 + $0xc] sm:$0xf]
  %v41 = vld [vmem:[%s1 + $0x10] sm:$0xf]
  %v42 = vld [vmem:[%s1 + $0x14] sm:$0xf]
  %v43 = vld [vmem:[%s1 + $0x18] sm:$0xf]
  %v44 = vld [vmem:[%s1 + $0x1c] sm:$0xf]
  %v45 = vld [vmem:[%s1 + $0x20] sm:$0xf]
  %v46 = vld [vmem:[%s1 + $0x24] sm:$0xf]
  %v47 = vld [vmem:[%s1 + $0x28] sm:$0xf]
  %v48 = vld [vmem:[%s1 + $0x2c] sm:$0xf]
  %v49 = vld [vmem:[%s1 + $0x30] sm:$0xf]
  %v50 = vld [vmem:[%s1 + $0x34] sm:$0xf]
  %v51 = vld [vmem:[%s1 + $0x38] sm:$0xf]
  %v52 = vld [vmem:[%s1 + $0x3c] sm:$0xf]
  %v58 = vunpack.c.l.b16 %v27
  %v59 = vunpack.c.l.b16 %v28
  %v60 = vunpack.c.l.b16 %v29
  %v61 = vunpack.c.l.b16 %v30
  %v62 = vunpack.c.l.b16 %v31
  %v63 = vpack.c.b16 %v59, %v58
  %v64 = vpack.c.b16 %v61, %v60
  %v65 = vpack.c.b16 %v62, %v62
  %v85 = vunpack.c.l.b16 %v37
  %v86 = vunpack.c.l.b16 %v38
  %v87 = vunpack.c.l.b16 %v39
  %v88 = vunpack.c.l.b16 %v40
  %v89 = vunpack.c.l.b16 %v41
  %v90 = vunpack.c.l.b16 %v42
  %v91 = vunpack.c.l.b16 %v43
  %v92 = vunpack.c.l.b16 %v44
  %v93 = vunpack.c.l.b16 %v45
  %v94 = vunpack.c.l.b16 %v46
  %v95 = vunpack.c.l.b16 %v47
  %v96 = vunpack.c.l.b16 %v48
  %v97 = vunpack.c.l.b16 %v49
  %v98 = vunpack.c.l.b16 %v50
  %v99 = vunpack.c.l.b16 %v51
  %v100 = vunpack.c.l.b16 %v52
  %v101 = vpack.c.b16 %v86, %v85
  %v102 = vpack.c.b16 %v88, %v87
  %v103 = vpack.c.b16 %v90, %v89
  %v104 = vpack.c.b16 %v92, %v91
  %v105 = vpack.c.b16 %v94, %v93
  %v106 = vpack.c.b16 %v96, %v95
  %v107 = vpack.c.b16 %v98, %v97
  %v108 = vpack.c.b16 %v100, %v99
  %117 = vmatprep.subr.bf16.mxu0 0
  %118 = vmatpush1.bf16.msra.mxu0 %v108
  %119 = vmatprep.subr.bf16.mxu0 0
  %120 = vmatpush1.bf16.msra.mxu0 %v107
  %121 = vmatprep.subr.bf16.mxu0 0
  %122 = vmatpush1.bf16.msra.mxu0 %v106
  %123 = vmatprep.subr.bf16.mxu0 0
  %124 = vmatpush1.bf16.msra.mxu0 %v105
  %125 = vmatprep.subr.bf16.mxu0 0
  %126 = vmatpush1.bf16.msra.mxu0 %v104
  %127 = vmatprep.subr.bf16.mxu0 0
  %128 = vmatpush1.bf16.msra.mxu0 %v103
  %129 = vmatprep.subr.bf16.mxu0 0
  %130 = vmatpush1.bf16.msra.mxu0 %v102
  %131 = vmatprep.subr.bf16.mxu0 0
  %132 = vmatpush1.bf16.msra.mxu0 %v101
  %133 = vmatprep.subr.bf16.mxu0 0
  %134 = vmatpush2.bf16.msra.mxu0 0
  %135 = vmatprep.subr.bf16.mxu0 0
  %136 = vmatpush2.bf16.msra.mxu0 0
  %137 = vmatprep.subr.bf16.mxu0 0
  %138 = vmatpush2.bf16.msra.mxu0 0
  %139 = vmatprep.subr.bf16.mxu0 0
  %140 = vmatpush2.bf16.msra.mxu0 0
  %141 = vmatprep.subr.bf16.mxu0 0
  %142 = vmatpush2.bf16.msra.mxu0 0
  %143 = vmatprep.subr.bf16.mxu0 0
  %144 = vmatpush2.bf16.msra.mxu0 0
  %145 = vmatprep.subr.bf16.mxu0 0
  %146 = vmatpush2.bf16.msra.mxu0 0
  %147 = vmatprep.subr.bf16.mxu0 0
  %148 = vmatpush2.bf16.msra.mxu0 0
  %149 = vmatprep.mubr.bf16.mxu0 0
  %150 = vmatmul.mubr.bf16.gmra.mxu0 %v63
  %v151 = vpop.f32.mrf.mxu0
  %v152 = vadd.f32 0.0, %v151
  %v153 = vpop.f32.mrf.mxu0
  %v154 = vpop.f32.mrf.mxu0
  %v155 = vadd.f32 0.0, %v154
  %v156 = vpop.f32.mrf.mxu0
  %157 = vmatprep.mubr.bf16.mxu0 0
  %158 = vmatmul.mubr.bf16.gmra.mxu0 %v64
  %v159 = vpop.f32.mrf.mxu0
  %v160 = vadd.f32 0.0, %v159
  %v161 = vpop.f32.mrf.mxu0
  %v162 = vpop.f32.mrf.mxu0
  %v163 = vadd.f32 0.0, %v162
  %v164 = vpop.f32.mrf.mxu0
  %165 = vmatprep.mubr.bf16.mxu0 0
  %166 = vmatmul.mubr.bf16.gmra.mxu0 %v65
  %v167 = vpop.f32.mrf.mxu0
  %v168 = vadd.f32 0.0, %v167
  %v169 = vpop.f32.mrf.mxu0
  %v170 = vpop.f32.mrf.mxu0
  %v171 = vpop.f32.mrf.mxu0
  %172 = vdwg.mxu0
  %v173 = vadd.f32 %v32, %v152
  %v174 = vadd.f32 %v33, %v155
  %v175 = vadd.f32 %v34, %v160
  %v176 = vadd.f32 %v35, %v163
  %v177 = vadd.f32 %v36, %v168
  %178 = vst [vmem:[#allocation2] sm:$0xff] %v173
  %179 = vst [vmem:[#allocation2 + $0x8] sm:$0xff] %v174
  %180 = vst [vmem:[#allocation2 + $0x10] sm:$0xff] %v175
  %181 = vst [vmem:[#allocation2 + $0x18] sm:$0xff] %v176
  %182 = vst [vmem:[#allocation2 + $0x20] sm:$0x3] %v177
  // Predicated region
  $region22: #{vit_classifier_forward.14} parent=0 // pred_check
    %p183 = pneg %p18
  $region23: #{vit_classifier_forward.14} parent=0 // pred_check_branch
    %185 = sbr.rel (%p183) target = $region25
  $region24: #{vit_classifier_forward.14} parent=0 // pred_region
    %v186 = vld [vmem:[#allocation2] sm:$0xff]
    %v187 = vld [vmem:[#allocation2 + $0x8] sm:$0xff]
    %v188 = vld [vmem:[#allocation2 + $0x10] sm:$0xff]
    %v189 = vld [vmem:[#allocation2 + $0x18] sm:$0xff]
    %v190 = vld [vmem:[#allocation2 + $0x20] sm:$0x3]
    %v191 = vld [vmem:[%s2] sm:$0x1]
    %v193 = vlaneseq
    %v194 = vshrl.u32 %v193, 7
    %v195 = vsub.s32 0, %v194
    %v196 = vrot.slane %v191, %v195
    %v198 = vadd.f32 %v186, %v196
    %v199 = vadd.f32 %v187, %v196
    %v200 = vadd.f32 %v188, %v196
    %v201 = vadd.f32 %v189, %v196
    %v202 = vadd.f32 %v190, %v196
    %v203 = vld [vmem:[%s3] sm:$0xff]
    %v204 = vld [vmem:[%s3 + $0x8] sm:$0xff]
    %v205 = vld [vmem:[%s3 + $0x10] sm:$0xff]
    %v206 = vld [vmem:[%s3 + $0x18] sm:$0xff]
    %v207 = vld [vmem:[%s3 + $0x20] sm:$0x3]
    %v208 = vadd.f32 %v198, %v203
    %v209 = vadd.f32 %v199, %v204
    %v210 = vadd.f32 %v200, %v205
    %v211 = vadd.f32 %v201, %v206
    %v212 = vadd.f32 %v202, %v207
    %213 = vst [vmem:[%s4] sm:$0xff] %v208
    %214 = vst [vmem:[%s4 + $0x8] sm:$0xff] %v209
    %215 = vst [vmem:[%s4 + $0x10] sm:$0xff] %v210
    %216 = vst [vmem:[%s4 + $0x18] sm:$0xff] %v211
    %217 = vst [vmem:[%s4 + $0x20] sm:$0x3] %v212
  $region25: #{vit_classifier_forward.14} parent=0 // pred_fallthru
    _
  // Predicated region
  $region26: #{vit_classifier_forward.14} parent=0 // pred_check
    _
  $region27: #{vit_classifier_forward.14} parent=0 // pred_check_branch
    %219 = sbr.rel (0) target = $region29
  $region28: #{vit_classifier_forward.14} parent=0 // pred_region
    _
  $region29: #{vit_classifier_forward.14} parent=0 // pred_fallthru
    _
  // Predicated region
  $region30: #{vit_classifier_forward.14} parent=0 // pred_check
    _
  $region31: #{vit_classifier_forward.14} parent=0 // pred_check_branch
    %221 = sbr.rel (0) target = $region33
  $region32: #{vit_classifier_forward.14} parent=0 // pred_region
    _
  $region33: #{vit_classifier_forward.14} parent=0 // pred_fallthru
    _

// kernel: vit_classifier_forward.11
$region0: #{vit_classifier_forward.11}
  #allocation0 [shape = 'u32[]', space=smem, size = 0x4, offset = 0x4, fixed_abs, tag = 'smem constant byte address 0x4 - core index']
  #allocation1 [shape = 'u32[144,128]{1,0:T(1,128)}', space=vmem, size = 0x12000, scoped, tag = 'internal scratch']
  #allocation2 [shape = 'f32[32,128]{1,0:T(8,128)}', space=vmem, size = 0x4000, scoped, tag = 'scratch operand']
  %s0 = inlined_call_operand.vmem [shape: f32[32,128], index: 0, kind: input, shape index: {}]
  %s1 = inlined_call_operand.vmem [shape: bf16[128,128], index: 1, kind: input, shape index: {}]
  %s2 = inlined_call_operand.vmem [shape: f32[1,128], index: 2, kind: input, shape index: {}]
  %s3 = inlined_call_operand.vmem [shape: f32[32,128], index: 3, kind: output, shape index: {}]
  %s4 = sld [smem:[#allocation0]]
  $region30: #{vit_classifier_forward.11} parent=0
    _
  %s6 = ssub.s32 1, %s4
  %s7 = scalar_select 0, %s6, %s4
  // Predicated region
  $region2: #{vit_classifier_forward.11} parent=0 // pred_check
    _
  $region3: #{vit_classifier_forward.11} parent=0 // pred_check_branch
    %9 = sbr.rel (0) target = $region5
  $region4: #{vit_classifier_forward.11} parent=0 // pred_region
    _
  $region5: #{vit_classifier_forward.11} parent=0 // pred_fallthru
    _
  // Predicated region
  $region6: #{vit_classifier_forward.11} parent=0 // pred_check
    _
  $region7: #{vit_classifier_forward.11} parent=0 // pred_check_branch
    %11 = sbr.rel (0) target = $region9
  $region8: #{vit_classifier_forward.11} parent=0 // pred_region
    _
  $region9: #{vit_classifier_forward.11} parent=0 // pred_fallthru
    _
  // Predicated region
  $region10: #{vit_classifier_forward.11} parent=0 // pred_check
    _
  $region11: #{vit_classifier_forward.11} parent=0 // pred_check_branch
    %13 = sbr.rel (0) target = $region13
  $region12: #{vit_classifier_forward.11} parent=0 // pred_region
    _
  $region13: #{vit_classifier_forward.11} parent=0 // pred_fallthru
    _
  %p15 = scmp.eq.s32.totalorder 0, 0
  // Predicated region
  $region14: #{vit_classifier_forward.11} parent=0 // pred_check
    %p16 = pneg %p15
  $region15: #{vit_classifier_forward.11} parent=0 // pred_check_branch
    %18 = sbr.rel (%p16) target = $region17
  $region16: #{vit_classifier_forward.11} parent=0 // pred_region
    %19 = vst [vmem:[#allocation2] sm:$0xff] 0.0
    %20 = vst [vmem:[#allocation2 + $0x8] sm:$0xff] 0.0
    %21 = vst [vmem:[#allocation2 + $0x10] sm:$0xff] 0.0
    %22 = vst [vmem:[#allocation2 + $0x18] sm:$0xff] 0.0
  $region17: #{vit_classifier_forward.11} parent=0 // pred_fallthru
    _
  %v23 = vld [vmem:[%s0] sm:$0xff]
  %v24 = vld [vmem:[%s0 + $0x8] sm:$0xff]
  %v25 = vld [vmem:[%s0 + $0x10] sm:$0xff]
  %v26 = vld [vmem:[%s0 + $0x18] sm:$0xff]
  %v27 = vpack.c.bf16 %v24, %v23
  %v28 = vpack.c.bf16 %v26, %v25
  %v29 = vld [vmem:[#allocation2] sm:$0xff]
  %v30 = vld [vmem:[#allocation2 + $0x8] sm:$0xff]
  %v31 = vld [vmem:[#allocation2 + $0x10] sm:$0xff]
  %v32 = vld [vmem:[#allocation2 + $0x18] sm:$0xff]
  %v33 = vld [vmem:[%s1] sm:$0xf]
  %v34 = vld [vmem:[%s1 + $0x4] sm:$0xf]
  %v35 = vld [vmem:[%s1 + $0x8] sm:$0xf]
  %v36 = vld [vmem:[%s1 + $0xc] sm:$0xf]
  %v37 = vld [vmem:[%s1 + $0x10] sm:$0xf]
  %v38 = vld [vmem:[%s1 + $0x14] sm:$0xf]
  %v39 = vld [vmem:[%s1 + $0x18] sm:$0xf]
  %v40 = vld [vmem:[%s1 + $0x1c] sm:$0xf]
  %v41 = vld [vmem:[%s1 + $0x20] sm:$0xf]
  %v42 = vld [vmem:[%s1 + $0x24] sm:$0xf]
  %v43 = vld [vmem:[%s1 + $0x28] sm:$0xf]
  %v44 = vld [vmem:[%s1 + $0x2c] sm:$0xf]
  %v45 = vld [vmem:[%s1 + $0x30] sm:$0xf]
  %v46 = vld [vmem:[%s1 + $0x34] sm:$0xf]
  %v47 = vld [vmem:[%s1 + $0x38] sm:$0xf]
  %v48 = vld [vmem:[%s1 + $0x3c] sm:$0xf]
  %v65 = vunpack.c.l.b16 %v33
  %v66 = vunpack.c.l.b16 %v34
  %v67 = vunpack.c.l.b16 %v35
  %v68 = vunpack.c.l.b16 %v36
  %v69 = vunpack.c.l.b16 %v37
  %v70 = vunpack.c.l.b16 %v38
  %v71 = vunpack.c.l.b16 %v39
  %v72 = vunpack.c.l.b16 %v40
  %v73 = vunpack.c.l.b16 %v41
  %v74 = vunpack.c.l.b16 %v42
  %v75 = vunpack.c.l.b16 %v43
  %v76 = vunpack.c.l.b16 %v44
  %v77 = vunpack.c.l.b16 %v45
  %v78 = vunpack.c.l.b16 %v46
  %v79 = vunpack.c.l.b16 %v47
  %v80 = vunpack.c.l.b16 %v48
  %v81 = vpack.c.b16 %v66, %v65
  %v82 = vpack.c.b16 %v68, %v67
  %v83 = vpack.c.b16 %v70, %v69
  %v84 = vpack.c.b16 %v72, %v71
  %v85 = vpack.c.b16 %v74, %v73
  %v86 = vpack.c.b16 %v76, %v75
  %v87 = vpack.c.b16 %v78, %v77
  %v88 = vpack.c.b16 %v80, %v79
  %97 = vmatprep.subr.bf16.mxu0 0
  %98 = vmatpush1.bf16.msra.mxu0 %v88
  %99 = vmatprep.subr.bf16.mxu0 0
  %100 = vmatpush1.bf16.msra.mxu0 %v87
  %101 = vmatprep.subr.bf16.mxu0 0
  %102 = vmatpush1.bf16.msra.mxu0 %v86
  %103 = vmatprep.subr.bf16.mxu0 0
  %104 = vmatpush1.bf16.msra.mxu0 %v85
  %105 = vmatprep.subr.bf16.mxu0 0
  %106 = vmatpush1.bf16.msra.mxu0 %v84
  %107 = vmatprep.subr.bf16.mxu0 0
  %108 = vmatpush1.bf16.msra.mxu0 %v83
  %109 = vmatprep.subr.bf16.mxu0 0
  %110 = vmatpush1.bf16.msra.mxu0 %v82
  %111 = vmatprep.subr.bf16.mxu0 0
  %112 = vmatpush1.bf16.msra.mxu0 %v81
  %113 = vmatprep.subr.bf16.mxu0 0
  %114 = vmatpush2.bf16.msra.mxu0 0
  %115 = vmatprep.subr.bf16.mxu0 0
  %116 = vmatpush2.bf16.msra.mxu0 0
  %117 = vmatprep.subr.bf16.mxu0 0
  %118 = vmatpush2.bf16.msra.mxu0 0
  %119 = vmatprep.subr.bf16.mxu0 0
  %120 = vmatpush2.bf16.msra.mxu0 0
  %121 = vmatprep.subr.bf16.mxu0 0
  %122 = vmatpush2.bf16.msra.mxu0 0
  %123 = vmatprep.subr.bf16.mxu0 0
  %124 = vmatpush2.bf16.msra.mxu0 0
  %125 = vmatprep.subr.bf16.mxu0 0
  %126 = vmatpush2.bf16.msra.mxu0 0
  %127 = vmatprep.subr.bf16.mxu0 0
  %128 = vmatpush2.bf16.msra.mxu0 0
  %129 = vmatprep.mubr.bf16.mxu0 0
  %130 = vmatmul.mubr.bf16.gmra.mxu0 %v27
  %v131 = vpop.f32.mrf.mxu0
  %v132 = vadd.f32 0.0, %v131
  %v133 = vpop.f32.mrf.mxu0
  %v134 = vpop.f32.mrf.mxu0
  %v135 = vadd.f32 0.0, %v134
  %v136 = vpop.f32.mrf.mxu0
  %137 = vmatprep.mubr.bf16.mxu0 0
  %138 = vmatmul.mubr.bf16.gmra.mxu0 %v28
  %v139 = vpop.f32.mrf.mxu0
  %v140 = vadd.f32 0.0, %v139
  %v141 = vpop.f32.mrf.mxu0
  %v142 = vpop.f32.mrf.mxu0
  %v143 = vadd.f32 0.0, %v142
  %v144 = vpop.f32.mrf.mxu0
  %145 = vdwg.mxu0
  %v146 = vadd.f32 %v29, %v132
  %v147 = vadd.f32 %v30, %v135
  %v148 = vadd.f32 %v31, %v140
  %v149 = vadd.f32 %v32, %v143
  %150 = vst [vmem:[#allocation2] sm:$0xff] %v146
  %151 = vst [vmem:[#allocation2 + $0x8] sm:$0xff] %v147
  %152 = vst [vmem:[#allocation2 + $0x10] sm:$0xff] %v148
  %153 = vst [vmem:[#allocation2 + $0x18] sm:$0xff] %v149
  // Predicated region
  $region18: #{vit_classifier_forward.11} parent=0 // pred_check
    %p154 = pneg %p15
  $region19: #{vit_classifier_forward.11} parent=0 // pred_check_branch
    %156 = sbr.rel (%p154) target = $region21
  $region20: #{vit_classifier_forward.11} parent=0 // pred_region
    %v157 = vld [vmem:[#allocation2] sm:$0xff]
    %v158 = vld [vmem:[#allocation2 + $0x8] sm:$0xff]
    %v159 = vld [vmem:[#allocation2 + $0x10] sm:$0xff]
    %v160 = vld [vmem:[#allocation2 + $0x18] sm:$0xff]
    %v161 = vld [vmem:[%s2] sm:$0x1]
    %v163 = vlaneseq
    %v164 = vshrl.u32 %v163, 7
    %v165 = vsub.s32 0, %v164
    %v166 = vrot.slane %v161, %v165
    %v168 = vadd.f32 %v157, %v166
    %v169 = vadd.f32 %v158, %v166
    %v170 = vadd.f32 %v159, %v166
    %v171 = vadd.f32 %v160, %v166
    %172 = vst [vmem:[%s3] sm:$0xff] %v168
    %173 = vst [vmem:[%s3 + $0x8] sm:$0xff] %v169
    %174 = vst [vmem:[%s3 + $0x10] sm:$0xff] %v170
    %175 = vst [vmem:[%s3 + $0x18] sm:$0xff] %v171
  $region21: #{vit_classifier_forward.11} parent=0 // pred_fallthru
    _
  // Predicated region
  $region22: #{vit_classifier_forward.11} parent=0 // pred_check
    _
  $region23: #{vit_classifier_forward.11} parent=0 // pred_check_branch
    %177 = sbr.rel (0) target = $region25
  $region24: #{vit_classifier_forward.11} parent=0 // pred_region
    _
  $region25: #{vit_classifier_forward.11} parent=0 // pred_fallthru
    _
  // Predicated region
  $region26: #{vit_classifier_forward.11} parent=0 // pred_check
    _
  $region27: #{vit_classifier_forward.11} parent=0 // pred_check_branch
    %179 = sbr.rel (0) target = $region29
  $region28: #{vit_classifier_forward.11} parent=0 // pred_region
    _
  $region29: #{vit_classifier_forward.11} parent=0 // pred_fallthru
    _

// kernel: vit_classifier_forward.12
$region0: #{vit_classifier_forward.12}
  #allocation0 [shape = 'u32[]', space=smem, size = 0x4, offset = 0x4, fixed_abs, tag = 'smem constant byte address 0x4 - core index']
  #allocation1 [shape = 'u32[144,128]{1,0:T(1,128)}', space=vmem, size = 0x12000, scoped, tag = 'internal scratch']
  #allocation2 [shape = 'f32[34,384]{1,0:T(8,128)}', space=vmem, size = 0xf000, scoped, tag = 'scratch operand']
  %s0 = inlined_call_operand.vmem [shape: f32[34,128], index: 0, kind: input, shape index: {}]
  %s1 = inlined_call_operand.vmem [shape: f32[1,128], index: 1, kind: input, shape index: {}]
  %s2 = inlined_call_operand.vmem [shape: f32[1,128], index: 2, kind: input, shape index: {}]
  %s3 = inlined_call_operand.vmem [shape: bf16[128,384], index: 3, kind: input, shape index: {}]
  %s4 = inlined_call_operand.vmem [shape: f32[1,384], index: 4, kind: input, shape index: {}]
  %s5 = inlined_call_operand.vmem [shape: bf16[34,384], index: 5, kind: output, shape index: {}]
  %s6 = sld [smem:[#allocation0]]
  $region38: #{vit_classifier_forward.12} parent=0
    _
  %s8 = ssub.s32 1, %s6
  %s9 = scalar_select 0, %s8, %s6
  // Predicated region
  $region2: #{vit_classifier_forward.12} parent=0 // pred_check
    _
  $region3: #{vit_classifier_forward.12} parent=0 // pred_check_branch
    %11 = sbr.rel (0) target = $region5
  $region4: #{vit_classifier_forward.12} parent=0 // pred_region
    _
  $region5: #{vit_classifier_forward.12} parent=0 // pred_fallthru
    _
  // Predicated region
  $region6: #{vit_classifier_forward.12} parent=0 // pred_check
    _
  $region7: #{vit_classifier_forward.12} parent=0 // pred_check_branch
    %13 = sbr.rel (0) target = $region9
  $region8: #{vit_classifier_forward.12} parent=0 // pred_region
    _
  $region9: #{vit_classifier_forward.12} parent=0 // pred_fallthru
    _
  // Predicated region
  $region10: #{vit_classifier_forward.12} parent=0 // pred_check
    _
  $region11: #{vit_classifier_forward.12} parent=0 // pred_check_branch
    %15 = sbr.rel (0) target = $region13
  $region12: #{vit_classifier_forward.12} parent=0 // pred_region
    _
  $region13: #{vit_classifier_forward.12} parent=0 // pred_fallthru
    _
  // Predicated region
  $region14: #{vit_classifier_forward.12} parent=0 // pred_check
    _
  $region15: #{vit_classifier_forward.12} parent=0 // pred_check_branch
    %17 = sbr.rel (0) target = $region17
  $region16: #{vit_classifier_forward.12} parent=0 // pred_region
    _
  $region17: #{vit_classifier_forward.12} parent=0 // pred_fallthru
    _
  // Predicated region
  $region18: #{vit_classifier_forward.12} parent=0 // pred_check
    _
  $region19: #{vit_classifier_forward.12} parent=0 // pred_check_branch
    %19 = sbr.rel (0) target = $region21
  $region20: #{vit_classifier_forward.12} parent=0 // pred_region
    _
  $region21: #{vit_classifier_forward.12} parent=0 // pred_fallthru
    _
  %p21 = scmp.eq.s32.totalorder 0, 0
  // Predicated region
  $region22: #{vit_classifier_forward.12} parent=0 // pred_check
    %p22 = pneg %p21
  $region23: #{vit_classifier_forward.12} parent=0 // pred_check_branch
    %24 = sbr.rel (%p22) target = $region25
  $region24: #{vit_classifier_forward.12} parent=0 // pred_region
    %25 = vst [vmem:[#allocation2] sm:$0xff] 0.0
    %26 = vst [vmem:[#allocation2 + $0x8] sm:$0xff] 0.0
    %27 = vst [vmem:[#allocation2 + $0x10] sm:$0xff] 0.0
    %28 = vst [vmem:[#allocation2 + $0x18] sm:$0xff] 0.0
    %29 = vst [vmem:[#allocation2 + $0x20] sm:$0xff] 0.0
    %30 = vst [vmem:[#allocation2 + $0x28] sm:$0xff] 0.0
    %31 = vst [vmem:[#allocation2 + $0x30] sm:$0xff] 0.0
    %32 = vst [vmem:[#allocation2 + $0x38] sm:$0xff] 0.0
    %33 = vst [vmem:[#allocation2 + $0x40] sm:$0xff] 0.0
    %34 = vst [vmem:[#allocation2 + $0x48] sm:$0xff] 0.0
    %35 = vst [vmem:[#allocation2 + $0x50] sm:$0xff] 0.0
    %36 = vst [vmem:[#allocation2 + $0x58] sm:$0xff] 0.0
    %37 = vst [vmem:[#allocation2 + $0x60] sm:$0x3] 0.0
    %38 = vst [vmem:[#allocation2 + $0x68] sm:$0x3] 0.0
    %39 = vst [vmem:[#allocation2 + $0x70] sm:$0x3] 0.0
  $region25: #{vit_classifier_forward.12} parent=0 // pred_fallthru
    _
  %v40 = vld [vmem:[%s0] sm:$0xff]
  %v41 = vld [vmem:[%s0 + $0x8] sm:$0xff]
  %v42 = vld [vmem:[%s0 + $0x10] sm:$0xff]
  %v43 = vld [vmem:[%s0 + $0x18] sm:$0xff]
  %v44 = vld [vmem:[%s0 + $0x20] sm:$0x3]
  %45 = vadd.xlane.f32.xlu0 %v40
  %v46 = vpop.xlane.xlu0 %45
  %47 = vadd.xlane.f32.xlu0 %v41
  %v48 = vpop.xlane.xlu0 %47
  %49 = vadd.xlane.f32.xlu0 %v42
  %v50 = vpop.xlane.xlu0 %49
  %51 = vadd.xlane.f32.xlu0 %v43
  %v52 = vpop.xlane.xlu0 %51
  %vm53 = vcmask 1041408
  %v54 = vsel %vm53, %v44, 0.0
  %55 = vadd.xlane.f32.xlu0 %v54
  %v56 = vpop.xlane.xlu0 %55
  %v57 = vrcp.pop 128.0
  %v58 = vmul.f32 %v46, %v57
  %v59 = vmul.f32 %v48, %v57
  %v60 = vmul.f32 %v50, %v57
  %v61 = vmul.f32 %v52, %v57
  %v62 = vmul.f32 %v56, %v57
  %v63 = vsub.f32 %v40, %v58
  %v64 = vsub.f32 %v41, %v59
  %v65 = vsub.f32 %v42, %v60
  %v66 = vsub.f32 %v43, %v61
  %v67 = vsub.f32 %v44, %v62
  %v68 = vmul.f32 %v63, %v63
  %v69 = vmul.f32 %v64, %v64
  %v70 = vmul.f32 %v65, %v65
  %v71 = vmul.f32 %v66, %v66
  %v72 = vmul.f32 %v67, %v67
  %73 = vadd.xlane.f32.xlu0 %v68
  %v74 = vpop.xlane.xlu0 %73
  %75 = vadd.xlane.f32.xlu0 %v69
  %v76 = vpop.xlane.xlu0 %75
  %77 = vadd.xlane.f32.xlu0 %v70
  %v78 = vpop.xlane.xlu0 %77
  %79 = vadd.xlane.f32.xlu0 %v71
  %v80 = vpop.xlane.xlu0 %79
  %v81 = vsel %vm53, %v72, 0.0
  %82 = vadd.xlane.f32.xlu0 %v81
  %v83 = vpop.xlane.xlu0 %82
  %v84 = vmul.f32 %v74, %v57
  %v85 = vmul.f32 %v76, %v57
  %v86 = vmul.f32 %v78, %v57
  %v87 = vmul.f32 %v80, %v57
  %v88 = vmul.f32 %v83, %v57
  %v89 = vadd.f32 %v84, 1e-05
  %v90 = vadd.f32 %v85, 1e-05
  %v91 = vadd.f32 %v86, 1e-05
  %v92 = vadd.f32 %v87, 1e-05
  %v93 = vadd.f32 %v88, 1e-05
  %v94 = vrsqrt.pop %v89
  %v95 = vrsqrt.pop %v90
  %v96 = vrsqrt.pop %v91
  %v97 = vrsqrt.pop %v92
  %v98 = vrsqrt.pop %v93
  %v99 = vmul.f32 %v63, %v94
  %v100 = vmul.f32 %v64, %v95
  %v101 = vmul.f32 %v65, %v96
  %v102 = vmul.f32 %v66, %v97
  %v103 = vmul.f32 %v67, %v98
  %v104 = vld [vmem:[%s1] sm:$0x1]
  %v106 = vlaneseq
  %v107 = vshrl.u32 %v106, 7
  %v108 = vsub.s32 0, %v107
  %v109 = vrot.slane %v104, %v108
  %v111 = vmul.f32 %v99, %v109
  %v112 = vmul.f32 %v100, %v109
  %v113 = vmul.f32 %v101, %v109
  %v114 = vmul.f32 %v102, %v109
  %v115 = vmul.f32 %v103, %v109
  %v116 = vld [vmem:[%s2] sm:$0x1]
  %v118 = vlaneseq
  %v119 = vshrl.u32 %v118, 7
  %v120 = vsub.s32 0, %v119
  %v121 = vrot.slane %v116, %v120
  %v123 = vadd.f32 %v111, %v121
  %v124 = vadd.f32 %v112, %v121
  %v125 = vadd.f32 %v113, %v121
  %v126 = vadd.f32 %v114, %v121
  %v127 = vadd.f32 %v115, %v121
  %v128 = vpack.c.bf16 %v124, %v123
  %v129 = vpack.c.bf16 %v126, %v125
  %v130 = vpack.c.bf16 %v127, %v127
  %v131 = vld [vmem:[#allocation2] sm:$0xff]
  %v132 = vld [vmem:[#allocation2 + $0x8] sm:$0xff]
  %v133 = vld [vmem:[#allocation2 + $0x10] sm:$0xff]
  %v134 = vld [vmem:[#allocation2 + $0x18] sm:$0xff]
  %v135 = vld [vmem:[#allocation2 + $0x20] sm:$0xff]
  %v136 = vld [vmem:[#allocation2 + $0x28] sm:$0xff]
  %v137 = vld [vmem:[#allocation2 + $0x30] sm:$0xff]
  %v138 = vld [vmem:[#allocation2 + $0x38] sm:$0xff]
  %v139 = vld [vmem:[#allocation2 + $0x40] sm:$0xff]
  %v140 = vld [vmem:[#allocation2 + $0x48] sm:$0xff]
  %v141 = vld [vmem:[#allocation2 + $0x50] sm:$0xff]
  %v142 = vld [vmem:[#allocation2 + $0x58] sm:$0xff]
  %v143 = vld [vmem:[#allocation2 + $0x60] sm:$0x3]
  %v144 = vld [vmem:[#allocation2 + $0x68] sm:$0x3]
  %v145 = vld [vmem:[#allocation2 + $0x70] sm:$0x3]
  %v146 = vld [vmem:[%s3] sm:$0xff]
  %v147 = vld [vmem:[%s3 + $0x8] sm:$0xf]
  %v148 = vld [vmem:[%s3 + $0xc] sm:$0xff]
  %v149 = vld [vmem:[%s3 + $0x14] sm:$0xf]
  %v150 = vld [vmem:[%s3 + $0x18] sm:$0xff]
  %v151 = vld [vmem:[%s3 + $0x20] sm:$0xf]
  %v152 = vld [vmem:[%s3 + $0x24] sm:$0xff]
  %v153 = vld [vmem:[%s3 + $0x2c] sm:$0xf]
  %v154 = vld [vmem:[%s3 + $0x30] sm:$0xff]
  %v155 = vld [vmem:[%s3 + $0x38] sm:$0xf]
  %v156 = vld [vmem:[%s3 + $0x3c] sm:$0xff]
  %v157 = vld [vmem:[%s3 + $0x44] sm:$0xf]
  %v158 = vld [vmem:[%s3 + $0x48] sm:$0xff]
  %v159 = vld [vmem:[%s3 + $0x50] sm:$0xf]
  %v160 = vld [vmem:[%s3 + $0x54] sm:$0xff]
  %v161 = vld [vmem:[%s3 + $0x5c] sm:$0xf]
  %v162 = vld [vmem:[%s3 + $0x60] sm:$0xff]
  %v163 = vld [vmem:[%s3 + $0x68] sm:$0xf]
  %v164 = vld [vmem:[%s3 + $0x6c] sm:$0xff]
  %v165 = vld [vmem:[%s3 + $0x74] sm:$0xf]
  %v166 = vld [vmem:[%s3 + $0x78] sm:$0xff]
  %v167 = vld [vmem:[%s3 + $0x80] sm:$0xf]
  %v168 = vld [vmem:[%s3 + $0x84] sm:$0xff]
  %v169 = vld [vmem:[%s3 + $0x8c] sm:$0xf]
  %v170 = vld [vmem:[%s3 + $0x90] sm:$0xff]
  %v171 = vld [vmem:[%s3 + $0x98] sm:$0xf]
  %v172 = vld [vmem:[%s3 + $0x9c] sm:$0xff]
  %v173 = vld [vmem:[%s3 + $0xa4] sm:$0xf]
  %v174 = vld [vmem:[%s3 + $0xa8] sm:$0xff]
  %v175 = vld [vmem:[%s3 + $0xb0] sm:$0xf]
  %v176 = vld [vmem:[%s3 + $0xb4] sm:$0xff]
  %v177 = vld [vmem:[%s3 + $0xbc] sm:$0xf]
  %v210 = vunpack.c.l.b16 %v146
  %v211 = vunpack.c.h.b16 %v146
  %v212 = vunpack.c.l.b16 %v147
  %v213 = vunpack.c.l.b16 %v148
  %v214 = vunpack.c.h.b16 %v148
  %v215 = vunpack.c.l.b16 %v149
  %v216 = vunpack.c.l.b16 %v150
  %v217 = vunpack.c.h.b16 %v150
  %v218 = vunpack.c.l.b16 %v151
  %v219 = vunpack.c.l.b16 %v152
  %v220 = vunpack.c.h.b16 %v152
  %v221 = vunpack.c.l.b16 %v153
  %v222 = vunpack.c.l.b16 %v154
  %v223 = vunpack.c.h.b16 %v154
  %v224 = vunpack.c.l.b16 %v155
  %v225 = vunpack.c.l.b16 %v156
  %v226 = vunpack.c.h.b16 %v156
  %v227 = vunpack.c.l.b16 %v157
  %v228 = vunpack.c.l.b16 %v158
  %v229 = vunpack.c.h.b16 %v158
  %v230 = vunpack.c.l.b16 %v159
  %v231 = vunpack.c.l.b16 %v160
  %v232 = vunpack.c.h.b16 %v160
  %v233 = vunpack.c.l.b16 %v161
  %v234 = vunpack.c.l.b16 %v162
  %v235 = vunpack.c.h.b16 %v162
  %v236 = vunpack.c.l.b16 %v163
  %v237 = vunpack.c.l.b16 %v164
  %v238 = vunpack.c.h.b16 %v164
  %v239 = vunpack.c.l.b16 %v165
  %v240 = vunpack.c.l.b16 %v166
  %v241 = vunpack.c.h.b16 %v166
  %v242 = vunpack.c.l.b16 %v167
  %v243 = vunpack.c.l.b16 %v168
  %v244 = vunpack.c.h.b16 %v168
  %v245 = vunpack.c.l.b16 %v169
  %v246 = vunpack.c.l.b16 %v170
  %v247 = vunpack.c.h.b16 %v170
  %v248 = vunpack.c.l.b16 %v171
  %v249 = vunpack.c.l.b16 %v172
  %v250 = vunpack.c.h.b16 %v172
  %v251 = vunpack.c.l.b16 %v173
  %v252 = vunpack.c.l.b16 %v174
  %v253 = vunpack.c.h.b16 %v174
  %v254 = vunpack.c.l.b16 %v175
  %v255 = vunpack.c.l.b16 %v176
  %v256 = vunpack.c.h.b16 %v176
  %v257 = vunpack.c.l.b16 %v177
  %v258 = vpack.c.b16 %v213, %v210
  %v259 = vpack.c.b16 %v214, %v211
  %v260 = vpack.c.b16 %v215, %v212
  %v261 = vpack.c.b16 %v219, %v216
  %v262 = vpack.c.b16 %v220, %v217
  %v263 = vpack.c.b16 %v221, %v218
  %v264 = vpack.c.b16 %v225, %v222
  %v265 = vpack.c.b16 %v226, %v223
  %v266 = vpack.c.b16 %v227, %v224
  %v267 = vpack.c.b16 %v231, %v228
  %v268 = vpack.c.b16 %v232, %v229
  %v269 = vpack.c.b16 %v233, %v230
  %v270 = vpack.c.b16 %v237, %v234
  %v271 = vpack.c.b16 %v238, %v235
  %v272 = vpack.c.b16 %v239, %v236
  %v273 = vpack.c.b16 %v243, %v240
  %v274 = vpack.c.b16 %v244, %v241
  %v275 = vpack.c.b16 %v245, %v242
  %v276 = vpack.c.b16 %v249, %v246
  %v277 = vpack.c.b16 %v250, %v247
  %v278 = vpack.c.b16 %v251, %v248
  %v279 = vpack.c.b16 %v255, %v252
  %v280 = vpack.c.b16 %v256, %v253
  %v281 = vpack.c.b16 %v257, %v254
  %306 = vmatprep.subr.bf16.mxu0 %v280
  %307 = vmatpush1.bf16.msra.mxu0 %v279
  %308 = vmatprep.subr.bf16.mxu0 %v277
  %309 = vmatpush1.bf16.msra.mxu0 %v276
  %310 = vmatprep.subr.bf16.mxu0 %v274
  %311 = vmatpush1.bf16.msra.mxu0 %v273
  %312 = vmatprep.subr.bf16.mxu0 %v271
  %313 = vmatpush1.bf16.msra.mxu0 %v270
  %314 = vmatprep.subr.bf16.mxu0 %v268
  %315 = vmatpush1.bf16.msra.mxu0 %v267
  %316 = vmatprep.subr.bf16.mxu0 %v265
  %317 = vmatpush1.bf16.msra.mxu0 %v264
  %318 = vmatprep.subr.bf16.mxu0 %v262
  %319 = vmatpush1.bf16.msra.mxu0 %v261
  %320 = vmatprep.subr.bf16.mxu0 %v259
  %321 = vmatpush1.bf16.msra.mxu0 %v258
  %322 = vmatprep.subr.bf16.mxu0 0
  %323 = vmatpush2.bf16.msra.mxu0 0
  %324 = vmatprep.subr.bf16.mxu0 0
  %325 = vmatpush2.bf16.msra.mxu0 0
  %326 = vmatprep.subr.bf16.mxu0 0
  %327 = vmatpush2.bf16.msra.mxu0 0
  %328 = vmatprep.subr.bf16.mxu0 0
  %329 = vmatpush2.bf16.msra.mxu0 0
  %330 = vmatprep.subr.bf16.mxu0 0
  %331 = vmatpush2.bf16.msra.mxu0 0
  %332 = vmatprep.subr.bf16.mxu0 0
  %333 = vmatpush2.bf16.msra.mxu0 0
  %334 = vmatprep.subr.bf16.mxu0 0
  %335 = vmatpush2.bf16.msra.mxu0 0
  %336 = vmatprep.subr.bf16.mxu0 0
  %337 = vmatpush2.bf16.msra.mxu0 0
  %338 = vmatprep.mubr.bf16.mxu0 0
  %339 = vmatmul.mubr.bf16.gmra.mxu0 %v128
  %v340 = vpop.f32.mrf.mxu0
  %v341 = vadd.f32 0.0, %v340
  %v342 = vpop.f32.mrf.mxu0
  %v343 = vadd.f32 0.0, %v342
  %v344 = vpop.f32.mrf.mxu0
  %v345 = vadd.f32 0.0, %v344
  %v346 = vpop.f32.mrf.mxu0
  %v347 = vadd.f32 0.0, %v346
  %348 = vmatprep.mubr.bf16.mxu0 0
  %349 = vmatmul.mubr.bf16.gmra.mxu0 %v129
  %v350 = vpop.f32.mrf.mxu0
  %v351 = vadd.f32 0.0, %v350
  %v352 = vpop.f32.mrf.mxu0
  %v353 = vadd.f32 0.0, %v352
  %v354 = vpop.f32.mrf.mxu0
  %v355 = vadd.f32 0.0, %v354
  %v356 = vpop.f32.mrf.mxu0
  %v357 = vadd.f32 0.0, %v356
  %358 = vmatprep.mubr.bf16.mxu0 0
  %359 = vmatmul.mubr.bf16.gmra.mxu0 %v130
  %v360 = vpop.f32.mrf.mxu0
  %v361 = vadd.f32 0.0, %v360
  %v362 = vpop.f32.mrf.mxu0
  %v363 = vadd.f32 0.0, %v362
  %v364 = vpop.f32.mrf.mxu0
  %v365 = vpop.f32.mrf.mxu0
  %366 = vdwg.mxu0
  %367 = vmatprep.subr.bf16.mxu0 0
  %368 = vmatpush1.bf16.msra.mxu0 %v281
  %369 = vmatprep.subr.bf16.mxu0 0
  %370 = vmatpush1.bf16.msra.mxu0 %v278
  %371 = vmatprep.subr.bf16.mxu0 0
  %372 = vmatpush1.bf16.msra.mxu0 %v275
  %373 = vmatprep.subr.bf16.mxu0 0
  %374 = vmatpush1.bf16.msra.mxu0 %v272
  %375 = vmatprep.subr.bf16.mxu0 0
  %376 = vmatpush1.bf16.msra.mxu0 %v269
  %377 = vmatprep.subr.bf16.mxu0 0
  %378 = vmatpush1.bf16.msra.mxu0 %v266
  %379 = vmatprep.subr.bf16.mxu0 0
  %380 = vmatpush1.bf16.msra.mxu0 %v263
  %381 = vmatprep.subr.bf16.mxu0 0
  %382 = vmatpush1.bf16.msra.mxu0 %v260
  %383 = vmatprep.subr.bf16.mxu0 0
  %384 = vmatpush2.bf16.msra.mxu0 0
  %385 = vmatprep.subr.bf16.mxu0 0
  %386 = vmatpush2.bf16.msra.mxu0 0
  %387 = vmatprep.subr.bf16.mxu0 0
  %388 = vmatpush2.bf16.msra.mxu0 0
  %389 = vmatprep.subr.bf16.mxu0 0
  %390 = vmatpush2.bf16.msra.mxu0 0
  %391 = vmatprep.subr.bf16.mxu0 0
  %392 = vmatpush2.bf16.msra.mxu0 0
  %393 = vmatprep.subr.bf16.mxu0 0
  %394 = vmatpush2.bf16.msra.mxu0 0
  %395 = vmatprep.subr.bf16.mxu0 0
  %396 = vmatpush2.bf16.msra.mxu0 0
  %397 = vmatprep.subr.bf16.mxu0 0
  %398 = vmatpush2.bf16.msra.mxu0 0
  %399 = vmatprep.mubr.bf16.mxu0 0
  %400 = vmatmul.mubr.bf16.gmra.mxu0 %v128
  %v401 = vpop.f32.mrf.mxu0
  %v402 = vadd.f32 0.0, %v401
  %v403 = vpop.f32.mrf.mxu0
  %v404 = vpop.f32.mrf.mxu0
  %v405 = vadd.f32 0.0, %v404
  %v406 = vpop.f32.mrf.mxu0
  %407 = vmatprep.mubr.bf16.mxu0 0
  %408 = vmatmul.mubr.bf16.gmra.mxu0 %v129
  %v409 = vpop.f32.mrf.mxu0
  %v410 = vadd.f32 0.0, %v409
  %v411 = vpop.f32.mrf.mxu0
  %v412 = vpop.f32.mrf.mxu0
  %v413 = vadd.f32 0.0, %v412
  %v414 = vpop.f32.mrf.mxu0
  %415 = vmatprep.mubr.bf16.mxu0 0
  %416 = vmatmul.mubr.bf16.gmra.mxu0 %v130
  %v417 = vpop.f32.mrf.mxu0
  %v418 = vadd.f32 0.0, %v417
  %v419 = vpop.f32.mrf.mxu0
  %v420 = vpop.f32.mrf.mxu0
  %v421 = vpop.f32.mrf.mxu0
  %422 = vdwg.mxu0
  %v423 = vadd.f32 %v131, %v341
  %v424 = vadd.f32 %v132, %v343
  %v425 = vadd.f32 %v133, %v402
  %v426 = vadd.f32 %v134, %v345
  %v427 = vadd.f32 %v135, %v347
  %v428 = vadd.f32 %v136, %v405
  %v429 = vadd.f32 %v137, %v351
  %v430 = vadd.f32 %v138, %v353
  %v431 = vadd.f32 %v139, %v410
  %v432 = vadd.f32 %v140, %v355
  %v433 = vadd.f32 %v141, %v357
  %v434 = vadd.f32 %v142, %v413
  %v435 = vadd.f32 %v143, %v361
  %v436 = vadd.f32 %v144, %v363
  %v437 = vadd.f32 %v145, %v418
  %438 = vst [vmem:[#allocation2] sm:$0xff] %v423
  %439 = vst [vmem:[#allocation2 + $0x8] sm:$0xff] %v424
  %440 = vst [vmem:[#allocation2 + $0x10] sm:$0xff] %v425
  %441 = vst [vmem:[#allocation2 + $0x18] sm:$0xff] %v426
  %442 = vst [vmem:[#allocation2 + $0x20] sm:$0xff] %v427
  %443 = vst [vmem:[#allocation2 + $0x28] sm:$0xff] %v428
  %444 = vst [vmem:[#allocation2 + $0x30] sm:$0xff] %v429
  %445 = vst [vmem:[#allocation2 + $0x38] sm:$0xff] %v430
  %446 = vst [vmem:[#allocation2 + $0x40] sm:$0xff] %v431
  %447 = vst [vmem:[#allocation2 + $0x48] sm:$0xff] %v432
  %448 = vst [vmem:[#allocation2 + $0x50] sm:$0xff] %v433
  %449 = vst [vmem:[#allocation2 + $0x58] sm:$0xff] %v434
  %450 = vst [vmem:[#allocation2 + $0x60] sm:$0x3] %v435
  %451 = vst [vmem:[#allocation2 + $0x68] sm:$0x3] %v436
  %452 = vst [vmem:[#allocation2 + $0x70] sm:$0x3] %v437
  // Predicated region
  $region26: #{vit_classifier_forward.12} parent=0 // pred_check
    %p453 = pneg %p21
  $region27: #{vit_classifier_forward.12} parent=0 // pred_check_branch
    %455 = sbr.rel (%p453) target = $region29
  $region28: #{vit_classifier_forward.12} parent=0 // pred_region
    %v456 = vld [vmem:[#allocation2] sm:$0xff]
    %v457 = vld [vmem:[#allocation2 + $0x8] sm:$0xff]
    %v458 = vld [vmem:[#allocation2 + $0x10] sm:$0xff]
    %v459 = vld [vmem:[#allocation2 + $0x18] sm:$0xff]
    %v460 = vld [vmem:[#allocation2 + $0x20] sm:$0xff]
    %v461 = vld [vmem:[#allocation2 + $0x28] sm:$0xff]
    %v462 = vld [vmem:[#allocation2 + $0x30] sm:$0xff]
    %v463 = vld [vmem:[#allocation2 + $0x38] sm:$0xff]
    %v464 = vld [vmem:[#allocation2 + $0x40] sm:$0xff]
    %v465 = vld [vmem:[#allocation2 + $0x48] sm:$0xff]
    %v466 = vld [vmem:[#allocation2 + $0x50] sm:$0xff]
    %v467 = vld [vmem:[#allocation2 + $0x58] sm:$0xff]
    %v468 = vld [vmem:[#allocation2 + $0x60] sm:$0x3]
    %v469 = vld [vmem:[#allocation2 + $0x68] sm:$0x3]
    %v470 = vld [vmem:[#allocation2 + $0x70] sm:$0x3]
    %v471 = vld [vmem:[%s4] sm:$0x7]
    %v473 = vlaneseq
    %v474 = vshrl.u32 %v473, 7
    %v475 = vsub.s32 0, %v474
    %v476 = vrot.slane %v471, %v475
    %v477 = vlaneseq
    %v478 = vshrl.u32 %v477, 7
    %v479 = vsub.s32 1, %v478
    %v480 = vrot.slane %v471, %v479
    %v481 = vlaneseq
    %v482 = vshrl.u32 %v481, 7
    %v483 = vsub.s32 2, %v482
    %v484 = vrot.slane %v471, %v483
    %v488 = vadd.f32 %v456, %v476
    %v489 = vadd.f32 %v457, %v480
    %v490 = vadd.f32 %v458, %v484
    %v491 = vadd.f32 %v459, %v476
    %v492 = vadd.f32 %v460, %v480
    %v493 = vadd.f32 %v461, %v484
    %v494 = vadd.f32 %v462, %v476
    %v495 = vadd.f32 %v463, %v480
    %v496 = vadd.f32 %v464, %v484
    %v497 = vadd.f32 %v465, %v476
    %v498 = vadd.f32 %v466, %v480
    %v499 = vadd.f32 %v467, %v484
    %v500 = vadd.f32 %v468, %v476
    %v501 = vadd.f32 %v469, %v480
    %v502 = vadd.f32 %v470, %v484
    %v503 = vpack.c.bf16 %v491, %v488
    %v504 = vpack.c.bf16 %v492, %v489
    %v505 = vpack.c.bf16 %v493, %v490
    %v506 = vpack.c.bf16 %v497, %v494
    %v507 = vpack.c.bf16 %v498, %v495
    %v508 = vpack.c.bf16 %v499, %v496
    %v509 = vpack.c.bf16 %v500, %v500
    %v510 = vpack.c.bf16 %v501, %v501
    %v511 = vpack.c.bf16 %v502, %v502
    %v521 = vunpack.c.l.b16 %v503
    %v522 = vunpack.c.l.b16 %v504
    %v523 = vunpack.c.l.b16 %v505
    %v524 = vunpack.c.h.b16 %v503
    %v525 = vunpack.c.h.b16 %v504
    %v526 = vunpack.c.h.b16 %v505
    %v527 = vunpack.c.l.b16 %v506
    %v528 = vunpack.c.l.b16 %v507
    %v529 = vunpack.c.l.b16 %v508
    %v530 = vunpack.c.h.b16 %v506
    %v531 = vunpack.c.h.b16 %v507
    %v532 = vunpack.c.h.b16 %v508
    %v533 = vunpack.c.l.b16 %v509
    %v534 = vunpack.c.l.b16 %v510
    %v535 = vunpack.c.l.b16 %v511
    %v536 = vpack.c.b16 %v522, %v521
    %v537 = vpack.c.b16 %v523, %v523
    %v538 = vpack.c.b16 %v525, %v524
    %v539 = vpack.c.b16 %v526, %v526
    %v540 = vpack.c.b16 %v528, %v527
    %v541 = vpack.c.b16 %v529, %v529
    %v542 = vpack.c.b16 %v531, %v530
    %v543 = vpack.c.b16 %v532, %v532
    %v544 = vpack.c.b16 %v534, %v533
    %v545 = vpack.c.b16 %v535, %v535
    %556 = vst [vmem:[%s5] sm:$0xff] %v536
    %557 = vst [vmem:[%s5 + $0x8] sm:$0xf] %v537
    %558 = vst [vmem:[%s5 + $0xc] sm:$0xff] %v538
    %559 = vst [vmem:[%s5 + $0x14] sm:$0xf] %v539
    %560 = vst [vmem:[%s5 + $0x18] sm:$0xff] %v540
    %561 = vst [vmem:[%s5 + $0x20] sm:$0xf] %v541
    %562 = vst [vmem:[%s5 + $0x24] sm:$0xff] %v542
    %563 = vst [vmem:[%s5 + $0x2c] sm:$0xf] %v543
    %564 = vst [vmem:[%s5 + $0x30] sm:$0x11] %v544
    %565 = vst [vmem:[%s5 + $0x38] sm:$0x1] %v545
  $region29: #{vit_classifier_forward.12} parent=0 // pred_fallthru
    _
  // Predicated region
  $region30: #{vit_classifier_forward.12} parent=0 // pred_check
    _
  $region31: #{vit_classifier_forward.12} parent=0 // pred_check_branch
    %567 = sbr.rel (0) target = $region33
  $region32: #{vit_classifier_forward.12} parent=0 // pred_region
    _
  $region33: #{vit_classifier_forward.12} parent=0 // pred_fallthru
    _
  // Predicated region
  $region34: #{vit_classifier_forward.12} parent=0 // pred_check
    _
  $region35: #{vit_classifier_forward.12} parent=0 // pred_check_branch
    %569 = sbr.rel (0) target = $region37
  $region36: #{vit_classifier_forward.12} parent=0 // pred_region
    _
  $region37: #{vit_classifier_forward.12} parent=0 // pred_fallthru
    _

// kernel: vit_classifier_forward.15
$region0: #{vit_classifier_forward.15}
  #allocation0 [shape = 'u32[]', space=smem, size = 0x4, offset = 0x4, fixed_abs, tag = 'smem constant byte address 0x4 - core index']
  #allocation1 [shape = 'u32[144,128]{1,0:T(1,128)}', space=vmem, size = 0x12000, scoped, tag = 'internal scratch']
  #allocation2 [shape = 'f32[34,256]{1,0:T(8,128)}', space=vmem, size = 0xa000, scoped, tag = 'scratch operand']
  %s0 = inlined_call_operand.vmem [shape: f32[34,128], index: 0, kind: input, shape index: {}]
  %s1 = inlined_call_operand.vmem [shape: f32[1,128], index: 1, kind: input, shape index: {}]
  %s2 = inlined_call_operand.vmem [shape: f32[1,128], index: 2, kind: input, shape index: {}]
  %s3 = inlined_call_operand.vmem [shape: bf16[128,256], index: 3, kind: input, shape index: {}]
  %s4 = inlined_call_operand.vmem [shape: f32[1,256], index: 4, kind: input, shape index: {}]
  %s5 = inlined_call_operand.vmem [shape: bf16[34,256], index: 5, kind: output, shape index: {}]
  %s6 = sld [smem:[#allocation0]]
  $region38: #{vit_classifier_forward.15} parent=0
    _
  %s8 = ssub.s32 1, %s6
  %s9 = scalar_select 0, %s8, %s6
  // Predicated region
  $region2: #{vit_classifier_forward.15} parent=0 // pred_check
    _
  $region3: #{vit_classifier_forward.15} parent=0 // pred_check_branch
    %11 = sbr.rel (0) target = $region5
  $region4: #{vit_classifier_forward.15} parent=0 // pred_region
    _
  $region5: #{vit_classifier_forward.15} parent=0 // pred_fallthru
    _
  // Predicated region
  $region6: #{vit_classifier_forward.15} parent=0 // pred_check
    _
  $region7: #{vit_classifier_forward.15} parent=0 // pred_check_branch
    %13 = sbr.rel (0) target = $region9
  $region8: #{vit_classifier_forward.15} parent=0 // pred_region
    _
  $region9: #{vit_classifier_forward.15} parent=0 // pred_fallthru
    _
  // Predicated region
  $region10: #{vit_classifier_forward.15} parent=0 // pred_check
    _
  $region11: #{vit_classifier_forward.15} parent=0 // pred_check_branch
    %15 = sbr.rel (0) target = $region13
  $region12: #{vit_classifier_forward.15} parent=0 // pred_region
    _
  $region13: #{vit_classifier_forward.15} parent=0 // pred_fallthru
    _
  // Predicated region
  $region14: #{vit_classifier_forward.15} parent=0 // pred_check
    _
  $region15: #{vit_classifier_forward.15} parent=0 // pred_check_branch
    %17 = sbr.rel (0) target = $region17
  $region16: #{vit_classifier_forward.15} parent=0 // pred_region
    _
  $region17: #{vit_classifier_forward.15} parent=0 // pred_fallthru
    _
  // Predicated region
  $region18: #{vit_classifier_forward.15} parent=0 // pred_check
    _
  $region19: #{vit_classifier_forward.15} parent=0 // pred_check_branch
    %19 = sbr.rel (0) target = $region21
  $region20: #{vit_classifier_forward.15} parent=0 // pred_region
    _
  $region21: #{vit_classifier_forward.15} parent=0 // pred_fallthru
    _
  %p21 = scmp.eq.s32.totalorder 0, 0
  // Predicated region
  $region22: #{vit_classifier_forward.15} parent=0 // pred_check
    %p22 = pneg %p21
  $region23: #{vit_classifier_forward.15} parent=0 // pred_check_branch
    %24 = sbr.rel (%p22) target = $region25
  $region24: #{vit_classifier_forward.15} parent=0 // pred_region
    %25 = vst [vmem:[#allocation2] sm:$0xff] 0.0
    %26 = vst [vmem:[#allocation2 + $0x8] sm:$0xff] 0.0
    %27 = vst [vmem:[#allocation2 + $0x10] sm:$0xff] 0.0
    %28 = vst [vmem:[#allocation2 + $0x18] sm:$0xff] 0.0
    %29 = vst [vmem:[#allocation2 + $0x20] sm:$0xff] 0.0
    %30 = vst [vmem:[#allocation2 + $0x28] sm:$0xff] 0.0
    %31 = vst [vmem:[#allocation2 + $0x30] sm:$0xff] 0.0
    %32 = vst [vmem:[#allocation2 + $0x38] sm:$0xff] 0.0
    %33 = vst [vmem:[#allocation2 + $0x40] sm:$0x3] 0.0
    %34 = vst [vmem:[#allocation2 + $0x48] sm:$0x3] 0.0
  $region25: #{vit_classifier_forward.15} parent=0 // pred_fallthru
    _
  %v35 = vld [vmem:[%s0] sm:$0xff]
  %v36 = vld [vmem:[%s0 + $0x8] sm:$0xff]
  %v37 = vld [vmem:[%s0 + $0x10] sm:$0xff]
  %v38 = vld [vmem:[%s0 + $0x18] sm:$0xff]
  %v39 = vld [vmem:[%s0 + $0x20] sm:$0x3]
  %40 = vadd.xlane.f32.xlu0 %v35
  %v41 = vpop.xlane.xlu0 %40
  %42 = vadd.xlane.f32.xlu0 %v36
  %v43 = vpop.xlane.xlu0 %42
  %44 = vadd.xlane.f32.xlu0 %v37
  %v45 = vpop.xlane.xlu0 %44
  %46 = vadd.xlane.f32.xlu0 %v38
  %v47 = vpop.xlane.xlu0 %46
  %vm48 = vcmask 1041408
  %v49 = vsel %vm48, %v39, 0.0
  %50 = vadd.xlane.f32.xlu0 %v49
  %v51 = vpop.xlane.xlu0 %50
  %v52 = vrcp.pop 128.0
  %v53 = vmul.f32 %v41, %v52
  %v54 = vmul.f32 %v43, %v52
  %v55 = vmul.f32 %v45, %v52
  %v56 = vmul.f32 %v47, %v52
  %v57 = vmul.f32 %v51, %v52
  %v58 = vsub.f32 %v35, %v53
  %v59 = vsub.f32 %v36, %v54
  %v60 = vsub.f32 %v37, %v55
  %v61 = vsub.f32 %v38, %v56
  %v62 = vsub.f32 %v39, %v57
  %v63 = vmul.f32 %v58, %v58
  %v64 = vmul.f32 %v59, %v59
  %v65 = vmul.f32 %v60, %v60
  %v66 = vmul.f32 %v61, %v61
  %v67 = vmul.f32 %v62, %v62
  %68 = vadd.xlane.f32.xlu0 %v63
  %v69 = vpop.xlane.xlu0 %68
  %70 = vadd.xlane.f32.xlu0 %v64
  %v71 = vpop.xlane.xlu0 %70
  %72 = vadd.xlane.f32.xlu0 %v65
  %v73 = vpop.xlane.xlu0 %72
  %74 = vadd.xlane.f32.xlu0 %v66
  %v75 = vpop.xlane.xlu0 %74
  %v76 = vsel %vm48, %v67, 0.0
  %77 = vadd.xlane.f32.xlu0 %v76
  %v78 = vpop.xlane.xlu0 %77
  %v79 = vmul.f32 %v69, %v52
  %v80 = vmul.f32 %v71, %v52
  %v81 = vmul.f32 %v73, %v52
  %v82 = vmul.f32 %v75, %v52
  %v83 = vmul.f32 %v78, %v52
  %v84 = vadd.f32 %v79, 1e-05
  %v85 = vadd.f32 %v80, 1e-05
  %v86 = vadd.f32 %v81, 1e-05
  %v87 = vadd.f32 %v82, 1e-05
  %v88 = vadd.f32 %v83, 1e-05
  %v89 = vrsqrt.pop %v84
  %v90 = vrsqrt.pop %v85
  %v91 = vrsqrt.pop %v86
  %v92 = vrsqrt.pop %v87
  %v93 = vrsqrt.pop %v88
  %v94 = vmul.f32 %v58, %v89
  %v95 = vmul.f32 %v59, %v90
  %v96 = vmul.f32 %v60, %v91
  %v97 = vmul.f32 %v61, %v92
  %v98 = vmul.f32 %v62, %v93
  %v99 = vld [vmem:[%s1] sm:$0x1]
  %v101 = vlaneseq
  %v102 = vshrl.u32 %v101, 7
  %v103 = vsub.s32 0, %v102
  %v104 = vrot.slane %v99, %v103
  %v106 = vmul.f32 %v94, %v104
  %v107 = vmul.f32 %v95, %v104
  %v108 = vmul.f32 %v96, %v104
  %v109 = vmul.f32 %v97, %v104
  %v110 = vmul.f32 %v98, %v104
  %v111 = vld [vmem:[%s2] sm:$0x1]
  %v113 = vlaneseq
  %v114 = vshrl.u32 %v113, 7
  %v115 = vsub.s32 0, %v114
  %v116 = vrot.slane %v111, %v115
  %v118 = vadd.f32 %v106, %v116
  %v119 = vadd.f32 %v107, %v116
  %v120 = vadd.f32 %v108, %v116
  %v121 = vadd.f32 %v109, %v116
  %v122 = vadd.f32 %v110, %v116
  %v123 = vpack.c.bf16 %v119, %v118
  %v124 = vpack.c.bf16 %v121, %v120
  %v125 = vpack.c.bf16 %v122, %v122
  %v126 = vld [vmem:[#allocation2] sm:$0xff]
  %v127 = vld [vmem:[#allocation2 + $0x8] sm:$0xff]
  %v128 = vld [vmem:[#allocation2 + $0x10] sm:$0xff]
  %v129 = vld [vmem:[#allocation2 + $0x18] sm:$0xff]
  %v130 = vld [vmem:[#allocation2 + $0x20] sm:$0xff]
  %v131 = vld [vmem:[#allocation2 + $0x28] sm:$0xff]
  %v132 = vld [vmem:[#allocation2 + $0x30] sm:$0xff]
  %v133 = vld [vmem:[#allocation2 + $0x38] sm:$0xff]
  %v134 = vld [vmem:[#allocation2 + $0x40] sm:$0x3]
  %v135 = vld [vmem:[#allocation2 + $0x48] sm:$0x3]
  %v136 = vld [vmem:[%s3] sm:$0xff]
  %v137 = vld [vmem:[%s3 + $0x8] sm:$0xff]
  %v138 = vld [vmem:[%s3 + $0x10] sm:$0xff]
  %v139 = vld [vmem:[%s3 + $0x18] sm:$0xff]
  %v140 = vld [vmem:[%s3 + $0x20] sm:$0xff]
  %v141 = vld [vmem:[%s3 + $0x28] sm:$0xff]
  %v142 = vld [vmem:[%s3 + $0x30] sm:$0xff]
  %v143 = vld [vmem:[%s3 + $0x38] sm:$0xff]
  %v144 = vld [vmem:[%s3 + $0x40] sm:$0xff]
  %v145 = vld [vmem:[%s3 + $0x48] sm:$0xff]
  %v146 = vld [vmem:[%s3 + $0x50] sm:$0xff]
  %v147 = vld [vmem:[%s3 + $0x58] sm:$0xff]
  %v148 = vld [vmem:[%s3 + $0x60] sm:$0xff]
  %v149 = vld [vmem:[%s3 + $0x68] sm:$0xff]
  %v150 = vld [vmem:[%s3 + $0x70] sm:$0xff]
  %v151 = vld [vmem:[%s3 + $0x78] sm:$0xff]
  %v168 = vunpack.c.l.b16 %v136
  %v169 = vunpack.c.h.b16 %v136
  %v170 = vunpack.c.l.b16 %v137
  %v171 = vunpack.c.h.b16 %v137
  %v172 = vunpack.c.l.b16 %v138
  %v173 = vunpack.c.h.b16 %v138
  %v174 = vunpack.c.l.b16 %v139
  %v175 = vunpack.c.h.b16 %v139
  %v176 = vunpack.c.l.b16 %v140
  %v177 = vunpack.c.h.b16 %v140
  %v178 = vunpack.c.l.b16 %v141
  %v179 = vunpack.c.h.b16 %v141
  %v180 = vunpack.c.l.b16 %v142
  %v181 = vunpack.c.h.b16 %v142
  %v182 = vunpack.c.l.b16 %v143
  %v183 = vunpack.c.h.b16 %v143
  %v184 = vunpack.c.l.b16 %v144
  %v185 = vunpack.c.h.b16 %v144
  %v186 = vunpack.c.l.b16 %v145
  %v187 = vunpack.c.h.b16 %v145
  %v188 = vunpack.c.l.b16 %v146
  %v189 = vunpack.c.h.b16 %v146
  %v190 = vunpack.c.l.b16 %v147
  %v191 = vunpack.c.h.b16 %v147
  %v192 = vunpack.c.l.b16 %v148
  %v193 = vunpack.c.h.b16 %v148
  %v194 = vunpack.c.l.b16 %v149
  %v195 = vunpack.c.h.b16 %v149
  %v196 = vunpack.c.l.b16 %v150
  %v197 = vunpack.c.h.b16 %v150
  %v198 = vunpack.c.l.b16 %v151
  %v199 = vunpack.c.h.b16 %v151
  %v200 = vpack.c.b16 %v170, %v168
  %v201 = vpack.c.b16 %v171, %v169
  %v202 = vpack.c.b16 %v174, %v172
  %v203 = vpack.c.b16 %v175, %v173
  %v204 = vpack.c.b16 %v178, %v176
  %v205 = vpack.c.b16 %v179, %v177
  %v206 = vpack.c.b16 %v182, %v180
  %v207 = vpack.c.b16 %v183, %v181
  %v208 = vpack.c.b16 %v186, %v184
  %v209 = vpack.c.b16 %v187, %v185
  %v210 = vpack.c.b16 %v190, %v188
  %v211 = vpack.c.b16 %v191, %v189
  %v212 = vpack.c.b16 %v194, %v192
  %v213 = vpack.c.b16 %v195, %v193
  %v214 = vpack.c.b16 %v198, %v196
  %v215 = vpack.c.b16 %v199, %v197
  %232 = vmatprep.subr.bf16.mxu0 %v215
  %233 = vmatpush1.bf16.msra.mxu0 %v214
  %234 = vmatprep.subr.bf16.mxu0 %v213
  %235 = vmatpush1.bf16.msra.mxu0 %v212
  %236 = vmatprep.subr.bf16.mxu0 %v211
  %237 = vmatpush1.bf16.msra.mxu0 %v210
  %238 = vmatprep.subr.bf16.mxu0 %v209
  %239 = vmatpush1.bf16.msra.mxu0 %v208
  %240 = vmatprep.subr.bf16.mxu0 %v207
  %241 = vmatpush1.bf16.msra.mxu0 %v206
  %242 = vmatprep.subr.bf16.mxu0 %v205
  %243 = vmatpush1.bf16.msra.mxu0 %v204
  %244 = vmatprep.subr.bf16.mxu0 %v203
  %245 = vmatpush1.bf16.msra.mxu0 %v202
  %246 = vmatprep.subr.bf16.mxu0 %v201
  %247 = vmatpush1.bf16.msra.mxu0 %v200
  %248 = vmatprep.subr.bf16.mxu0 0
  %249 = vmatpush2.bf16.msra.mxu0 0
  %250 = vmatprep.subr.bf16.mxu0 0
  %251 = vmatpush2.bf16.msra.mxu0 0
  %252 = vmatprep.subr.bf16.mxu0 0
  %253 = vmatpush2.bf16.msra.mxu0 0
  %254 = vmatprep.subr.bf16.mxu0 0
  %255 = vmatpush2.bf16.msra.mxu0 0
  %256 = vmatprep.subr.bf16.mxu0 0
  %257 = vmatpush2.bf16.msra.mxu0 0
  %258 = vmatprep.subr.bf16.mxu0 0
  %259 = vmatpush2.bf16.msra.mxu0 0
  %260 = vmatprep.subr.bf16.mxu0 0
  %261 = vmatpush2.bf16.msra.mxu0 0
  %262 = vmatprep.subr.bf16.mxu0 0
  %263 = vmatpush2.bf16.msra.mxu0 0
  %264 = vmatprep.mubr.bf16.mxu0 0
  %265 = vmatmul.mubr.bf16.gmra.mxu0 %v123
  %v266 = vpop.f32.mrf.mxu0
  %v267 = vadd.f32 0.0, %v266
  %v268 = vpop.f32.mrf.mxu0
  %v269 = vadd.f32 0.0, %v268
  %v270 = vpop.f32.mrf.mxu0
  %v271 = vadd.f32 0.0, %v270
  %v272 = vpop.f32.mrf.mxu0
  %v273 = vadd.f32 0.0, %v272
  %274 = vmatprep.mubr.bf16.mxu0 0
  %275 = vmatmul.mubr.bf16.gmra.mxu0 %v124
  %v276 = vpop.f32.mrf.mxu0
  %v277 = vadd.f32 0.0, %v276
  %v278 = vpop.f32.mrf.mxu0
  %v279 = vadd.f32 0.0, %v278
  %v280 = vpop.f32.mrf.mxu0
  %v281 = vadd.f32 0.0, %v280
  %v282 = vpop.f32.mrf.mxu0
  %v283 = vadd.f32 0.0, %v282
  %284 = vmatprep.mubr.bf16.mxu0 0
  %285 = vmatmul.mubr.bf16.gmra.mxu0 %v125
  %v286 = vpop.f32.mrf.mxu0
  %v287 = vadd.f32 0.0, %v286
  %v288 = vpop.f32.mrf.mxu0
  %v289 = vadd.f32 0.0, %v288
  %v290 = vpop.f32.mrf.mxu0
  %v291 = vpop.f32.mrf.mxu0
  %292 = vdwg.mxu0
  %v293 = vadd.f32 %v126, %v267
  %v294 = vadd.f32 %v127, %v269
  %v295 = vadd.f32 %v128, %v271
  %v296 = vadd.f32 %v129, %v273
  %v297 = vadd.f32 %v130, %v277
  %v298 = vadd.f32 %v131, %v279
  %v299 = vadd.f32 %v132, %v281
  %v300 = vadd.f32 %v133, %v283
  %v301 = vadd.f32 %v134, %v287
  %v302 = vadd.f32 %v135, %v289
  %303 = vst [vmem:[#allocation2] sm:$0xff] %v293
  %304 = vst [vmem:[#allocation2 + $0x8] sm:$0xff] %v294
  %305 = vst [vmem:[#allocation2 + $0x10] sm:$0xff] %v295
  %306 = vst [vmem:[#allocation2 + $0x18] sm:$0xff] %v296
  %307 = vst [vmem:[#allocation2 + $0x20] sm:$0xff] %v297
  %308 = vst [vmem:[#allocation2 + $0x28] sm:$0xff] %v298
  %309 = vst [vmem:[#allocation2 + $0x30] sm:$0xff] %v299
  %310 = vst [vmem:[#allocation2 + $0x38] sm:$0xff] %v300
  %311 = vst [vmem:[#allocation2 + $0x40] sm:$0x3] %v301
  %312 = vst [vmem:[#allocation2 + $0x48] sm:$0x3] %v302
  // Predicated region
  $region26: #{vit_classifier_forward.15} parent=0 // pred_check
    %p313 = pneg %p21
  $region27: #{vit_classifier_forward.15} parent=0 // pred_check_branch
    %315 = sbr.rel (%p313) target = $region29
  $region28: #{vit_classifier_forward.15} parent=0 // pred_region
    %v316 = vld [vmem:[#allocation2] sm:$0xff]
    %v317 = vld [vmem:[#allocation2 + $0x8] sm:$0xff]
    %v318 = vld [vmem:[#allocation2 + $0x10] sm:$0xff]
    %v319 = vld [vmem:[#allocation2 + $0x18] sm:$0xff]
    %v320 = vld [vmem:[#allocation2 + $0x20] sm:$0xff]
    %v321 = vld [vmem:[#allocation2 + $0x28] sm:$0xff]
    %v322 = vld [vmem:[#allocation2 + $0x30] sm:$0xff]
    %v323 = vld [vmem:[#allocation2 + $0x38] sm:$0xff]
    %v324 = vld [vmem:[#allocation2 + $0x40] sm:$0x3]
    %v325 = vld [vmem:[#allocation2 + $0x48] sm:$0x3]
    %v326 = vld [vmem:[%s4] sm:$0x3]
    %v328 = vlaneseq
    %v329 = vshrl.u32 %v328, 7
    %v330 = vsub.s32 0, %v329
    %v331 = vrot.slane %v326, %v330
    %v332 = vlaneseq
    %v333 = vshrl.u32 %v332, 7
    %v334 = vsub.s32 1, %v333
    %v335 = vrot.slane %v326, %v334
    %v338 = vadd.f32 %v316, %v331
    %v339 = vadd.f32 %v317, %v335
    %v340 = vadd.f32 %v318, %v331
    %v341 = vadd.f32 %v319, %v335
    %v342 = vadd.f32 %v320, %v331
    %v343 = vadd.f32 %v321, %v335
    %v344 = vadd.f32 %v322, %v331
    %v345 = vadd.f32 %v323, %v335
    %v346 = vadd.f32 %v324, %v331
    %v347 = vadd.f32 %v325, %v335
    %v348 = vmul.f32 %v338, %v338
    %v349 = vmul.f32 %v339, %v339
    %v350 = vmul.f32 %v340, %v340
    %v351 = vmul.f32 %v341, %v341
    %v352 = vmul.f32 %v342, %v342
    %v353 = vmul.f32 %v343, %v343
    %v354 = vmul.f32 %v344, %v344
    %v355 = vmul.f32 %v345, %v345
    %v356 = vmul.f32 %v346, %v346
    %v357 = vmul.f32 %v347, %v347
    %v358 = vmul.f32 %v338, %v348
    %v359 = vmul.f32 %v339, %v349
    %v360 = vmul.f32 %v340, %v350
    %v361 = vmul.f32 %v341, %v351
    %v362 = vmul.f32 %v342, %v352
    %v363 = vmul.f32 %v343, %v353
    %v364 = vmul.f32 %v344, %v354
    %v365 = vmul.f32 %v345, %v355
    %v366 = vmul.f32 %v346, %v356
    %v367 = vmul.f32 %v347, %v357
    %v368 = vmul.f32 %v358, 0.044715
    %v369 = vmul.f32 %v359, 0.044715
    %v370 = vmul.f32 %v360, 0.044715
    %v371 = vmul.f32 %v361, 0.044715
    %v372 = vmul.f32 %v362, 0.044715
    %v373 = vmul.f32 %v363, 0.044715
    %v374 = vmul.f32 %v364, 0.044715
    %v375 = vmul.f32 %v365, 0.044715
    %v376 = vmul.f32 %v366, 0.044715
    %v377 = vmul.f32 %v367, 0.044715
    %v378 = vadd.f32 %v338, %v368
    %v379 = vadd.f32 %v339, %v369
    %v380 = vadd.f32 %v340, %v370
    %v381 = vadd.f32 %v341, %v371
    %v382 = vadd.f32 %v342, %v372
    %v383 = vadd.f32 %v343, %v373
    %v384 = vadd.f32 %v344, %v374
    %v385 = vadd.f32 %v345, %v375
    %v386 = vadd.f32 %v346, %v376
    %v387 = vadd.f32 %v347, %v377
    %v388 = vmul.f32 %v378, 0.7978846
    %v389 = vmul.f32 %v379, 0.7978846
    %v390 = vmul.f32 %v380, 0.7978846
    %v391 = vmul.f32 %v381, 0.7978846
    %v392 = vmul.f32 %v382, 0.7978846
    %v393 = vmul.f32 %v383, 0.7978846
    %v394 = vmul.f32 %v384, 0.7978846
    %v395 = vmul.f32 %v385, 0.7978846
    %v396 = vmul.f32 %v386, 0.7978846
    %v397 = vmul.f32 %v387, 0.7978846
    %v398 = vtanh.pop %v388
    %v399 = vtanh.pop %v389
    %v400 = vtanh.pop %v390
    %v401 = vtanh.pop %v391
    %v402 = vtanh.pop %v392
    %v403 = vtanh.pop %v393
    %v404 = vtanh.pop %v394
    %v405 = vtanh.pop %v395
    %v406 = vtanh.pop %v396
    %v407 = vtanh.pop %v397
    %v408 = vadd.f32 %v398, 1.0
    %v409 = vadd.f32 %v399, 1.0
    %v410 = vadd.f32 %v400, 1.0
    %v411 = vadd.f32 %v401, 1.0
    %v412 = vadd.f32 %v402, 1.0
    %v413 = vadd.f32 %v403, 1.0
    %v414 = vadd.f32 %v404, 1.0
    %v415 = vadd.f32 %v405, 1.0
    %v416 = vadd.f32 %v406, 1.0
    %v417 = vadd.f32 %v407, 1.0
    %v418 = vmul.f32 %v408, 0.5
    %v419 = vmul.f32 %v409, 0.5
    %v420 = vmul.f32 %v410, 0.5
    %v421 = vmul.f32 %v411, 0.5
    %v422 = vmul.f32 %v412, 0.5
    %v423 = vmul.f32 %v413, 0.5
    %v424 = vmul.f32 %v414, 0.5
    %v425 = vmul.f32 %v415, 0.5
    %v426 = vmul.f32 %v416, 0.5
    %v427 = vmul.f32 %v417, 0.5
    %v428 = vmul.f32 %v338, %v418
    %v429 = vmul.f32 %v339, %v419
    %v430 = vmul.f32 %v340, %v420
    %v431 = vmul.f32 %v341, %v421
    %v432 = vmul.f32 %v342, %v422
    %v433 = vmul.f32 %v343, %v423
    %v434 = vmul.f32 %v344, %v424
    %v435 = vmul.f32 %v345, %v425
    %v436 = vmul.f32 %v346, %v426
    %v437 = vmul.f32 %v347, %v427
    %v438 = vpack.c.bf16 %v430, %v428
    %v439 = vpack.c.bf16 %v431, %v429
    %v440 = vpack.c.bf16 %v434, %v432
    %v441 = vpack.c.bf16 %v435, %v433
    %v442 = vpack.c.bf16 %v436, %v436
    %v443 = vpack.c.bf16 %v437, %v437
    %v450 = vunpack.c.l.b16 %v438
    %v451 = vunpack.c.l.b16 %v439
    %v452 = vunpack.c.h.b16 %v438
    %v453 = vunpack.c.h.b16 %v439
    %v454 = vunpack.c.l.b16 %v440
    %v455 = vunpack.c.l.b16 %v441
    %v456 = vunpack.c.h.b16 %v440
    %v457 = vunpack.c.h.b16 %v441
    %v458 = vunpack.c.l.b16 %v442
    %v459 = vunpack.c.l.b16 %v443
    %v460 = vpack.c.b16 %v451, %v450
    %v461 = vpack.c.b16 %v453, %v452
    %v462 = vpack.c.b16 %v455, %v454
    %v463 = vpack.c.b16 %v457, %v456
    %v464 = vpack.c.b16 %v459, %v458
    %470 = vst [vmem:[%s5] sm:$0xff] %v460
    %471 = vst [vmem:[%s5 + $0x8] sm:$0xff] %v461
    %472 = vst [vmem:[%s5 + $0x10] sm:$0xff] %v462
    %473 = vst [vmem:[%s5 + $0x18] sm:$0xff] %v463
    %474 = vst [vmem:[%s5 + $0x20] sm:$0x11] %v464
  $region29: #{vit_classifier_forward.15} parent=0 // pred_fallthru
    _
  // Predicated region
  $region30: #{vit_classifier_forward.15} parent=0 // pred_check
    _
  $region31: #{vit_classifier_forward.15} parent=0 // pred_check_branch
    %476 = sbr.rel (0) target = $region33
  $region32: #{vit_classifier_forward.15} parent=0 // pred_region
    _
  $region33: #{vit_classifier_forward.15} parent=0 // pred_fallthru
    _
  // Predicated region
  $region34: #{vit_classifier_forward.15} parent=0 // pred_check
    _
  $region35: #{vit_classifier_forward.15} parent=0 // pred_check_branch
    %478 = sbr.rel (0) target = $region37
  $region36: #{vit_classifier_forward.15} parent=0 // pred_region
    _
  $region37: #{vit_classifier_forward.15} parent=0 // pred_fallthru
    _

// kernel: vit_classifier_forward.16
$region0: #{vit_classifier_forward.16}
  #allocation0 [shape = 'u32[]', space=smem, size = 0x4, offset = 0x4, fixed_abs, tag = 'smem constant byte address 0x4 - core index']
  #allocation1 [shape = 'u32[144,128]{1,0:T(1,128)}', space=vmem, size = 0x12000, scoped, tag = 'internal scratch']
  #allocation2 [shape = 'f32[34,128]{1,0:T(8,128)}', space=vmem, size = 0x5000, scoped, tag = 'scratch operand']
  %s0 = inlined_call_operand.vmem [shape: bf16[34,256], index: 0, kind: input, shape index: {}]
  %s1 = inlined_call_operand.vmem [shape: bf16[256,128], index: 1, kind: input, shape index: {}]
  %s2 = inlined_call_operand.vmem [shape: f32[1,128], index: 2, kind: input, shape index: {}]
  %s3 = inlined_call_operand.vmem [shape: f32[34,128], index: 3, kind: input, shape index: {}]
  %s4 = inlined_call_operand.vmem [shape: f32[34,128], index: 4, kind: output, shape index: {}]
  %s5 = sld [smem:[#allocation0]]
  $region34: #{vit_classifier_forward.16} parent=0
    _
  %s7 = ssub.s32 1, %s5
  %s8 = scalar_select 0, %s7, %s5
  // Predicated region
  $region2: #{vit_classifier_forward.16} parent=0 // pred_check
    _
  $region3: #{vit_classifier_forward.16} parent=0 // pred_check_branch
    %10 = sbr.rel (0) target = $region5
  $region4: #{vit_classifier_forward.16} parent=0 // pred_region
    _
  $region5: #{vit_classifier_forward.16} parent=0 // pred_fallthru
    _
  // Predicated region
  $region6: #{vit_classifier_forward.16} parent=0 // pred_check
    _
  $region7: #{vit_classifier_forward.16} parent=0 // pred_check_branch
    %12 = sbr.rel (0) target = $region9
  $region8: #{vit_classifier_forward.16} parent=0 // pred_region
    _
  $region9: #{vit_classifier_forward.16} parent=0 // pred_fallthru
    _
  // Predicated region
  $region10: #{vit_classifier_forward.16} parent=0 // pred_check
    _
  $region11: #{vit_classifier_forward.16} parent=0 // pred_check_branch
    %14 = sbr.rel (0) target = $region13
  $region12: #{vit_classifier_forward.16} parent=0 // pred_region
    _
  $region13: #{vit_classifier_forward.16} parent=0 // pred_fallthru
    _
  // Predicated region
  $region14: #{vit_classifier_forward.16} parent=0 // pred_check
    _
  $region15: #{vit_classifier_forward.16} parent=0 // pred_check_branch
    %16 = sbr.rel (0) target = $region17
  $region16: #{vit_classifier_forward.16} parent=0 // pred_region
    _
  $region17: #{vit_classifier_forward.16} parent=0 // pred_fallthru
    _
  %p18 = scmp.eq.s32.totalorder 0, 0
  // Predicated region
  $region18: #{vit_classifier_forward.16} parent=0 // pred_check
    %p19 = pneg %p18
  $region19: #{vit_classifier_forward.16} parent=0 // pred_check_branch
    %21 = sbr.rel (%p19) target = $region21
  $region20: #{vit_classifier_forward.16} parent=0 // pred_region
    %22 = vst [vmem:[#allocation2] sm:$0xff] 0.0
    %23 = vst [vmem:[#allocation2 + $0x8] sm:$0xff] 0.0
    %24 = vst [vmem:[#allocation2 + $0x10] sm:$0xff] 0.0
    %25 = vst [vmem:[#allocation2 + $0x18] sm:$0xff] 0.0
    %26 = vst [vmem:[#allocation2 + $0x20] sm:$0x3] 0.0
  $region21: #{vit_classifier_forward.16} parent=0 // pred_fallthru
    _
  %v27 = vld [vmem:[%s0] sm:$0xff]
  %v28 = vld [vmem:[%s0 + $0x8] sm:$0xff]
  %v29 = vld [vmem:[%s0 + $0x10] sm:$0xff]
  %v30 = vld [vmem:[%s0 + $0x18] sm:$0xff]
  %v31 = vld [vmem:[%s0 + $0x20] sm:$0x11]
  %v32 = vld [vmem:[#allocation2] sm:$0xff]
  %v33 = vld [vmem:[#allocation2 + $0x8] sm:$0xff]
  %v34 = vld [vmem:[#allocation2 + $0x10] sm:$0xff]
  %v35 = vld [vmem:[#allocation2 + $0x18] sm:$0xff]
  %v36 = vld [vmem:[#allocation2 + $0x20] sm:$0x3]
  %v37 = vld [vmem:[%s1] sm:$0xf]
  %v38 = vld [vmem:[%s1 + $0x4] sm:$0xf]
  %v39 = vld [vmem:[%s1 + $0x8] sm:$0xf]
  %v40 = vld [vmem:[%s1 + $0xc] sm:$0xf]
  %v41 = vld [vmem:[%s1 + $0x10] sm:$0xf]
  %v42 = vld [vmem:[%s1 + $0x14] sm:$0xf]
  %v43 = vld [vmem:[%s1 + $0x18] sm:$0xf]
  %v44 = vld [vmem:[%s1 + $0x1c] sm:$0xf]
  %v45 = vld [vmem:[%s1 + $0x20] sm:$0xf]
  %v46 = vld [vmem:[%s1 + $0x24] sm:$0xf]
  %v47 = vld [vmem:[%s1 + $0x28] sm:$0xf]
  %v48 = vld [vmem:[%s1 + $0x2c] sm:$0xf]
  %v49 = vld [vmem:[%s1 + $0x30] sm:$0xf]
  %v50 = vld [vmem:[%s1 + $0x34] sm:$0xf]
  %v51 = vld [vmem:[%s1 + $0x38] sm:$0xf]
  %v52 = vld [vmem:[%s1 + $0x3c] sm:$0xf]
  %v53 = vld [vmem:[%s1 + $0x40] sm:$0xf]
  %v54 = vld [vmem:[%s1 + $0x44] sm:$0xf]
  %v55 = vld [vmem:[%s1 + $0x48] sm:$0xf]
  %v56 = vld [vmem:[%s1 + $0x4c] sm:$0xf]
  %v57 = vld [vmem:[%s1 + $0x50] sm:$0xf]
  %v58 = vld [vmem:[%s1 + $0x54] sm:$0xf]
  %v59 = vld [vmem:[%s1 + $0x58] sm:$0xf]
  %v60 = vld [vmem:[%s1 + $0x5c] sm:$0xf]
  %v61 = vld [vmem:[%s1 + $0x60] sm:$0xf]
  %v62 = vld [vmem:[%s1 + $0x64] sm:$0xf]
  %v63 = vld [vmem:[%s1 + $0x68] sm:$0xf]
  %v64 = vld [vmem:[%s1 + $0x6c] sm:$0xf]
  %v65 = vld [vmem:[%s1 + $0x70] sm:$0xf]
  %v66 = vld [vmem:[%s1 + $0x74] sm:$0xf]
  %v67 = vld [vmem:[%s1 + $0x78] sm:$0xf]
  %v68 = vld [vmem:[%s1 + $0x7c] sm:$0xf]
  %v74 = vunpack.c.l.b16 %v27
  %v75 = vunpack.c.h.b16 %v27
  %v76 = vunpack.c.l.b16 %v28
  %v77 = vunpack.c.h.b16 %v28
  %v78 = vunpack.c.l.b16 %v29
  %v79 = vunpack.c.h.b16 %v29
  %v80 = vunpack.c.l.b16 %v30
  %v81 = vunpack.c.h.b16 %v30
  %v82 = vunpack.c.l.b16 %v31
  %v83 = vunpack.c.h.b16 %v31
  %v84 = vpack.c.b16 %v76, %v74
  %v85 = vpack.c.b16 %v77, %v75
  %v86 = vpack.c.b16 %v80, %v78
  %v87 = vpack.c.b16 %v81, %v79
  %v88 = vpack.c.b16 %v82, %v82
  %v89 = vpack.c.b16 %v83, %v83
  %v128 = vunpack.c.l.b16 %v37
  %v129 = vunpack.c.l.b16 %v38
  %v130 = vunpack.c.l.b16 %v39
  %v131 = vunpack.c.l.b16 %v40
  %v132 = vunpack.c.l.b16 %v41
  %v133 = vunpack.c.l.b16 %v42
  %v134 = vunpack.c.l.b16 %v43
  %v135 = vunpack.c.l.b16 %v44
  %v136 = vunpack.c.l.b16 %v45
  %v137 = vunpack.c.l.b16 %v46
  %v138 = vunpack.c.l.b16 %v47
  %v139 = vunpack.c.l.b16 %v48
  %v140 = vunpack.c.l.b16 %v49
  %v141 = vunpack.c.l.b16 %v50
  %v142 = vunpack.c.l.b16 %v51
  %v143 = vunpack.c.l.b16 %v52
  %v144 = vunpack.c.l.b16 %v53
  %v145 = vunpack.c.l.b16 %v54
  %v146 = vunpack.c.l.b16 %v55
  %v147 = vunpack.c.l.b16 %v56
  %v148 = vunpack.c.l.b16 %v57
  %v149 = vunpack.c.l.b16 %v58
  %v150 = vunpack.c.l.b16 %v59
  %v151 = vunpack.c.l.b16 %v60
  %v152 = vunpack.c.l.b16 %v61
  %v153 = vunpack.c.l.b16 %v62
  %v154 = vunpack.c.l.b16 %v63
  %v155 = vunpack.c.l.b16 %v64
  %v156 = vunpack.c.l.b16 %v65
  %v157 = vunpack.c.l.b16 %v66
  %v158 = vunpack.c.l.b16 %v67
  %v159 = vunpack.c.l.b16 %v68
  %v160 = vpack.c.b16 %v129, %v128
  %v161 = vpack.c.b16 %v131, %v130
  %v162 = vpack.c.b16 %v133, %v132
  %v163 = vpack.c.b16 %v135, %v134
  %v164 = vpack.c.b16 %v137, %v136
  %v165 = vpack.c.b16 %v139, %v138
  %v166 = vpack.c.b16 %v141, %v140
  %v167 = vpack.c.b16 %v143, %v142
  %v168 = vpack.c.b16 %v145, %v144
  %v169 = vpack.c.b16 %v147, %v146
  %v170 = vpack.c.b16 %v149, %v148
  %v171 = vpack.c.b16 %v151, %v150
  %v172 = vpack.c.b16 %v153, %v152
  %v173 = vpack.c.b16 %v155, %v154
  %v174 = vpack.c.b16 %v157, %v156
  %v175 = vpack.c.b16 %v159, %v158
  %192 = vmatprep.subr.bf16.mxu0 0
  %193 = vmatpush1.bf16.msra.mxu0 %v167
  %194 = vmatprep.subr.bf16.mxu0 0
  %195 = vmatpush1.bf16.msra.mxu0 %v166
  %196 = vmatprep.subr.bf16.mxu0 0
  %197 = vmatpush1.bf16.msra.mxu0 %v165
  %198 = vmatprep.subr.bf16.mxu0 0
  %199 = vmatpush1.bf16.msra.mxu0 %v164
  %200 = vmatprep.subr.bf16.mxu0 0
  %201 = vmatpush1.bf16.msra.mxu0 %v163
  %202 = vmatprep.subr.bf16.mxu0 0
  %203 = vmatpush1.bf16.msra.mxu0 %v162
  %204 = vmatprep.subr.bf16.mxu0 0
  %205 = vmatpush1.bf16.msra.mxu0 %v161
  %206 = vmatprep.subr.bf16.mxu0 0
  %207 = vmatpush1.bf16.msra.mxu0 %v160
  %208 = vmatprep.subr.bf16.mxu0 0
  %209 = vmatpush2.bf16.msra.mxu0 %v175
  %210 = vmatprep.subr.bf16.mxu0 0
  %211 = vmatpush2.bf16.msra.mxu0 %v174
  %212 = vmatprep.subr.bf16.mxu0 0
  %213 = vmatpush2.bf16.msra.mxu0 %v173
  %214 = vmatprep.subr.bf16.mxu0 0
  %215 = vmatpush2.bf16.msra.mxu0 %v172
  %216 = vmatprep.subr.bf16.mxu0 0
  %217 = vmatpush2.bf16.msra.mxu0 %v171
  %218 = vmatprep.subr.bf16.mxu0 0
  %219 = vmatpush2.bf16.msra.mxu0 %v170
  %220 = vmatprep.subr.bf16.mxu0 0
  %221 = vmatpush2.bf16.msra.mxu0 %v169
  %222 = vmatprep.subr.bf16.mxu0 0
  %223 = vmatpush2.bf16.msra.mxu0 %v168
  %224 = vmatprep.mubr.bf16.mxu0 %v85
  %225 = vmatmul.mubr.bf16.gmra.mxu0 %v84
  %v226 = vpop.f32.mrf.mxu0
  %v227 = vadd.f32 0.0, %v226
  %v228 = vpop.f32.mrf.mxu0
  %v229 = vpop.f32.mrf.mxu0
  %v230 = vadd.f32 0.0, %v229
  %v231 = vpop.f32.mrf.mxu0
  %232 = vmatprep.mubr.bf16.mxu0 %v87
  %233 = vmatmul.mubr.bf16.gmra.mxu0 %v86
  %v234 = vpop.f32.mrf.mxu0
  %v235 = vadd.f32 0.0, %v234
  %v236 = vpop.f32.mrf.mxu0
  %v237 = vpop.f32.mrf.mxu0
  %v238 = vadd.f32 0.0, %v237
  %v239 = vpop.f32.mrf.mxu0
  %240 = vmatprep.mubr.bf16.mxu0 %v89
  %241 = vmatmul.mubr.bf16.gmra.mxu0 %v88
  %v242 = vpop.f32.mrf.mxu0
  %v243 = vadd.f32 0.0, %v242
  %v244 = vpop.f32.mrf.mxu0
  %v245 = vpop.f32.mrf.mxu0
  %v246 = vpop.f32.mrf.mxu0
  %247 = vdwg.mxu0
  %v248 = vadd.f32 %v32, %v227
  %v249 = vadd.f32 %v33, %v230
  %v250 = vadd.f32 %v34, %v235
  %v251 = vadd.f32 %v35, %v238
  %v252 = vadd.f32 %v36, %v243
  %253 = vst [vmem:[#allocation2] sm:$0xff] %v248
  %254 = vst [vmem:[#allocation2 + $0x8] sm:$0xff] %v249
  %255 = vst [vmem:[#allocation2 + $0x10] sm:$0xff] %v250
  %256 = vst [vmem:[#allocation2 + $0x18] sm:$0xff] %v251
  %257 = vst [vmem:[#allocation2 + $0x20] sm:$0x3] %v252
  // Predicated region
  $region22: #{vit_classifier_forward.16} parent=0 // pred_check
    %p258 = pneg %p18
  $region23: #{vit_classifier_forward.16} parent=0 // pred_check_branch
    %260 = sbr.rel (%p258) target = $region25
  $region24: #{vit_classifier_forward.16} parent=0 // pred_region
    %v261 = vld [vmem:[#allocation2] sm:$0xff]
    %v262 = vld [vmem:[#allocation2 + $0x8] sm:$0xff]
    %v263 = vld [vmem:[#allocation2 + $0x10] sm:$0xff]
    %v264 = vld [vmem:[#allocation2 + $0x18] sm:$0xff]
    %v265 = vld [vmem:[#allocation2 + $0x20] sm:$0x3]
    %v266 = vld [vmem:[%s2] sm:$0x1]
    %v268 = vlaneseq
    %v269 = vshrl.u32 %v268, 7
    %v270 = vsub.s32 0, %v269
    %v271 = vrot.slane %v266, %v270
    %v273 = vadd.f32 %v261, %v271
    %v274 = vadd.f32 %v262, %v271
    %v275 = vadd.f32 %v263, %v271
    %v276 = vadd.f32 %v264, %v271
    %v277 = vadd.f32 %v265, %v271
    %v278 = vld [vmem:[%s3] sm:$0xff]
    %v279 = vld [vmem:[%s3 + $0x8] sm:$0xff]
    %v280 = vld [vmem:[%s3 + $0x10] sm:$0xff]
    %v281 = vld [vmem:[%s3 + $0x18] sm:$0xff]
    %v282 = vld [vmem:[%s3 + $0x20] sm:$0x3]
    %v283 = vadd.f32 %v273, %v278
    %v284 = vadd.f32 %v274, %v279
    %v285 = vadd.f32 %v275, %v280
    %v286 = vadd.f32 %v276, %v281
    %v287 = vadd.f32 %v277, %v282
    %288 = vst [vmem:[%s4] sm:$0xff] %v283
    %289 = vst [vmem:[%s4 + $0x8] sm:$0xff] %v284
    %290 = vst [vmem:[%s4 + $0x10] sm:$0xff] %v285
    %291 = vst [vmem:[%s4 + $0x18] sm:$0xff] %v286
    %292 = vst [vmem:[%s4 + $0x20] sm:$0x3] %v287
  $region25: #{vit_classifier_forward.16} parent=0 // pred_fallthru
    _
  // Predicated region
  $region26: #{vit_classifier_forward.16} parent=0 // pred_check
    _
  $region27: #{vit_classifier_forward.16} parent=0 // pred_check_branch
    %294 = sbr.rel (0) target = $region29
  $region28: #{vit_classifier_forward.16} parent=0 // pred_region
    _
  $region29: #{vit_classifier_forward.16} parent=0 // pred_fallthru
    _
  // Predicated region
  $region30: #{vit_classifier_forward.16} parent=0 // pred_check
    _
  $region31: #{vit_classifier_forward.16} parent=0 // pred_check_branch
    %296 = sbr.rel (0) target = $region33
  $region32: #{vit_classifier_forward.16} parent=0 // pred_region
    _
  $region33: #{vit_classifier_forward.16} parent=0 // pred_fallthru
    _

</llo_original>
